<compile_context>
chip_gen: v7x
topology: tpu7x:2x2x1
jax: 0.10.0
libtpu: 0.0.40
codegen_flags: <defaults>
</compile_context>

<pallas_src>
import functools

import numpy as np
import jax
import jax.numpy as jnp
from jax import lax
from jax.experimental import pallas as pl
from jax.experimental.pallas import tpu as pltpu

START_INDEX = 3
STOP_INDEX = 4

_VMEM = pl.BlockSpec(memory_space=pltpu.MemorySpace.VMEM)


# ----------------------------------------------------------------------------
# Fused Pallas kernel: 2-layer BiLSTM + hidden2label + CRF Viterbi forward pass
# ----------------------------------------------------------------------------
def bilstm_crf_kernel(x_ref,
                      wx0f_ref, wx0b_ref, u0_ref, b0_ref,
                      wx1f_ref, wx1b_ref, u1_ref, b1_ref,
                      wout_ref, bout_ref,
                      transT_ref, stop_ref,
                      feats_ref, bptr_ref, term_ref,
                      *, T, H, L):
    """Everything stays in VMEM / vregs; T is small so time loops are unrolled.

    x_ref:     (T, D)       input sequence
    wx*{f,b}:  (Din, 8H)    hoisted input->gate weights (fwd/bwd columns,
                            gate blocks interleaved [i_f i_b f_f f_b g_f g_b o_f o_b])
    u*_ref:    (2H, 8H)     block-diagonal hidden->gate weights (both directions)
    b*_ref:    (1, 8H)      combined biases
    wout_ref:  (2H, L)      hidden2label weight (pre-transposed)
    bout_ref:  (1, L)       hidden2label bias
    transT_ref:(L, L)       transitions transposed: transT[prev, next]
    stop_ref:  (1, L)       transitions[STOP_INDEX, :]
    feats_ref: (T, L)       emission scores (output)
    bptr_ref:  (T, L) int32 Viterbi backpointers (output)
    term_ref:  (1, L)       terminal scores (output)
    """
    H2 = 2 * H

    def run_layer(x_in, wxf, wxb, u_bd, b):
        # Hoisted input projection: one matmul per direction over all timesteps.
        gxf = jnp.dot(x_in, wxf, preferred_element_type=jnp.float32) + b
        gxb = jnp.dot(x_in, wxb, preferred_element_type=jnp.float32)
        h = jnp.zeros((1, H2), jnp.float32)
        c = jnp.zeros((1, H2), jnp.float32)
        fwd_rows = [None] * T
        bwd_rows = [None] * T
        for t in range(T):
            # fwd direction consumes x[t], bwd direction consumes x[T-1-t].
            hx = gxf[t:t + 1, :] + gxb[T - 1 - t:T - t, :]
            g = hx + jnp.dot(h, u_bd, preferred_element_type=jnp.float32)
            i_g = jax.nn.sigmoid(g[:, 0:H2])
            f_g = jax.nn.sigmoid(g[:, H2:2 * H2])
            g_g = jnp.tanh(g[:, 2 * H2:3 * H2])
            o_g = jax.nn.sigmoid(g[:, 3 * H2:4 * H2])
            c = f_g * c + i_g * g_g
            h = o_g * jnp.tanh(c)
            fwd_rows[t] = h[:, 0:H]
            bwd_rows[T - 1 - t] = h[:, H:H2]
        # Buffer all rows and materialize the (T, 2H) layer output once.
        return jnp.concatenate(
            [jnp.concatenate(fwd_rows, axis=0),
             jnp.concatenate(bwd_rows, axis=0)], axis=-1)

    x = x_ref[...]
    h0 = run_layer(x, wx0f_ref[...], wx0b_ref[...], u0_ref[...], b0_ref[...])
    h1 = run_layer(h0, wx1f_ref[...], wx1b_ref[...], u1_ref[...], b1_ref[...])

    # hidden2label
    feats = (jnp.dot(h1, wout_ref[...], preferred_element_type=jnp.float32)
             + bout_ref[...])
    feats_ref[...] = feats

    # --- CRF Viterbi forward recursion ------------------------------------
    transT = transT_ref[...]                                        # (L, L)
    prev_iota_i = lax.broadcasted_iota(jnp.int32, (L, L), 0)        # prev idx
    lane_iota_i = lax.broadcasted_iota(jnp.int32, (L, L), 1)
    prev_iota_f = prev_iota_i.astype(jnp.float32)
    eye = (prev_iota_i == lane_iota_i).astype(jnp.float32)          # (L, L)
    lane_row = lax.broadcasted_iota(jnp.int32, (1, L), 1)

    fv_row = jnp.where(lane_row == START_INDEX, 0.0, -10000.0).astype(jnp.float32)
    # row -> column (prev labels on sublanes) via diagonal trick.
    fv_col = jnp.sum(fv_row * eye, axis=1, keepdims=True)           # (L, 1)

    bptr_rows = [None] * T
    for t in range(T):
        M = fv_col + transT                 # M[prev, next] = fv[prev] + trans[next, prev]
        maxv = jnp.max(M, axis=0, keepdims=True)                    # (1, L)
        best = jnp.min(jnp.where(M == maxv, prev_iota_f, jnp.float32(L)),
                       axis=0, keepdims=True)                       # first argmax
        bptr_rows[t] = best.astype(jnp.int32)
        fv_row = maxv + feats[t:t + 1, :]
        if t + 1 < T:
            fv_col = jnp.sum(fv_row * eye, axis=1, keepdims=True)

    bptr_ref[...] = jnp.concatenate(bptr_rows, axis=0)              # one store
    term_ref[...] = fv_row + stop_ref[...]


# ----------------------------------------------------------------------------
# One-time parameter preparation (layout plumbing outside the kernel)
# ----------------------------------------------------------------------------
def prepare_fused_inputs(p, hidden_dim):
    H = hidden_dim

    def widen_mat(m, fwd):
        # m: (R, 4H) gate-major -> (R, 8H) with interleaved fwd/bwd gate blocks.
        R = m.shape[0]
        z = jnp.zeros((R, H), jnp.float32)
        blocks = []
        for k in range(4):
            blk = m[:, k * H:(k + 1) * H]
            blocks += ([blk, z] if fwd else [z, blk])
        return jnp.concatenate(blocks, axis=1)

    def widen_vec(v, fwd):
        z = jnp.zeros((H,), jnp.float32)
        blocks = []
        for k in range(4):
            blk = v[k * H:(k + 1) * H]
            blocks += ([blk, z] if fwd else [z, blk])
        return jnp.concatenate(blocks)

    def layer_pack(layer):
        suf_f, suf_b = f"l{layer}", f"l{layer}r"
        wxf = widen_mat(jnp.transpose(p[f"w_ih_{suf_f}"]), fwd=True)    # (Din, 8H)
        wxb = widen_mat(jnp.transpose(p[f"w_ih_{suf_b}"]), fwd=False)   # (Din, 8H)
        uf = widen_mat(jnp.transpose(p[f"w_hh_{suf_f}"]), fwd=True)     # (H, 8H)
        ub = widen_mat(jnp.transpose(p[f"w_hh_{suf_b}"]), fwd=False)    # (H, 8H)
        u_bd = jnp.concatenate([uf, ub], axis=0)                        # (2H, 8H)
        b = (widen_vec(p[f"b_ih_{suf_f}"] + p[f"b_hh_{suf_f}"], fwd=True)
             + widen_vec(p[f"b_ih_{suf_b}"] + p[f"b_hh_{suf_b}"], fwd=False)
             ).reshape(1, -1)                                           # (1, 8H)
        return wxf, wxb, u_bd, b

    wx0f, wx0b, u0, b0 = layer_pack(0)
    wx1f, wx1b, u1, b1 = layer_pack(1)
    wout = jnp.transpose(p["w_out"])                 # (2H, L)
    bout = p["b_out"].reshape(1, -1)                 # (1, L)
    transT = jnp.transpose(p["transitions"])         # (L, L): [prev, next]
    stop_row = p["transitions"][STOP_INDEX:STOP_INDEX + 1, :]
    return (wx0f, wx0b, u0, b0, wx1f, wx1b, u1, b1, wout, bout, transT, stop_row)


@jax.jit
def bilstm_crf_forward(x, fused):
    u0 = fused[2]
    wout = fused[8]
    T = x.shape[0]
    H = u0.shape[0] // 2
    L = wout.shape[1]
    kernel = functools.partial(bilstm_crf_kernel, T=T, H=H, L=L)
    return pl.pallas_call(
        kernel,
        out_shape=(jax.ShapeDtypeStruct((T, L), jnp.float32),   # feats
                   jax.ShapeDtypeStruct((T, L), jnp.int32),     # backpointers
                   jax.ShapeDtypeStruct((1, L), jnp.float32)),  # terminal scores
        in_specs=[_VMEM] * 13,
        out_specs=(_VMEM, _VMEM, _VMEM),
    )(x, *fused)


def decode_path(bptr, term):
    # TODO(synk): Viterbi backtracking is sequential data-dependent scalar
    # index chasing producing a Python list -> done host-side (glue), not in
    # the Pallas kernel.
    bptr = np.asarray(bptr)
    term = np.asarray(term)[0]
    best = int(np.argmax(term))
    path_score = float(term[best])
    best_path = [best]
    for t in range(bptr.shape[0] - 1, -1, -1):
        best = int(bptr[t, best])
        best_path.append(best)
    start = best_path.pop()
    assert start == START_INDEX
    best_path.reverse()
    return path_score, best_path


# ----------------------------------------------------------------------------
# Deterministic parameter init (shapes follow nn.LSTM / nn.Linear / CRF params)
# ----------------------------------------------------------------------------
def init_params(key, embedding_dim, hidden_dim, labelset_size):
    H, D, L = hidden_dim, embedding_dim, labelset_size
    keys = jax.random.split(key, 32)
    it = iter(keys)
    s = 1.0 / np.sqrt(H)

    def rn(shape):
        return jax.random.uniform(next(it), shape, jnp.float32, -s, s)

    p = {}
    for layer, din in ((0, D), (1, 2 * H)):
        for suf in ("", "r"):
            p[f"w_ih_l{layer}{suf}"] = rn((4 * H, din))
            p[f"w_hh_l{layer}{suf}"] = rn((4 * H, H))
            p[f"b_ih_l{layer}{suf}"] = rn((4 * H,))
            p[f"b_hh_l{layer}{suf}"] = rn((4 * H,))
    p["w_out"] = rn((L, 2 * H))
    p["b_out"] = rn((L,))
    trans = jax.random.normal(next(it), (L, L), jnp.float32)
    trans = trans.at[START_INDEX, :].set(-10000.0)
    trans = trans.at[:, STOP_INDEX].set(-10000.0)
    p["transitions"] = trans
    return p


# ----------------------------------------------------------------------------
# Pure numpy (float64) reference for a sanity check
# ----------------------------------------------------------------------------
def reference_feats(x, p, H):
    def sig(z):
        return 1.0 / (1.0 + np.exp(-z))

    def run_dir(xs, wih, whh, bih, bhh, reverse):
        T = xs.shape[0]
        h = np.zeros(H, np.float64)
        c = np.zeros(H, np.float64)
        out = np.zeros((T, H), np.float64)
        order = range(T - 1, -1, -1) if reverse else range(T)
        for t in order:
            g = xs[t] @ wih.T + h @ whh.T + bih + bhh
            i, f = sig(g[:H]), sig(g[H:2 * H])
            gg, o = np.tanh(g[2 * H:3 * H]), sig(g[3 * H:])
            c = f * c + i * gg
            h = o * np.tanh(c)
            out[t] = h
        return out

    h0 = np.concatenate(
        [run_dir(x, p["w_ih_l0"], p["w_hh_l0"], p["b_ih_l0"], p["b_hh_l0"], False),
         run_dir(x, p["w_ih_l0r"], p["w_hh_l0r"], p["b_ih_l0r"], p["b_hh_l0r"], True)],
        axis=-1)
    h1 = np.concatenate(
        [run_dir(h0, p["w_ih_l1"], p["w_hh_l1"], p["b_ih_l1"], p["b_hh_l1"], False),
         run_dir(h0, p["w_ih_l1r"], p["w_hh_l1r"], p["b_ih_l1r"], p["b_hh_l1r"], True)],
        axis=-1)
    return h1 @ p["w_out"].T + p["b_out"]


def reference_viterbi_score(feats, trans):
    L = trans.shape[0]
    fv = np.full(L, -10000.0)
    fv[START_INDEX] = 0.0
    for t in range(feats.shape[0]):
        M = trans + fv[None, :]
        fv = M.max(axis=1) + feats[t]
    term = fv + trans[STOP_INDEX]
    return float(term.max())


# ----------------------------------------------------------------------------
if __name__ == "__main__":
    T, D, H = 8, 16, 32                              # seq, embedding, hidden
    label_to_idx = {"B": 0, "I": 1, "O": 2, "<START>": 3, "<STOP>": 4}
    L = len(label_to_idx)

    key = jax.random.PRNGKey(0)
    pkey, xkey = jax.random.split(key)
    params = init_params(pkey, D, H, L)
    # layout: hours_array is (seq_len, embedding_dim), time-major, batch=1
    x = jax.random.normal(xkey, (T, D), jnp.float32)

    fused = prepare_fused_inputs(params, H)          # one-time layout plumbing
    feats, bptr, term = bilstm_crf_forward(x, fused)
    jax.block_until_ready((feats, bptr, term))
    path_score, best_path = decode_path(bptr, term)

    # sanity check against float64 numpy reference
    p64 = {k: np.asarray(v, np.float64) for k, v in params.items()}
    feats_ref = reference_feats(np.asarray(x, np.float64), p64, H)
    assert np.allclose(np.asarray(feats), feats_ref, atol=1e-2, rtol=1e-2), \
        "LSTM/linear features mismatch"
    ref_score = reference_viterbi_score(feats_ref, p64["transitions"])
    assert abs(path_score - ref_score) < 1e-2, "Viterbi score mismatch"
    assert len(best_path) == T

    print("KERNEL_OK")
</pallas_src>

<mosaic_0001>
module attributes {stable_mosaic.version = 11 : i64} {
  func.func @bilstm_crf_kernel(%arg0: memref<8x16xf32, #tpu.memory_space<vmem>>, %arg1: memref<16x256xf32, #tpu.memory_space<vmem>>, %arg2: memref<16x256xf32, #tpu.memory_space<vmem>>, %arg3: memref<64x256xf32, #tpu.memory_space<vmem>>, %arg4: memref<1x256xf32, #tpu.memory_space<vmem>>, %arg5: memref<64x256xf32, #tpu.memory_space<vmem>>, %arg6: memref<64x256xf32, #tpu.memory_space<vmem>>, %arg7: memref<64x256xf32, #tpu.memory_space<vmem>>, %arg8: memref<1x256xf32, #tpu.memory_space<vmem>>, %arg9: memref<64x5xf32, #tpu.memory_space<vmem>>, %arg10: memref<1x5xf32, #tpu.memory_space<vmem>>, %arg11: memref<5x5xf32, #tpu.memory_space<vmem>>, %arg12: memref<1x5xf32, #tpu.memory_space<vmem>>, %arg13: memref<8x5xf32, #tpu.memory_space<vmem>>, %arg14: memref<8x5xi32, #tpu.memory_space<vmem>>, %arg15: memref<1x5xf32, #tpu.memory_space<vmem>>) attributes {dimension_semantics = [], scalar_prefetch = 0 : i64, scratch_operands = 0 : i64, tpu.core_type = #tpu.core_type<tc>} {
    %c0 = arith.constant 0 : index
    %c0_0 = arith.constant 0 : index
    %0 = vector.load %arg0[%c0, %c0_0] : memref<8x16xf32, #tpu.memory_space<vmem>>, vector<8x16xf32>
    %c0_1 = arith.constant 0 : index
    %c0_2 = arith.constant 0 : index
    %1 = vector.load %arg1[%c0_1, %c0_2] : memref<16x256xf32, #tpu.memory_space<vmem>>, vector<16x256xf32>
    %c0_3 = arith.constant 0 : index
    %c0_4 = arith.constant 0 : index
    %2 = vector.load %arg2[%c0_3, %c0_4] : memref<16x256xf32, #tpu.memory_space<vmem>>, vector<16x256xf32>
    %c0_5 = arith.constant 0 : index
    %c0_6 = arith.constant 0 : index
    %3 = vector.load %arg3[%c0_5, %c0_6] : memref<64x256xf32, #tpu.memory_space<vmem>>, vector<64x256xf32>
    %c0_7 = arith.constant 0 : index
    %c0_8 = arith.constant 0 : index
    %4 = vector.load %arg4[%c0_7, %c0_8] : memref<1x256xf32, #tpu.memory_space<vmem>>, vector<1x256xf32>
    %cst = arith.constant dense<0.000000e+00> : vector<8x256xf32>
    %5 = tpu.matmul %0, %1, %cst {dimension_numbers = #tpu.dot_dimension_numbers<[1], [0], [0], [1], [0, 0, 1, 1], [], []>} : vector<8x16xf32>, vector<16x256xf32>, vector<8x256xf32> -> vector<8x256xf32>
    %6 = vector.broadcast %4 : vector<1x256xf32> to vector<8x256xf32>
    %7 = arith.addf %5, %6 : vector<8x256xf32>
    %cst_9 = arith.constant dense<0.000000e+00> : vector<8x256xf32>
    %8 = tpu.matmul %0, %2, %cst_9 {dimension_numbers = #tpu.dot_dimension_numbers<[1], [0], [0], [1], [0, 0, 1, 1], [], []>} : vector<8x16xf32>, vector<16x256xf32>, vector<8x256xf32> -> vector<8x256xf32>
    %cst_10 = arith.constant 0.000000e+00 : f32
    %9 = vector.broadcast %cst_10 : f32 to vector<1x64xf32>
    %cst_11 = arith.constant 0.000000e+00 : f32
    %10 = vector.broadcast %cst_11 : f32 to vector<1x64xf32>
    %11 = vector.extract_strided_slice %7 {offsets = [0, 0], sizes = [1, 256], strides = [1, 1]} : vector<8x256xf32> to vector<1x256xf32>
    %12 = vector.extract_strided_slice %8 {offsets = [7, 0], sizes = [1, 256], strides = [1, 1]} : vector<8x256xf32> to vector<1x256xf32>
    %13 = arith.addf %11, %12 : vector<1x256xf32>
    %cst_12 = arith.constant dense<0.000000e+00> : vector<1x256xf32>
    %14 = tpu.matmul %9, %3, %cst_12 {dimension_numbers = #tpu.dot_dimension_numbers<[1], [0], [0], [1], [0, 0, 1, 1], [], []>} : vector<1x64xf32>, vector<64x256xf32>, vector<1x256xf32> -> vector<1x256xf32>
    %15 = arith.addf %13, %14 : vector<1x256xf32>
    %16 = vector.extract_strided_slice %15 {offsets = [0, 0], sizes = [1, 64], strides = [1, 1]} : vector<1x256xf32> to vector<1x64xf32>
    %17 = arith.negf %16 : vector<1x64xf32>
    %18 = math.exp %17 : vector<1x64xf32>
    %cst_13 = arith.constant 1.000000e+00 : f32
    %19 = vector.broadcast %cst_13 : f32 to vector<1x64xf32>
    %20 = arith.addf %19, %18 : vector<1x64xf32>
    %21 = arith.divf %19, %20 : vector<1x64xf32>
    %22 = vector.extract_strided_slice %15 {offsets = [0, 64], sizes = [1, 64], strides = [1, 1]} : vector<1x256xf32> to vector<1x64xf32>
    %23 = arith.negf %22 : vector<1x64xf32>
    %24 = math.exp %23 : vector<1x64xf32>
    %cst_14 = arith.constant 1.000000e+00 : f32
    %25 = vector.broadcast %cst_14 : f32 to vector<1x64xf32>
    %26 = arith.addf %25, %24 : vector<1x64xf32>
    %27 = arith.divf %25, %26 : vector<1x64xf32>
    %28 = vector.extract_strided_slice %15 {offsets = [0, 128], sizes = [1, 64], strides = [1, 1]} : vector<1x256xf32> to vector<1x64xf32>
    %29 = math.tanh %28 : vector<1x64xf32>
    %30 = vector.extract_strided_slice %15 {offsets = [0, 192], sizes = [1, 64], strides = [1, 1]} : vector<1x256xf32> to vector<1x64xf32>
    %31 = arith.negf %30 : vector<1x64xf32>
    %32 = math.exp %31 : vector<1x64xf32>
    %cst_15 = arith.constant 1.000000e+00 : f32
    %33 = vector.broadcast %cst_15 : f32 to vector<1x64xf32>
    %34 = arith.addf %33, %32 : vector<1x64xf32>
    %35 = arith.divf %33, %34 : vector<1x64xf32>
    %36 = arith.mulf %27, %10 : vector<1x64xf32>
    %37 = arith.mulf %21, %29 : vector<1x64xf32>
    %38 = arith.addf %36, %37 : vector<1x64xf32>
    %39 = math.tanh %38 : vector<1x64xf32>
    %40 = arith.mulf %35, %39 : vector<1x64xf32>
    %41 = vector.extract_strided_slice %40 {offsets = [0, 0], sizes = [1, 32], strides = [1, 1]} : vector<1x64xf32> to vector<1x32xf32>
    %42 = vector.extract_strided_slice %40 {offsets = [0, 32], sizes = [1, 32], strides = [1, 1]} : vector<1x64xf32> to vector<1x32xf32>
    %43 = vector.extract_strided_slice %7 {offsets = [1, 0], sizes = [1, 256], strides = [1, 1]} : vector<8x256xf32> to vector<1x256xf32>
    %44 = vector.extract_strided_slice %8 {offsets = [6, 0], sizes = [1, 256], strides = [1, 1]} : vector<8x256xf32> to vector<1x256xf32>
    %45 = arith.addf %43, %44 : vector<1x256xf32>
    %cst_16 = arith.constant dense<0.000000e+00> : vector<1x256xf32>
    %46 = tpu.matmul %40, %3, %cst_16 {dimension_numbers = #tpu.dot_dimension_numbers<[1], [0], [0], [1], [0, 0, 1, 1], [], []>} : vector<1x64xf32>, vector<64x256xf32>, vector<1x256xf32> -> vector<1x256xf32>
    %47 = arith.addf %45, %46 : vector<1x256xf32>
    %48 = vector.extract_strided_slice %47 {offsets = [0, 0], sizes = [1, 64], strides = [1, 1]} : vector<1x256xf32> to vector<1x64xf32>
    %49 = arith.negf %48 : vector<1x64xf32>
    %50 = math.exp %49 : vector<1x64xf32>
    %cst_17 = arith.constant 1.000000e+00 : f32
    %51 = vector.broadcast %cst_17 : f32 to vector<1x64xf32>
    %52 = arith.addf %51, %50 : vector<1x64xf32>
    %53 = arith.divf %51, %52 : vector<1x64xf32>
    %54 = vector.extract_strided_slice %47 {offsets = [0, 64], sizes = [1, 64], strides = [1, 1]} : vector<1x256xf32> to vector<1x64xf32>
    %55 = arith.negf %54 : vector<1x64xf32>
    %56 = math.exp %55 : vector<1x64xf32>
    %cst_18 = arith.constant 1.000000e+00 : f32
    %57 = vector.broadcast %cst_18 : f32 to vector<1x64xf32>
    %58 = arith.addf %57, %56 : vector<1x64xf32>
    %59 = arith.divf %57, %58 : vector<1x64xf32>
    %60 = vector.extract_strided_slice %47 {offsets = [0, 128], sizes = [1, 64], strides = [1, 1]} : vector<1x256xf32> to vector<1x64xf32>
    %61 = math.tanh %60 : vector<1x64xf32>
    %62 = vector.extract_strided_slice %47 {offsets = [0, 192], sizes = [1, 64], strides = [1, 1]} : vector<1x256xf32> to vector<1x64xf32>
    %63 = arith.negf %62 : vector<1x64xf32>
    %64 = math.exp %63 : vector<1x64xf32>
    %cst_19 = arith.constant 1.000000e+00 : f32
    %65 = vector.broadcast %cst_19 : f32 to vector<1x64xf32>
    %66 = arith.addf %65, %64 : vector<1x64xf32>
    %67 = arith.divf %65, %66 : vector<1x64xf32>
    %68 = arith.mulf %59, %38 : vector<1x64xf32>
    %69 = arith.mulf %53, %61 : vector<1x64xf32>
    %70 = arith.addf %68, %69 : vector<1x64xf32>
    %71 = math.tanh %70 : vector<1x64xf32>
    %72 = arith.mulf %67, %71 : vector<1x64xf32>
    %73 = vector.extract_strided_slice %72 {offsets = [0, 0], sizes = [1, 32], strides = [1, 1]} : vector<1x64xf32> to vector<1x32xf32>
    %74 = vector.extract_strided_slice %72 {offsets = [0, 32], sizes = [1, 32], strides = [1, 1]} : vector<1x64xf32> to vector<1x32xf32>
    %75 = vector.extract_strided_slice %7 {offsets = [2, 0], sizes = [1, 256], strides = [1, 1]} : vector<8x256xf32> to vector<1x256xf32>
    %76 = vector.extract_strided_slice %8 {offsets = [5, 0], sizes = [1, 256], strides = [1, 1]} : vector<8x256xf32> to vector<1x256xf32>
    %77 = arith.addf %75, %76 : vector<1x256xf32>
    %cst_20 = arith.constant dense<0.000000e+00> : vector<1x256xf32>
    %78 = tpu.matmul %72, %3, %cst_20 {dimension_numbers = #tpu.dot_dimension_numbers<[1], [0], [0], [1], [0, 0, 1, 1], [], []>} : vector<1x64xf32>, vector<64x256xf32>, vector<1x256xf32> -> vector<1x256xf32>
    %79 = arith.addf %77, %78 : vector<1x256xf32>
    %80 = vector.extract_strided_slice %79 {offsets = [0, 0], sizes = [1, 64], strides = [1, 1]} : vector<1x256xf32> to vector<1x64xf32>
    %81 = arith.negf %80 : vector<1x64xf32>
    %82 = math.exp %81 : vector<1x64xf32>
    %cst_21 = arith.constant 1.000000e+00 : f32
    %83 = vector.broadcast %cst_21 : f32 to vector<1x64xf32>
    %84 = arith.addf %83, %82 : vector<1x64xf32>
    %85 = arith.divf %83, %84 : vector<1x64xf32>
    %86 = vector.extract_strided_slice %79 {offsets = [0, 64], sizes = [1, 64], strides = [1, 1]} : vector<1x256xf32> to vector<1x64xf32>
    %87 = arith.negf %86 : vector<1x64xf32>
    %88 = math.exp %87 : vector<1x64xf32>
    %cst_22 = arith.constant 1.000000e+00 : f32
    %89 = vector.broadcast %cst_22 : f32 to vector<1x64xf32>
    %90 = arith.addf %89, %88 : vector<1x64xf32>
    %91 = arith.divf %89, %90 : vector<1x64xf32>
    %92 = vector.extract_strided_slice %79 {offsets = [0, 128], sizes = [1, 64], strides = [1, 1]} : vector<1x256xf32> to vector<1x64xf32>
    %93 = math.tanh %92 : vector<1x64xf32>
    %94 = vector.extract_strided_slice %79 {offsets = [0, 192], sizes = [1, 64], strides = [1, 1]} : vector<1x256xf32> to vector<1x64xf32>
    %95 = arith.negf %94 : vector<1x64xf32>
    %96 = math.exp %95 : vector<1x64xf32>
    %cst_23 = arith.constant 1.000000e+00 : f32
    %97 = vector.broadcast %cst_23 : f32 to vector<1x64xf32>
    %98 = arith.addf %97, %96 : vector<1x64xf32>
    %99 = arith.divf %97, %98 : vector<1x64xf32>
    %100 = arith.mulf %91, %70 : vector<1x64xf32>
    %101 = arith.mulf %85, %93 : vector<1x64xf32>
    %102 = arith.addf %100, %101 : vector<1x64xf32>
    %103 = math.tanh %102 : vector<1x64xf32>
    %104 = arith.mulf %99, %103 : vector<1x64xf32>
    %105 = vector.extract_strided_slice %104 {offsets = [0, 0], sizes = [1, 32], strides = [1, 1]} : vector<1x64xf32> to vector<1x32xf32>
    %106 = vector.extract_strided_slice %104 {offsets = [0, 32], sizes = [1, 32], strides = [1, 1]} : vector<1x64xf32> to vector<1x32xf32>
    %107 = vector.extract_strided_slice %7 {offsets = [3, 0], sizes = [1, 256], strides = [1, 1]} : vector<8x256xf32> to vector<1x256xf32>
    %108 = vector.extract_strided_slice %8 {offsets = [4, 0], sizes = [1, 256], strides = [1, 1]} : vector<8x256xf32> to vector<1x256xf32>
    %109 = arith.addf %107, %108 : vector<1x256xf32>
    %cst_24 = arith.constant dense<0.000000e+00> : vector<1x256xf32>
    %110 = tpu.matmul %104, %3, %cst_24 {dimension_numbers = #tpu.dot_dimension_numbers<[1], [0], [0], [1], [0, 0, 1, 1], [], []>} : vector<1x64xf32>, vector<64x256xf32>, vector<1x256xf32> -> vector<1x256xf32>
    %111 = arith.addf %109, %110 : vector<1x256xf32>
    %112 = vector.extract_strided_slice %111 {offsets = [0, 0], sizes = [1, 64], strides = [1, 1]} : vector<1x256xf32> to vector<1x64xf32>
    %113 = arith.negf %112 : vector<1x64xf32>
    %114 = math.exp %113 : vector<1x64xf32>
    %cst_25 = arith.constant 1.000000e+00 : f32
    %115 = vector.broadcast %cst_25 : f32 to vector<1x64xf32>
    %116 = arith.addf %115, %114 : vector<1x64xf32>
    %117 = arith.divf %115, %116 : vector<1x64xf32>
    %118 = vector.extract_strided_slice %111 {offsets = [0, 64], sizes = [1, 64], strides = [1, 1]} : vector<1x256xf32> to vector<1x64xf32>
    %119 = arith.negf %118 : vector<1x64xf32>
    %120 = math.exp %119 : vector<1x64xf32>
    %cst_26 = arith.constant 1.000000e+00 : f32
    %121 = vector.broadcast %cst_26 : f32 to vector<1x64xf32>
    %122 = arith.addf %121, %120 : vector<1x64xf32>
    %123 = arith.divf %121, %122 : vector<1x64xf32>
    %124 = vector.extract_strided_slice %111 {offsets = [0, 128], sizes = [1, 64], strides = [1, 1]} : vector<1x256xf32> to vector<1x64xf32>
    %125 = math.tanh %124 : vector<1x64xf32>
    %126 = vector.extract_strided_slice %111 {offsets = [0, 192], sizes = [1, 64], strides = [1, 1]} : vector<1x256xf32> to vector<1x64xf32>
    %127 = arith.negf %126 : vector<1x64xf32>
    %128 = math.exp %127 : vector<1x64xf32>
    %cst_27 = arith.constant 1.000000e+00 : f32
    %129 = vector.broadcast %cst_27 : f32 to vector<1x64xf32>
    %130 = arith.addf %129, %128 : vector<1x64xf32>
    %131 = arith.divf %129, %130 : vector<1x64xf32>
    %132 = arith.mulf %123, %102 : vector<1x64xf32>
    %133 = arith.mulf %117, %125 : vector<1x64xf32>
    %134 = arith.addf %132, %133 : vector<1x64xf32>
    %135 = math.tanh %134 : vector<1x64xf32>
    %136 = arith.mulf %131, %135 : vector<1x64xf32>
    %137 = vector.extract_strided_slice %136 {offsets = [0, 0], sizes = [1, 32], strides = [1, 1]} : vector<1x64xf32> to vector<1x32xf32>
    %138 = vector.extract_strided_slice %136 {offsets = [0, 32], sizes = [1, 32], strides = [1, 1]} : vector<1x64xf32> to vector<1x32xf32>
    %139 = vector.extract_strided_slice %7 {offsets = [4, 0], sizes = [1, 256], strides = [1, 1]} : vector<8x256xf32> to vector<1x256xf32>
    %140 = vector.extract_strided_slice %8 {offsets = [3, 0], sizes = [1, 256], strides = [1, 1]} : vector<8x256xf32> to vector<1x256xf32>
    %141 = arith.addf %139, %140 : vector<1x256xf32>
    %cst_28 = arith.constant dense<0.000000e+00> : vector<1x256xf32>
    %142 = tpu.matmul %136, %3, %cst_28 {dimension_numbers = #tpu.dot_dimension_numbers<[1], [0], [0], [1], [0, 0, 1, 1], [], []>} : vector<1x64xf32>, vector<64x256xf32>, vector<1x256xf32> -> vector<1x256xf32>
    %143 = arith.addf %141, %142 : vector<1x256xf32>
    %144 = vector.extract_strided_slice %143 {offsets = [0, 0], sizes = [1, 64], strides = [1, 1]} : vector<1x256xf32> to vector<1x64xf32>
    %145 = arith.negf %144 : vector<1x64xf32>
    %146 = math.exp %145 : vector<1x64xf32>
    %cst_29 = arith.constant 1.000000e+00 : f32
    %147 = vector.broadcast %cst_29 : f32 to vector<1x64xf32>
    %148 = arith.addf %147, %146 : vector<1x64xf32>
    %149 = arith.divf %147, %148 : vector<1x64xf32>
    %150 = vector.extract_strided_slice %143 {offsets = [0, 64], sizes = [1, 64], strides = [1, 1]} : vector<1x256xf32> to vector<1x64xf32>
    %151 = arith.negf %150 : vector<1x64xf32>
    %152 = math.exp %151 : vector<1x64xf32>
    %cst_30 = arith.constant 1.000000e+00 : f32
    %153 = vector.broadcast %cst_30 : f32 to vector<1x64xf32>
    %154 = arith.addf %153, %152 : vector<1x64xf32>
    %155 = arith.divf %153, %154 : vector<1x64xf32>
    %156 = vector.extract_strided_slice %143 {offsets = [0, 128], sizes = [1, 64], strides = [1, 1]} : vector<1x256xf32> to vector<1x64xf32>
    %157 = math.tanh %156 : vector<1x64xf32>
    %158 = vector.extract_strided_slice %143 {offsets = [0, 192], sizes = [1, 64], strides = [1, 1]} : vector<1x256xf32> to vector<1x64xf32>
    %159 = arith.negf %158 : vector<1x64xf32>
    %160 = math.exp %159 : vector<1x64xf32>
    %cst_31 = arith.constant 1.000000e+00 : f32
    %161 = vector.broadcast %cst_31 : f32 to vector<1x64xf32>
    %162 = arith.addf %161, %160 : vector<1x64xf32>
    %163 = arith.divf %161, %162 : vector<1x64xf32>
    %164 = arith.mulf %155, %134 : vector<1x64xf32>
    %165 = arith.mulf %149, %157 : vector<1x64xf32>
    %166 = arith.addf %164, %165 : vector<1x64xf32>
    %167 = math.tanh %166 : vector<1x64xf32>
    %168 = arith.mulf %163, %167 : vector<1x64xf32>
    %169 = vector.extract_strided_slice %168 {offsets = [0, 0], sizes = [1, 32], strides = [1, 1]} : vector<1x64xf32> to vector<1x32xf32>
    %170 = vector.extract_strided_slice %168 {offsets = [0, 32], sizes = [1, 32], strides = [1, 1]} : vector<1x64xf32> to vector<1x32xf32>
    %171 = vector.extract_strided_slice %7 {offsets = [5, 0], sizes = [1, 256], strides = [1, 1]} : vector<8x256xf32> to vector<1x256xf32>
    %172 = vector.extract_strided_slice %8 {offsets = [2, 0], sizes = [1, 256], strides = [1, 1]} : vector<8x256xf32> to vector<1x256xf32>
    %173 = arith.addf %171, %172 : vector<1x256xf32>
    %cst_32 = arith.constant dense<0.000000e+00> : vector<1x256xf32>
    %174 = tpu.matmul %168, %3, %cst_32 {dimension_numbers = #tpu.dot_dimension_numbers<[1], [0], [0], [1], [0, 0, 1, 1], [], []>} : vector<1x64xf32>, vector<64x256xf32>, vector<1x256xf32> -> vector<1x256xf32>
    %175 = arith.addf %173, %174 : vector<1x256xf32>
    %176 = vector.extract_strided_slice %175 {offsets = [0, 0], sizes = [1, 64], strides = [1, 1]} : vector<1x256xf32> to vector<1x64xf32>
    %177 = arith.negf %176 : vector<1x64xf32>
    %178 = math.exp %177 : vector<1x64xf32>
    %cst_33 = arith.constant 1.000000e+00 : f32
    %179 = vector.broadcast %cst_33 : f32 to vector<1x64xf32>
    %180 = arith.addf %179, %178 : vector<1x64xf32>
    %181 = arith.divf %179, %180 : vector<1x64xf32>
    %182 = vector.extract_strided_slice %175 {offsets = [0, 64], sizes = [1, 64], strides = [1, 1]} : vector<1x256xf32> to vector<1x64xf32>
    %183 = arith.negf %182 : vector<1x64xf32>
    %184 = math.exp %183 : vector<1x64xf32>
    %cst_34 = arith.constant 1.000000e+00 : f32
    %185 = vector.broadcast %cst_34 : f32 to vector<1x64xf32>
    %186 = arith.addf %185, %184 : vector<1x64xf32>
    %187 = arith.divf %185, %186 : vector<1x64xf32>
    %188 = vector.extract_strided_slice %175 {offsets = [0, 128], sizes = [1, 64], strides = [1, 1]} : vector<1x256xf32> to vector<1x64xf32>
    %189 = math.tanh %188 : vector<1x64xf32>
    %190 = vector.extract_strided_slice %175 {offsets = [0, 192], sizes = [1, 64], strides = [1, 1]} : vector<1x256xf32> to vector<1x64xf32>
    %191 = arith.negf %190 : vector<1x64xf32>
    %192 = math.exp %191 : vector<1x64xf32>
    %cst_35 = arith.constant 1.000000e+00 : f32
    %193 = vector.broadcast %cst_35 : f32 to vector<1x64xf32>
    %194 = arith.addf %193, %192 : vector<1x64xf32>
    %195 = arith.divf %193, %194 : vector<1x64xf32>
    %196 = arith.mulf %187, %166 : vector<1x64xf32>
    %197 = arith.mulf %181, %189 : vector<1x64xf32>
    %198 = arith.addf %196, %197 : vector<1x64xf32>
    %199 = math.tanh %198 : vector<1x64xf32>
    %200 = arith.mulf %195, %199 : vector<1x64xf32>
    %201 = vector.extract_strided_slice %200 {offsets = [0, 0], sizes = [1, 32], strides = [1, 1]} : vector<1x64xf32> to vector<1x32xf32>
    %202 = vector.extract_strided_slice %200 {offsets = [0, 32], sizes = [1, 32], strides = [1, 1]} : vector<1x64xf32> to vector<1x32xf32>
    %203 = vector.extract_strided_slice %7 {offsets = [6, 0], sizes = [1, 256], strides = [1, 1]} : vector<8x256xf32> to vector<1x256xf32>
    %204 = vector.extract_strided_slice %8 {offsets = [1, 0], sizes = [1, 256], strides = [1, 1]} : vector<8x256xf32> to vector<1x256xf32>
    %205 = arith.addf %203, %204 : vector<1x256xf32>
    %cst_36 = arith.constant dense<0.000000e+00> : vector<1x256xf32>
    %206 = tpu.matmul %200, %3, %cst_36 {dimension_numbers = #tpu.dot_dimension_numbers<[1], [0], [0], [1], [0, 0, 1, 1], [], []>} : vector<1x64xf32>, vector<64x256xf32>, vector<1x256xf32> -> vector<1x256xf32>
    %207 = arith.addf %205, %206 : vector<1x256xf32>
    %208 = vector.extract_strided_slice %207 {offsets = [0, 0], sizes = [1, 64], strides = [1, 1]} : vector<1x256xf32> to vector<1x64xf32>
    %209 = arith.negf %208 : vector<1x64xf32>
    %210 = math.exp %209 : vector<1x64xf32>
    %cst_37 = arith.constant 1.000000e+00 : f32
    %211 = vector.broadcast %cst_37 : f32 to vector<1x64xf32>
    %212 = arith.addf %211, %210 : vector<1x64xf32>
    %213 = arith.divf %211, %212 : vector<1x64xf32>
    %214 = vector.extract_strided_slice %207 {offsets = [0, 64], sizes = [1, 64], strides = [1, 1]} : vector<1x256xf32> to vector<1x64xf32>
    %215 = arith.negf %214 : vector<1x64xf32>
    %216 = math.exp %215 : vector<1x64xf32>
    %cst_38 = arith.constant 1.000000e+00 : f32
    %217 = vector.broadcast %cst_38 : f32 to vector<1x64xf32>
    %218 = arith.addf %217, %216 : vector<1x64xf32>
    %219 = arith.divf %217, %218 : vector<1x64xf32>
    %220 = vector.extract_strided_slice %207 {offsets = [0, 128], sizes = [1, 64], strides = [1, 1]} : vector<1x256xf32> to vector<1x64xf32>
    %221 = math.tanh %220 : vector<1x64xf32>
    %222 = vector.extract_strided_slice %207 {offsets = [0, 192], sizes = [1, 64], strides = [1, 1]} : vector<1x256xf32> to vector<1x64xf32>
    %223 = arith.negf %222 : vector<1x64xf32>
    %224 = math.exp %223 : vector<1x64xf32>
    %cst_39 = arith.constant 1.000000e+00 : f32
    %225 = vector.broadcast %cst_39 : f32 to vector<1x64xf32>
    %226 = arith.addf %225, %224 : vector<1x64xf32>
    %227 = arith.divf %225, %226 : vector<1x64xf32>
    %228 = arith.mulf %219, %198 : vector<1x64xf32>
    %229 = arith.mulf %213, %221 : vector<1x64xf32>
    %230 = arith.addf %228, %229 : vector<1x64xf32>
    %231 = math.tanh %230 : vector<1x64xf32>
    %232 = arith.mulf %227, %231 : vector<1x64xf32>
    %233 = vector.extract_strided_slice %232 {offsets = [0, 0], sizes = [1, 32], strides = [1, 1]} : vector<1x64xf32> to vector<1x32xf32>
    %234 = vector.extract_strided_slice %232 {offsets = [0, 32], sizes = [1, 32], strides = [1, 1]} : vector<1x64xf32> to vector<1x32xf32>
    %235 = vector.extract_strided_slice %7 {offsets = [7, 0], sizes = [1, 256], strides = [1, 1]} : vector<8x256xf32> to vector<1x256xf32>
    %236 = vector.extract_strided_slice %8 {offsets = [0, 0], sizes = [1, 256], strides = [1, 1]} : vector<8x256xf32> to vector<1x256xf32>
    %237 = arith.addf %235, %236 : vector<1x256xf32>
    %cst_40 = arith.constant dense<0.000000e+00> : vector<1x256xf32>
    %238 = tpu.matmul %232, %3, %cst_40 {dimension_numbers = #tpu.dot_dimension_numbers<[1], [0], [0], [1], [0, 0, 1, 1], [], []>} : vector<1x64xf32>, vector<64x256xf32>, vector<1x256xf32> -> vector<1x256xf32>
    %239 = arith.addf %237, %238 : vector<1x256xf32>
    %240 = vector.extract_strided_slice %239 {offsets = [0, 0], sizes = [1, 64], strides = [1, 1]} : vector<1x256xf32> to vector<1x64xf32>
    %241 = arith.negf %240 : vector<1x64xf32>
    %242 = math.exp %241 : vector<1x64xf32>
    %cst_41 = arith.constant 1.000000e+00 : f32
    %243 = vector.broadcast %cst_41 : f32 to vector<1x64xf32>
    %244 = arith.addf %243, %242 : vector<1x64xf32>
    %245 = arith.divf %243, %244 : vector<1x64xf32>
    %246 = vector.extract_strided_slice %239 {offsets = [0, 64], sizes = [1, 64], strides = [1, 1]} : vector<1x256xf32> to vector<1x64xf32>
    %247 = arith.negf %246 : vector<1x64xf32>
    %248 = math.exp %247 : vector<1x64xf32>
    %cst_42 = arith.constant 1.000000e+00 : f32
    %249 = vector.broadcast %cst_42 : f32 to vector<1x64xf32>
    %250 = arith.addf %249, %248 : vector<1x64xf32>
    %251 = arith.divf %249, %250 : vector<1x64xf32>
    %252 = vector.extract_strided_slice %239 {offsets = [0, 128], sizes = [1, 64], strides = [1, 1]} : vector<1x256xf32> to vector<1x64xf32>
    %253 = math.tanh %252 : vector<1x64xf32>
    %254 = vector.extract_strided_slice %239 {offsets = [0, 192], sizes = [1, 64], strides = [1, 1]} : vector<1x256xf32> to vector<1x64xf32>
    %255 = arith.negf %254 : vector<1x64xf32>
    %256 = math.exp %255 : vector<1x64xf32>
    %cst_43 = arith.constant 1.000000e+00 : f32
    %257 = vector.broadcast %cst_43 : f32 to vector<1x64xf32>
    %258 = arith.addf %257, %256 : vector<1x64xf32>
    %259 = arith.divf %257, %258 : vector<1x64xf32>
    %260 = arith.mulf %251, %230 : vector<1x64xf32>
    %261 = arith.mulf %245, %253 : vector<1x64xf32>
    %262 = arith.addf %260, %261 : vector<1x64xf32>
    %263 = math.tanh %262 : vector<1x64xf32>
    %264 = arith.mulf %259, %263 : vector<1x64xf32>
    %265 = vector.extract_strided_slice %264 {offsets = [0, 0], sizes = [1, 32], strides = [1, 1]} : vector<1x64xf32> to vector<1x32xf32>
    %266 = vector.extract_strided_slice %264 {offsets = [0, 32], sizes = [1, 32], strides = [1, 1]} : vector<1x64xf32> to vector<1x32xf32>
    %267 = tpu.concatenate %41, %73, %105, %137, %169, %201, %233, %265 in 0 : vector<1x32xf32>, vector<1x32xf32>, vector<1x32xf32>, vector<1x32xf32>, vector<1x32xf32>, vector<1x32xf32>, vector<1x32xf32>, vector<1x32xf32> -> vector<8x32xf32>
    %268 = tpu.concatenate %266, %234, %202, %170, %138, %106, %74, %42 in 0 : vector<1x32xf32>, vector<1x32xf32>, vector<1x32xf32>, vector<1x32xf32>, vector<1x32xf32>, vector<1x32xf32>, vector<1x32xf32>, vector<1x32xf32> -> vector<8x32xf32>
    %269 = tpu.concatenate %267, %268 in 1 : vector<8x32xf32>, vector<8x32xf32> -> vector<8x64xf32>
    %c0_44 = arith.constant 0 : index
    %c0_45 = arith.constant 0 : index
    %270 = vector.load %arg5[%c0_44, %c0_45] : memref<64x256xf32, #tpu.memory_space<vmem>>, vector<64x256xf32>
    %c0_46 = arith.constant 0 : index
    %c0_47 = arith.constant 0 : index
    %271 = vector.load %arg6[%c0_46, %c0_47] : memref<64x256xf32, #tpu.memory_space<vmem>>, vector<64x256xf32>
    %c0_48 = arith.constant 0 : index
    %c0_49 = arith.constant 0 : index
    %272 = vector.load %arg7[%c0_48, %c0_49] : memref<64x256xf32, #tpu.memory_space<vmem>>, vector<64x256xf32>
    %c0_50 = arith.constant 0 : index
    %c0_51 = arith.constant 0 : index
    %273 = vector.load %arg8[%c0_50, %c0_51] : memref<1x256xf32, #tpu.memory_space<vmem>>, vector<1x256xf32>
    %cst_52 = arith.constant dense<0.000000e+00> : vector<8x256xf32>
    %274 = tpu.matmul %269, %270, %cst_52 {dimension_numbers = #tpu.dot_dimension_numbers<[1], [0], [0], [1], [0, 0, 1, 1], [], []>} : vector<8x64xf32>, vector<64x256xf32>, vector<8x256xf32> -> vector<8x256xf32>
    %275 = vector.broadcast %273 : vector<1x256xf32> to vector<8x256xf32>
    %276 = arith.addf %274, %275 : vector<8x256xf32>
    %cst_53 = arith.constant dense<0.000000e+00> : vector<8x256xf32>
    %277 = tpu.matmul %269, %271, %cst_53 {dimension_numbers = #tpu.dot_dimension_numbers<[1], [0], [0], [1], [0, 0, 1, 1], [], []>} : vector<8x64xf32>, vector<64x256xf32>, vector<8x256xf32> -> vector<8x256xf32>
    %cst_54 = arith.constant 0.000000e+00 : f32
    %278 = vector.broadcast %cst_54 : f32 to vector<1x64xf32>
    %cst_55 = arith.constant 0.000000e+00 : f32
    %279 = vector.broadcast %cst_55 : f32 to vector<1x64xf32>
    %280 = vector.extract_strided_slice %276 {offsets = [0, 0], sizes = [1, 256], strides = [1, 1]} : vector<8x256xf32> to vector<1x256xf32>
    %281 = vector.extract_strided_slice %277 {offsets = [7, 0], sizes = [1, 256], strides = [1, 1]} : vector<8x256xf32> to vector<1x256xf32>
    %282 = arith.addf %280, %281 : vector<1x256xf32>
    %cst_56 = arith.constant dense<0.000000e+00> : vector<1x256xf32>
    %283 = tpu.matmul %278, %272, %cst_56 {dimension_numbers = #tpu.dot_dimension_numbers<[1], [0], [0], [1], [0, 0, 1, 1], [], []>} : vector<1x64xf32>, vector<64x256xf32>, vector<1x256xf32> -> vector<1x256xf32>
    %284 = arith.addf %282, %283 : vector<1x256xf32>
    %285 = vector.extract_strided_slice %284 {offsets = [0, 0], sizes = [1, 64], strides = [1, 1]} : vector<1x256xf32> to vector<1x64xf32>
    %286 = arith.negf %285 : vector<1x64xf32>
    %287 = math.exp %286 : vector<1x64xf32>
    %cst_57 = arith.constant 1.000000e+00 : f32
    %288 = vector.broadcast %cst_57 : f32 to vector<1x64xf32>
    %289 = arith.addf %288, %287 : vector<1x64xf32>
    %290 = arith.divf %288, %289 : vector<1x64xf32>
    %291 = vector.extract_strided_slice %284 {offsets = [0, 64], sizes = [1, 64], strides = [1, 1]} : vector<1x256xf32> to vector<1x64xf32>
    %292 = arith.negf %291 : vector<1x64xf32>
    %293 = math.exp %292 : vector<1x64xf32>
    %cst_58 = arith.constant 1.000000e+00 : f32
    %294 = vector.broadcast %cst_58 : f32 to vector<1x64xf32>
    %295 = arith.addf %294, %293 : vector<1x64xf32>
    %296 = arith.divf %294, %295 : vector<1x64xf32>
    %297 = vector.extract_strided_slice %284 {offsets = [0, 128], sizes = [1, 64], strides = [1, 1]} : vector<1x256xf32> to vector<1x64xf32>
    %298 = math.tanh %297 : vector<1x64xf32>
    %299 = vector.extract_strided_slice %284 {offsets = [0, 192], sizes = [1, 64], strides = [1, 1]} : vector<1x256xf32> to vector<1x64xf32>
    %300 = arith.negf %299 : vector<1x64xf32>
    %301 = math.exp %300 : vector<1x64xf32>
    %cst_59 = arith.constant 1.000000e+00 : f32
    %302 = vector.broadcast %cst_59 : f32 to vector<1x64xf32>
    %303 = arith.addf %302, %301 : vector<1x64xf32>
    %304 = arith.divf %302, %303 : vector<1x64xf32>
    %305 = arith.mulf %296, %279 : vector<1x64xf32>
    %306 = arith.mulf %290, %298 : vector<1x64xf32>
    %307 = arith.addf %305, %306 : vector<1x64xf32>
    %308 = math.tanh %307 : vector<1x64xf32>
    %309 = arith.mulf %304, %308 : vector<1x64xf32>
    %310 = vector.extract_strided_slice %309 {offsets = [0, 0], sizes = [1, 32], strides = [1, 1]} : vector<1x64xf32> to vector<1x32xf32>
    %311 = vector.extract_strided_slice %309 {offsets = [0, 32], sizes = [1, 32], strides = [1, 1]} : vector<1x64xf32> to vector<1x32xf32>
    %312 = vector.extract_strided_slice %276 {offsets = [1, 0], sizes = [1, 256], strides = [1, 1]} : vector<8x256xf32> to vector<1x256xf32>
    %313 = vector.extract_strided_slice %277 {offsets = [6, 0], sizes = [1, 256], strides = [1, 1]} : vector<8x256xf32> to vector<1x256xf32>
    %314 = arith.addf %312, %313 : vector<1x256xf32>
    %cst_60 = arith.constant dense<0.000000e+00> : vector<1x256xf32>
    %315 = tpu.matmul %309, %272, %cst_60 {dimension_numbers = #tpu.dot_dimension_numbers<[1], [0], [0], [1], [0, 0, 1, 1], [], []>} : vector<1x64xf32>, vector<64x256xf32>, vector<1x256xf32> -> vector<1x256xf32>
    %316 = arith.addf %314, %315 : vector<1x256xf32>
    %317 = vector.extract_strided_slice %316 {offsets = [0, 0], sizes = [1, 64], strides = [1, 1]} : vector<1x256xf32> to vector<1x64xf32>
    %318 = arith.negf %317 : vector<1x64xf32>
    %319 = math.exp %318 : vector<1x64xf32>
    %cst_61 = arith.constant 1.000000e+00 : f32
    %320 = vector.broadcast %cst_61 : f32 to vector<1x64xf32>
    %321 = arith.addf %320, %319 : vector<1x64xf32>
    %322 = arith.divf %320, %321 : vector<1x64xf32>
    %323 = vector.extract_strided_slice %316 {offsets = [0, 64], sizes = [1, 64], strides = [1, 1]} : vector<1x256xf32> to vector<1x64xf32>
    %324 = arith.negf %323 : vector<1x64xf32>
    %325 = math.exp %324 : vector<1x64xf32>
    %cst_62 = arith.constant 1.000000e+00 : f32
    %326 = vector.broadcast %cst_62 : f32 to vector<1x64xf32>
    %327 = arith.addf %326, %325 : vector<1x64xf32>
    %328 = arith.divf %326, %327 : vector<1x64xf32>
    %329 = vector.extract_strided_slice %316 {offsets = [0, 128], sizes = [1, 64], strides = [1, 1]} : vector<1x256xf32> to vector<1x64xf32>
    %330 = math.tanh %329 : vector<1x64xf32>
    %331 = vector.extract_strided_slice %316 {offsets = [0, 192], sizes = [1, 64], strides = [1, 1]} : vector<1x256xf32> to vector<1x64xf32>
    %332 = arith.negf %331 : vector<1x64xf32>
    %333 = math.exp %332 : vector<1x64xf32>
    %cst_63 = arith.constant 1.000000e+00 : f32
    %334 = vector.broadcast %cst_63 : f32 to vector<1x64xf32>
    %335 = arith.addf %334, %333 : vector<1x64xf32>
    %336 = arith.divf %334, %335 : vector<1x64xf32>
    %337 = arith.mulf %328, %307 : vector<1x64xf32>
    %338 = arith.mulf %322, %330 : vector<1x64xf32>
    %339 = arith.addf %337, %338 : vector<1x64xf32>
    %340 = math.tanh %339 : vector<1x64xf32>
    %341 = arith.mulf %336, %340 : vector<1x64xf32>
    %342 = vector.extract_strided_slice %341 {offsets = [0, 0], sizes = [1, 32], strides = [1, 1]} : vector<1x64xf32> to vector<1x32xf32>
    %343 = vector.extract_strided_slice %341 {offsets = [0, 32], sizes = [1, 32], strides = [1, 1]} : vector<1x64xf32> to vector<1x32xf32>
    %344 = vector.extract_strided_slice %276 {offsets = [2, 0], sizes = [1, 256], strides = [1, 1]} : vector<8x256xf32> to vector<1x256xf32>
    %345 = vector.extract_strided_slice %277 {offsets = [5, 0], sizes = [1, 256], strides = [1, 1]} : vector<8x256xf32> to vector<1x256xf32>
    %346 = arith.addf %344, %345 : vector<1x256xf32>
    %cst_64 = arith.constant dense<0.000000e+00> : vector<1x256xf32>
    %347 = tpu.matmul %341, %272, %cst_64 {dimension_numbers = #tpu.dot_dimension_numbers<[1], [0], [0], [1], [0, 0, 1, 1], [], []>} : vector<1x64xf32>, vector<64x256xf32>, vector<1x256xf32> -> vector<1x256xf32>
    %348 = arith.addf %346, %347 : vector<1x256xf32>
    %349 = vector.extract_strided_slice %348 {offsets = [0, 0], sizes = [1, 64], strides = [1, 1]} : vector<1x256xf32> to vector<1x64xf32>
    %350 = arith.negf %349 : vector<1x64xf32>
    %351 = math.exp %350 : vector<1x64xf32>
    %cst_65 = arith.constant 1.000000e+00 : f32
    %352 = vector.broadcast %cst_65 : f32 to vector<1x64xf32>
    %353 = arith.addf %352, %351 : vector<1x64xf32>
    %354 = arith.divf %352, %353 : vector<1x64xf32>
    %355 = vector.extract_strided_slice %348 {offsets = [0, 64], sizes = [1, 64], strides = [1, 1]} : vector<1x256xf32> to vector<1x64xf32>
    %356 = arith.negf %355 : vector<1x64xf32>
    %357 = math.exp %356 : vector<1x64xf32>
    %cst_66 = arith.constant 1.000000e+00 : f32
    %358 = vector.broadcast %cst_66 : f32 to vector<1x64xf32>
    %359 = arith.addf %358, %357 : vector<1x64xf32>
    %360 = arith.divf %358, %359 : vector<1x64xf32>
    %361 = vector.extract_strided_slice %348 {offsets = [0, 128], sizes = [1, 64], strides = [1, 1]} : vector<1x256xf32> to vector<1x64xf32>
    %362 = math.tanh %361 : vector<1x64xf32>
    %363 = vector.extract_strided_slice %348 {offsets = [0, 192], sizes = [1, 64], strides = [1, 1]} : vector<1x256xf32> to vector<1x64xf32>
    %364 = arith.negf %363 : vector<1x64xf32>
    %365 = math.exp %364 : vector<1x64xf32>
    %cst_67 = arith.constant 1.000000e+00 : f32
    %366 = vector.broadcast %cst_67 : f32 to vector<1x64xf32>
    %367 = arith.addf %366, %365 : vector<1x64xf32>
    %368 = arith.divf %366, %367 : vector<1x64xf32>
    %369 = arith.mulf %360, %339 : vector<1x64xf32>
    %370 = arith.mulf %354, %362 : vector<1x64xf32>
    %371 = arith.addf %369, %370 : vector<1x64xf32>
    %372 = math.tanh %371 : vector<1x64xf32>
    %373 = arith.mulf %368, %372 : vector<1x64xf32>
    %374 = vector.extract_strided_slice %373 {offsets = [0, 0], sizes = [1, 32], strides = [1, 1]} : vector<1x64xf32> to vector<1x32xf32>
    %375 = vector.extract_strided_slice %373 {offsets = [0, 32], sizes = [1, 32], strides = [1, 1]} : vector<1x64xf32> to vector<1x32xf32>
    %376 = vector.extract_strided_slice %276 {offsets = [3, 0], sizes = [1, 256], strides = [1, 1]} : vector<8x256xf32> to vector<1x256xf32>
    %377 = vector.extract_strided_slice %277 {offsets = [4, 0], sizes = [1, 256], strides = [1, 1]} : vector<8x256xf32> to vector<1x256xf32>
    %378 = arith.addf %376, %377 : vector<1x256xf32>
    %cst_68 = arith.constant dense<0.000000e+00> : vector<1x256xf32>
    %379 = tpu.matmul %373, %272, %cst_68 {dimension_numbers = #tpu.dot_dimension_numbers<[1], [0], [0], [1], [0, 0, 1, 1], [], []>} : vector<1x64xf32>, vector<64x256xf32>, vector<1x256xf32> -> vector<1x256xf32>
    %380 = arith.addf %378, %379 : vector<1x256xf32>
    %381 = vector.extract_strided_slice %380 {offsets = [0, 0], sizes = [1, 64], strides = [1, 1]} : vector<1x256xf32> to vector<1x64xf32>
    %382 = arith.negf %381 : vector<1x64xf32>
    %383 = math.exp %382 : vector<1x64xf32>
    %cst_69 = arith.constant 1.000000e+00 : f32
    %384 = vector.broadcast %cst_69 : f32 to vector<1x64xf32>
    %385 = arith.addf %384, %383 : vector<1x64xf32>
    %386 = arith.divf %384, %385 : vector<1x64xf32>
    %387 = vector.extract_strided_slice %380 {offsets = [0, 64], sizes = [1, 64], strides = [1, 1]} : vector<1x256xf32> to vector<1x64xf32>
    %388 = arith.negf %387 : vector<1x64xf32>
    %389 = math.exp %388 : vector<1x64xf32>
    %cst_70 = arith.constant 1.000000e+00 : f32
    %390 = vector.broadcast %cst_70 : f32 to vector<1x64xf32>
    %391 = arith.addf %390, %389 : vector<1x64xf32>
    %392 = arith.divf %390, %391 : vector<1x64xf32>
    %393 = vector.extract_strided_slice %380 {offsets = [0, 128], sizes = [1, 64], strides = [1, 1]} : vector<1x256xf32> to vector<1x64xf32>
    %394 = math.tanh %393 : vector<1x64xf32>
    %395 = vector.extract_strided_slice %380 {offsets = [0, 192], sizes = [1, 64], strides = [1, 1]} : vector<1x256xf32> to vector<1x64xf32>
    %396 = arith.negf %395 : vector<1x64xf32>
    %397 = math.exp %396 : vector<1x64xf32>
    %cst_71 = arith.constant 1.000000e+00 : f32
    %398 = vector.broadcast %cst_71 : f32 to vector<1x64xf32>
    %399 = arith.addf %398, %397 : vector<1x64xf32>
    %400 = arith.divf %398, %399 : vector<1x64xf32>
    %401 = arith.mulf %392, %371 : vector<1x64xf32>
    %402 = arith.mulf %386, %394 : vector<1x64xf32>
    %403 = arith.addf %401, %402 : vector<1x64xf32>
    %404 = math.tanh %403 : vector<1x64xf32>
    %405 = arith.mulf %400, %404 : vector<1x64xf32>
    %406 = vector.extract_strided_slice %405 {offsets = [0, 0], sizes = [1, 32], strides = [1, 1]} : vector<1x64xf32> to vector<1x32xf32>
    %407 = vector.extract_strided_slice %405 {offsets = [0, 32], sizes = [1, 32], strides = [1, 1]} : vector<1x64xf32> to vector<1x32xf32>
    %408 = vector.extract_strided_slice %276 {offsets = [4, 0], sizes = [1, 256], strides = [1, 1]} : vector<8x256xf32> to vector<1x256xf32>
    %409 = vector.extract_strided_slice %277 {offsets = [3, 0], sizes = [1, 256], strides = [1, 1]} : vector<8x256xf32> to vector<1x256xf32>
    %410 = arith.addf %408, %409 : vector<1x256xf32>
    %cst_72 = arith.constant dense<0.000000e+00> : vector<1x256xf32>
    %411 = tpu.matmul %405, %272, %cst_72 {dimension_numbers = #tpu.dot_dimension_numbers<[1], [0], [0], [1], [0, 0, 1, 1], [], []>} : vector<1x64xf32>, vector<64x256xf32>, vector<1x256xf32> -> vector<1x256xf32>
    %412 = arith.addf %410, %411 : vector<1x256xf32>
    %413 = vector.extract_strided_slice %412 {offsets = [0, 0], sizes = [1, 64], strides = [1, 1]} : vector<1x256xf32> to vector<1x64xf32>
    %414 = arith.negf %413 : vector<1x64xf32>
    %415 = math.exp %414 : vector<1x64xf32>
    %cst_73 = arith.constant 1.000000e+00 : f32
    %416 = vector.broadcast %cst_73 : f32 to vector<1x64xf32>
    %417 = arith.addf %416, %415 : vector<1x64xf32>
    %418 = arith.divf %416, %417 : vector<1x64xf32>
    %419 = vector.extract_strided_slice %412 {offsets = [0, 64], sizes = [1, 64], strides = [1, 1]} : vector<1x256xf32> to vector<1x64xf32>
    %420 = arith.negf %419 : vector<1x64xf32>
    %421 = math.exp %420 : vector<1x64xf32>
    %cst_74 = arith.constant 1.000000e+00 : f32
    %422 = vector.broadcast %cst_74 : f32 to vector<1x64xf32>
    %423 = arith.addf %422, %421 : vector<1x64xf32>
    %424 = arith.divf %422, %423 : vector<1x64xf32>
    %425 = vector.extract_strided_slice %412 {offsets = [0, 128], sizes = [1, 64], strides = [1, 1]} : vector<1x256xf32> to vector<1x64xf32>
    %426 = math.tanh %425 : vector<1x64xf32>
    %427 = vector.extract_strided_slice %412 {offsets = [0, 192], sizes = [1, 64], strides = [1, 1]} : vector<1x256xf32> to vector<1x64xf32>
    %428 = arith.negf %427 : vector<1x64xf32>
    %429 = math.exp %428 : vector<1x64xf32>
    %cst_75 = arith.constant 1.000000e+00 : f32
    %430 = vector.broadcast %cst_75 : f32 to vector<1x64xf32>
    %431 = arith.addf %430, %429 : vector<1x64xf32>
    %432 = arith.divf %430, %431 : vector<1x64xf32>
    %433 = arith.mulf %424, %403 : vector<1x64xf32>
    %434 = arith.mulf %418, %426 : vector<1x64xf32>
    %435 = arith.addf %433, %434 : vector<1x64xf32>
    %436 = math.tanh %435 : vector<1x64xf32>
    %437 = arith.mulf %432, %436 : vector<1x64xf32>
    %438 = vector.extract_strided_slice %437 {offsets = [0, 0], sizes = [1, 32], strides = [1, 1]} : vector<1x64xf32> to vector<1x32xf32>
    %439 = vector.extract_strided_slice %437 {offsets = [0, 32], sizes = [1, 32], strides = [1, 1]} : vector<1x64xf32> to vector<1x32xf32>
    %440 = vector.extract_strided_slice %276 {offsets = [5, 0], sizes = [1, 256], strides = [1, 1]} : vector<8x256xf32> to vector<1x256xf32>
    %441 = vector.extract_strided_slice %277 {offsets = [2, 0], sizes = [1, 256], strides = [1, 1]} : vector<8x256xf32> to vector<1x256xf32>
    %442 = arith.addf %440, %441 : vector<1x256xf32>
    %cst_76 = arith.constant dense<0.000000e+00> : vector<1x256xf32>
    %443 = tpu.matmul %437, %272, %cst_76 {dimension_numbers = #tpu.dot_dimension_numbers<[1], [0], [0], [1], [0, 0, 1, 1], [], []>} : vector<1x64xf32>, vector<64x256xf32>, vector<1x256xf32> -> vector<1x256xf32>
    %444 = arith.addf %442, %443 : vector<1x256xf32>
    %445 = vector.extract_strided_slice %444 {offsets = [0, 0], sizes = [1, 64], strides = [1, 1]} : vector<1x256xf32> to vector<1x64xf32>
    %446 = arith.negf %445 : vector<1x64xf32>
    %447 = math.exp %446 : vector<1x64xf32>
    %cst_77 = arith.constant 1.000000e+00 : f32
    %448 = vector.broadcast %cst_77 : f32 to vector<1x64xf32>
    %449 = arith.addf %448, %447 : vector<1x64xf32>
    %450 = arith.divf %448, %449 : vector<1x64xf32>
    %451 = vector.extract_strided_slice %444 {offsets = [0, 64], sizes = [1, 64], strides = [1, 1]} : vector<1x256xf32> to vector<1x64xf32>
    %452 = arith.negf %451 : vector<1x64xf32>
    %453 = math.exp %452 : vector<1x64xf32>
    %cst_78 = arith.constant 1.000000e+00 : f32
    %454 = vector.broadcast %cst_78 : f32 to vector<1x64xf32>
    %455 = arith.addf %454, %453 : vector<1x64xf32>
    %456 = arith.divf %454, %455 : vector<1x64xf32>
    %457 = vector.extract_strided_slice %444 {offsets = [0, 128], sizes = [1, 64], strides = [1, 1]} : vector<1x256xf32> to vector<1x64xf32>
    %458 = math.tanh %457 : vector<1x64xf32>
    %459 = vector.extract_strided_slice %444 {offsets = [0, 192], sizes = [1, 64], strides = [1, 1]} : vector<1x256xf32> to vector<1x64xf32>
    %460 = arith.negf %459 : vector<1x64xf32>
    %461 = math.exp %460 : vector<1x64xf32>
    %cst_79 = arith.constant 1.000000e+00 : f32
    %462 = vector.broadcast %cst_79 : f32 to vector<1x64xf32>
    %463 = arith.addf %462, %461 : vector<1x64xf32>
    %464 = arith.divf %462, %463 : vector<1x64xf32>
    %465 = arith.mulf %456, %435 : vector<1x64xf32>
    %466 = arith.mulf %450, %458 : vector<1x64xf32>
    %467 = arith.addf %465, %466 : vector<1x64xf32>
    %468 = math.tanh %467 : vector<1x64xf32>
    %469 = arith.mulf %464, %468 : vector<1x64xf32>
    %470 = vector.extract_strided_slice %469 {offsets = [0, 0], sizes = [1, 32], strides = [1, 1]} : vector<1x64xf32> to vector<1x32xf32>
    %471 = vector.extract_strided_slice %469 {offsets = [0, 32], sizes = [1, 32], strides = [1, 1]} : vector<1x64xf32> to vector<1x32xf32>
    %472 = vector.extract_strided_slice %276 {offsets = [6, 0], sizes = [1, 256], strides = [1, 1]} : vector<8x256xf32> to vector<1x256xf32>
    %473 = vector.extract_strided_slice %277 {offsets = [1, 0], sizes = [1, 256], strides = [1, 1]} : vector<8x256xf32> to vector<1x256xf32>
    %474 = arith.addf %472, %473 : vector<1x256xf32>
    %cst_80 = arith.constant dense<0.000000e+00> : vector<1x256xf32>
    %475 = tpu.matmul %469, %272, %cst_80 {dimension_numbers = #tpu.dot_dimension_numbers<[1], [0], [0], [1], [0, 0, 1, 1], [], []>} : vector<1x64xf32>, vector<64x256xf32>, vector<1x256xf32> -> vector<1x256xf32>
    %476 = arith.addf %474, %475 : vector<1x256xf32>
    %477 = vector.extract_strided_slice %476 {offsets = [0, 0], sizes = [1, 64], strides = [1, 1]} : vector<1x256xf32> to vector<1x64xf32>
    %478 = arith.negf %477 : vector<1x64xf32>
    %479 = math.exp %478 : vector<1x64xf32>
    %cst_81 = arith.constant 1.000000e+00 : f32
    %480 = vector.broadcast %cst_81 : f32 to vector<1x64xf32>
    %481 = arith.addf %480, %479 : vector<1x64xf32>
    %482 = arith.divf %480, %481 : vector<1x64xf32>
    %483 = vector.extract_strided_slice %476 {offsets = [0, 64], sizes = [1, 64], strides = [1, 1]} : vector<1x256xf32> to vector<1x64xf32>
    %484 = arith.negf %483 : vector<1x64xf32>
    %485 = math.exp %484 : vector<1x64xf32>
    %cst_82 = arith.constant 1.000000e+00 : f32
    %486 = vector.broadcast %cst_82 : f32 to vector<1x64xf32>
    %487 = arith.addf %486, %485 : vector<1x64xf32>
    %488 = arith.divf %486, %487 : vector<1x64xf32>
    %489 = vector.extract_strided_slice %476 {offsets = [0, 128], sizes = [1, 64], strides = [1, 1]} : vector<1x256xf32> to vector<1x64xf32>
    %490 = math.tanh %489 : vector<1x64xf32>
    %491 = vector.extract_strided_slice %476 {offsets = [0, 192], sizes = [1, 64], strides = [1, 1]} : vector<1x256xf32> to vector<1x64xf32>
    %492 = arith.negf %491 : vector<1x64xf32>
    %493 = math.exp %492 : vector<1x64xf32>
    %cst_83 = arith.constant 1.000000e+00 : f32
    %494 = vector.broadcast %cst_83 : f32 to vector<1x64xf32>
    %495 = arith.addf %494, %493 : vector<1x64xf32>
    %496 = arith.divf %494, %495 : vector<1x64xf32>
    %497 = arith.mulf %488, %467 : vector<1x64xf32>
    %498 = arith.mulf %482, %490 : vector<1x64xf32>
    %499 = arith.addf %497, %498 : vector<1x64xf32>
    %500 = math.tanh %499 : vector<1x64xf32>
    %501 = arith.mulf %496, %500 : vector<1x64xf32>
    %502 = vector.extract_strided_slice %501 {offsets = [0, 0], sizes = [1, 32], strides = [1, 1]} : vector<1x64xf32> to vector<1x32xf32>
    %503 = vector.extract_strided_slice %501 {offsets = [0, 32], sizes = [1, 32], strides = [1, 1]} : vector<1x64xf32> to vector<1x32xf32>
    %504 = vector.extract_strided_slice %276 {offsets = [7, 0], sizes = [1, 256], strides = [1, 1]} : vector<8x256xf32> to vector<1x256xf32>
    %505 = vector.extract_strided_slice %277 {offsets = [0, 0], sizes = [1, 256], strides = [1, 1]} : vector<8x256xf32> to vector<1x256xf32>
    %506 = arith.addf %504, %505 : vector<1x256xf32>
    %cst_84 = arith.constant dense<0.000000e+00> : vector<1x256xf32>
    %507 = tpu.matmul %501, %272, %cst_84 {dimension_numbers = #tpu.dot_dimension_numbers<[1], [0], [0], [1], [0, 0, 1, 1], [], []>} : vector<1x64xf32>, vector<64x256xf32>, vector<1x256xf32> -> vector<1x256xf32>
    %508 = arith.addf %506, %507 : vector<1x256xf32>
    %509 = vector.extract_strided_slice %508 {offsets = [0, 0], sizes = [1, 64], strides = [1, 1]} : vector<1x256xf32> to vector<1x64xf32>
    %510 = arith.negf %509 : vector<1x64xf32>
    %511 = math.exp %510 : vector<1x64xf32>
    %cst_85 = arith.constant 1.000000e+00 : f32
    %512 = vector.broadcast %cst_85 : f32 to vector<1x64xf32>
    %513 = arith.addf %512, %511 : vector<1x64xf32>
    %514 = arith.divf %512, %513 : vector<1x64xf32>
    %515 = vector.extract_strided_slice %508 {offsets = [0, 64], sizes = [1, 64], strides = [1, 1]} : vector<1x256xf32> to vector<1x64xf32>
    %516 = arith.negf %515 : vector<1x64xf32>
    %517 = math.exp %516 : vector<1x64xf32>
    %cst_86 = arith.constant 1.000000e+00 : f32
    %518 = vector.broadcast %cst_86 : f32 to vector<1x64xf32>
    %519 = arith.addf %518, %517 : vector<1x64xf32>
    %520 = arith.divf %518, %519 : vector<1x64xf32>
    %521 = vector.extract_strided_slice %508 {offsets = [0, 128], sizes = [1, 64], strides = [1, 1]} : vector<1x256xf32> to vector<1x64xf32>
    %522 = math.tanh %521 : vector<1x64xf32>
    %523 = vector.extract_strided_slice %508 {offsets = [0, 192], sizes = [1, 64], strides = [1, 1]} : vector<1x256xf32> to vector<1x64xf32>
    %524 = arith.negf %523 : vector<1x64xf32>
    %525 = math.exp %524 : vector<1x64xf32>
    %cst_87 = arith.constant 1.000000e+00 : f32
    %526 = vector.broadcast %cst_87 : f32 to vector<1x64xf32>
    %527 = arith.addf %526, %525 : vector<1x64xf32>
    %528 = arith.divf %526, %527 : vector<1x64xf32>
    %529 = arith.mulf %520, %499 : vector<1x64xf32>
    %530 = arith.mulf %514, %522 : vector<1x64xf32>
    %531 = arith.addf %529, %530 : vector<1x64xf32>
    %532 = math.tanh %531 : vector<1x64xf32>
    %533 = arith.mulf %528, %532 : vector<1x64xf32>
    %534 = vector.extract_strided_slice %533 {offsets = [0, 0], sizes = [1, 32], strides = [1, 1]} : vector<1x64xf32> to vector<1x32xf32>
    %535 = vector.extract_strided_slice %533 {offsets = [0, 32], sizes = [1, 32], strides = [1, 1]} : vector<1x64xf32> to vector<1x32xf32>
    %536 = tpu.concatenate %310, %342, %374, %406, %438, %470, %502, %534 in 0 : vector<1x32xf32>, vector<1x32xf32>, vector<1x32xf32>, vector<1x32xf32>, vector<1x32xf32>, vector<1x32xf32>, vector<1x32xf32>, vector<1x32xf32> -> vector<8x32xf32>
    %537 = tpu.concatenate %535, %503, %471, %439, %407, %375, %343, %311 in 0 : vector<1x32xf32>, vector<1x32xf32>, vector<1x32xf32>, vector<1x32xf32>, vector<1x32xf32>, vector<1x32xf32>, vector<1x32xf32>, vector<1x32xf32> -> vector<8x32xf32>
    %538 = tpu.concatenate %536, %537 in 1 : vector<8x32xf32>, vector<8x32xf32> -> vector<8x64xf32>
    %c0_88 = arith.constant 0 : index
    %c0_89 = arith.constant 0 : index
    %539 = vector.load %arg9[%c0_88, %c0_89] : memref<64x5xf32, #tpu.memory_space<vmem>>, vector<64x5xf32>
    %cst_90 = arith.constant dense<0.000000e+00> : vector<8x5xf32>
    %540 = tpu.matmul %538, %539, %cst_90 {dimension_numbers = #tpu.dot_dimension_numbers<[1], [0], [0], [1], [0, 0, 1, 1], [], []>} : vector<8x64xf32>, vector<64x5xf32>, vector<8x5xf32> -> vector<8x5xf32>
    %c0_91 = arith.constant 0 : index
    %c0_92 = arith.constant 0 : index
    %541 = vector.load %arg10[%c0_91, %c0_92] : memref<1x5xf32, #tpu.memory_space<vmem>>, vector<1x5xf32>
    %542 = vector.broadcast %541 : vector<1x5xf32> to vector<8x5xf32>
    %543 = arith.addf %540, %542 : vector<8x5xf32>
    %c0_93 = arith.constant 0 : index
    %c0_94 = arith.constant 0 : index
    %544 = vector.load %arg13[%c0_93, %c0_94] : memref<8x5xf32, #tpu.memory_space<vmem>>, vector<8x5xf32>
    tpu.vector_store %arg13[%c0_93, %c0_94], %543 {strides = array<i32>} : memref<8x5xf32, #tpu.memory_space<vmem>>, vector<8x5xf32>,
    %c0_95 = arith.constant 0 : index
    %c0_96 = arith.constant 0 : index
    %545 = vector.load %arg11[%c0_95, %c0_96] : memref<5x5xf32, #tpu.memory_space<vmem>>, vector<5x5xf32>
    %546 = tpu.iota {dimensions = array<i32: 0>} : vector<5x5xi32>
    %547 = tpu.iota {dimensions = array<i32: 1>} : vector<5x5xi32>
    %548 = arith.sitofp %546 : vector<5x5xi32> to vector<5x5xf32>
    %549 = arith.cmpi eq, %546, %547 : vector<5x5xi32>
    %550 = arith.extui %549 : vector<5x5xi1> to vector<5x5xi32>
    %551 = arith.sitofp %550 : vector<5x5xi32> to vector<5x5xf32>
    %552 = tpu.iota {dimensions = array<i32: 1>} : vector<1x5xi32>
    %c3_i32 = arith.constant 3 : i32
    %553 = vector.broadcast %c3_i32 : i32 to vector<1x5xi32>
    %554 = arith.cmpi eq, %552, %553 : vector<1x5xi32>
    %cst_97 = arith.constant 0.000000e+00 : f32
    %cst_98 = arith.constant -1.000000e+04 : f32
    %555 = vector.broadcast %cst_97 : f32 to vector<1x5xf32>
    %556 = vector.broadcast %cst_98 : f32 to vector<1x5xf32>
    %557 = arith.select %554, %555, %556 : vector<1x5xi1>, vector<1x5xf32>
    %558 = vector.broadcast %557 : vector<1x5xf32> to vector<5x5xf32>
    %559 = arith.mulf %558, %551 : vector<5x5xf32>
    %cst_99 = arith.constant dense<0.000000e+00> : vector<5xf32>
    %560 = vector.multi_reduction <add>, %559, %cst_99 [1] : vector<5x5xf32> to vector<5xf32>
    %561 = vector.shape_cast %560 : vector<5xf32> to vector<5x1xf32>
    %562 = vector.broadcast %561 : vector<5x1xf32> to vector<5x5xf32>
    %563 = arith.addf %562, %545 : vector<5x5xf32>
    %cst_100 = arith.constant dense<0xFF800000> : vector<5xf32>
    %564 = vector.multi_reduction <maximumf>, %563, %cst_100 [0] : vector<5x5xf32> to vector<5xf32>
    %565 = vector.shape_cast %564 : vector<5xf32> to vector<1x5xf32>
    %566 = vector.broadcast %565 : vector<1x5xf32> to vector<5x5xf32>
    %567 = arith.cmpf oeq, %563, %566 : vector<5x5xf32>
    %cst_101 = arith.constant 5.000000e+00 : f32
    %568 = vector.broadcast %cst_101 : f32 to vector<5x5xf32>
    %569 = arith.select %567, %548, %568 : vector<5x5xi1>, vector<5x5xf32>
    %cst_102 = arith.constant dense<0x7F800000> : vector<5xf32>
    %570 = vector.multi_reduction <minimumf>, %569, %cst_102 [0] : vector<5x5xf32> to vector<5xf32>
    %571 = vector.shape_cast %570 : vector<5xf32> to vector<1x5xf32>
    %572 = arith.fptosi %571 : vector<1x5xf32> to vector<1x5xi32>
    %573 = vector.extract_strided_slice %543 {offsets = [0, 0], sizes = [1, 5], strides = [1, 1]} : vector<8x5xf32> to vector<1x5xf32>
    %574 = arith.addf %565, %573 : vector<1x5xf32>
    %575 = vector.broadcast %574 : vector<1x5xf32> to vector<5x5xf32>
    %576 = arith.mulf %575, %551 : vector<5x5xf32>
    %cst_103 = arith.constant dense<0.000000e+00> : vector<5xf32>
    %577 = vector.multi_reduction <add>, %576, %cst_103 [1] : vector<5x5xf32> to vector<5xf32>
    %578 = vector.shape_cast %577 : vector<5xf32> to vector<5x1xf32>
    %579 = vector.broadcast %578 : vector<5x1xf32> to vector<5x5xf32>
    %580 = arith.addf %579, %545 : vector<5x5xf32>
    %cst_104 = arith.constant dense<0xFF800000> : vector<5xf32>
    %581 = vector.multi_reduction <maximumf>, %580, %cst_104 [0] : vector<5x5xf32> to vector<5xf32>
    %582 = vector.shape_cast %581 : vector<5xf32> to vector<1x5xf32>
    %583 = vector.broadcast %582 : vector<1x5xf32> to vector<5x5xf32>
    %584 = arith.cmpf oeq, %580, %583 : vector<5x5xf32>
    %cst_105 = arith.constant 5.000000e+00 : f32
    %585 = vector.broadcast %cst_105 : f32 to vector<5x5xf32>
    %586 = arith.select %584, %548, %585 : vector<5x5xi1>, vector<5x5xf32>
    %cst_106 = arith.constant dense<0x7F800000> : vector<5xf32>
    %587 = vector.multi_reduction <minimumf>, %586, %cst_106 [0] : vector<5x5xf32> to vector<5xf32>
    %588 = vector.shape_cast %587 : vector<5xf32> to vector<1x5xf32>
    %589 = arith.fptosi %588 : vector<1x5xf32> to vector<1x5xi32>
    %590 = vector.extract_strided_slice %543 {offsets = [1, 0], sizes = [1, 5], strides = [1, 1]} : vector<8x5xf32> to vector<1x5xf32>
    %591 = arith.addf %582, %590 : vector<1x5xf32>
    %592 = vector.broadcast %591 : vector<1x5xf32> to vector<5x5xf32>
    %593 = arith.mulf %592, %551 : vector<5x5xf32>
    %cst_107 = arith.constant dense<0.000000e+00> : vector<5xf32>
    %594 = vector.multi_reduction <add>, %593, %cst_107 [1] : vector<5x5xf32> to vector<5xf32>
    %595 = vector.shape_cast %594 : vector<5xf32> to vector<5x1xf32>
    %596 = vector.broadcast %595 : vector<5x1xf32> to vector<5x5xf32>
    %597 = arith.addf %596, %545 : vector<5x5xf32>
    %cst_108 = arith.constant dense<0xFF800000> : vector<5xf32>
    %598 = vector.multi_reduction <maximumf>, %597, %cst_108 [0] : vector<5x5xf32> to vector<5xf32>
    %599 = vector.shape_cast %598 : vector<5xf32> to vector<1x5xf32>
    %600 = vector.broadcast %599 : vector<1x5xf32> to vector<5x5xf32>
    %601 = arith.cmpf oeq, %597, %600 : vector<5x5xf32>
    %cst_109 = arith.constant 5.000000e+00 : f32
    %602 = vector.broadcast %cst_109 : f32 to vector<5x5xf32>
    %603 = arith.select %601, %548, %602 : vector<5x5xi1>, vector<5x5xf32>
    %cst_110 = arith.constant dense<0x7F800000> : vector<5xf32>
    %604 = vector.multi_reduction <minimumf>, %603, %cst_110 [0] : vector<5x5xf32> to vector<5xf32>
    %605 = vector.shape_cast %604 : vector<5xf32> to vector<1x5xf32>
    %606 = arith.fptosi %605 : vector<1x5xf32> to vector<1x5xi32>
    %607 = vector.extract_strided_slice %543 {offsets = [2, 0], sizes = [1, 5], strides = [1, 1]} : vector<8x5xf32> to vector<1x5xf32>
    %608 = arith.addf %599, %607 : vector<1x5xf32>
    %609 = vector.broadcast %608 : vector<1x5xf32> to vector<5x5xf32>
    %610 = arith.mulf %609, %551 : vector<5x5xf32>
    %cst_111 = arith.constant dense<0.000000e+00> : vector<5xf32>
    %611 = vector.multi_reduction <add>, %610, %cst_111 [1] : vector<5x5xf32> to vector<5xf32>
    %612 = vector.shape_cast %611 : vector<5xf32> to vector<5x1xf32>
    %613 = vector.broadcast %612 : vector<5x1xf32> to vector<5x5xf32>
    %614 = arith.addf %613, %545 : vector<5x5xf32>
    %cst_112 = arith.constant dense<0xFF800000> : vector<5xf32>
    %615 = vector.multi_reduction <maximumf>, %614, %cst_112 [0] : vector<5x5xf32> to vector<5xf32>
    %616 = vector.shape_cast %615 : vector<5xf32> to vector<1x5xf32>
    %617 = vector.broadcast %616 : vector<1x5xf32> to vector<5x5xf32>
    %618 = arith.cmpf oeq, %614, %617 : vector<5x5xf32>
    %cst_113 = arith.constant 5.000000e+00 : f32
    %619 = vector.broadcast %cst_113 : f32 to vector<5x5xf32>
    %620 = arith.select %618, %548, %619 : vector<5x5xi1>, vector<5x5xf32>
    %cst_114 = arith.constant dense<0x7F800000> : vector<5xf32>
    %621 = vector.multi_reduction <minimumf>, %620, %cst_114 [0] : vector<5x5xf32> to vector<5xf32>
    %622 = vector.shape_cast %621 : vector<5xf32> to vector<1x5xf32>
    %623 = arith.fptosi %622 : vector<1x5xf32> to vector<1x5xi32>
    %624 = vector.extract_strided_slice %543 {offsets = [3, 0], sizes = [1, 5], strides = [1, 1]} : vector<8x5xf32> to vector<1x5xf32>
    %625 = arith.addf %616, %624 : vector<1x5xf32>
    %626 = vector.broadcast %625 : vector<1x5xf32> to vector<5x5xf32>
    %627 = arith.mulf %626, %551 : vector<5x5xf32>
    %cst_115 = arith.constant dense<0.000000e+00> : vector<5xf32>
    %628 = vector.multi_reduction <add>, %627, %cst_115 [1] : vector<5x5xf32> to vector<5xf32>
    %629 = vector.shape_cast %628 : vector<5xf32> to vector<5x1xf32>
    %630 = vector.broadcast %629 : vector<5x1xf32> to vector<5x5xf32>
    %631 = arith.addf %630, %545 : vector<5x5xf32>
    %cst_116 = arith.constant dense<0xFF800000> : vector<5xf32>
    %632 = vector.multi_reduction <maximumf>, %631, %cst_116 [0] : vector<5x5xf32> to vector<5xf32>
    %633 = vector.shape_cast %632 : vector<5xf32> to vector<1x5xf32>
    %634 = vector.broadcast %633 : vector<1x5xf32> to vector<5x5xf32>
    %635 = arith.cmpf oeq, %631, %634 : vector<5x5xf32>
    %cst_117 = arith.constant 5.000000e+00 : f32
    %636 = vector.broadcast %cst_117 : f32 to vector<5x5xf32>
    %637 = arith.select %635, %548, %636 : vector<5x5xi1>, vector<5x5xf32>
    %cst_118 = arith.constant dense<0x7F800000> : vector<5xf32>
    %638 = vector.multi_reduction <minimumf>, %637, %cst_118 [0] : vector<5x5xf32> to vector<5xf32>
    %639 = vector.shape_cast %638 : vector<5xf32> to vector<1x5xf32>
    %640 = arith.fptosi %639 : vector<1x5xf32> to vector<1x5xi32>
    %641 = vector.extract_strided_slice %543 {offsets = [4, 0], sizes = [1, 5], strides = [1, 1]} : vector<8x5xf32> to vector<1x5xf32>
    %642 = arith.addf %633, %641 : vector<1x5xf32>
    %643 = vector.broadcast %642 : vector<1x5xf32> to vector<5x5xf32>
    %644 = arith.mulf %643, %551 : vector<5x5xf32>
    %cst_119 = arith.constant dense<0.000000e+00> : vector<5xf32>
    %645 = vector.multi_reduction <add>, %644, %cst_119 [1] : vector<5x5xf32> to vector<5xf32>
    %646 = vector.shape_cast %645 : vector<5xf32> to vector<5x1xf32>
    %647 = vector.broadcast %646 : vector<5x1xf32> to vector<5x5xf32>
    %648 = arith.addf %647, %545 : vector<5x5xf32>
    %cst_120 = arith.constant dense<0xFF800000> : vector<5xf32>
    %649 = vector.multi_reduction <maximumf>, %648, %cst_120 [0] : vector<5x5xf32> to vector<5xf32>
    %650 = vector.shape_cast %649 : vector<5xf32> to vector<1x5xf32>
    %651 = vector.broadcast %650 : vector<1x5xf32> to vector<5x5xf32>
    %652 = arith.cmpf oeq, %648, %651 : vector<5x5xf32>
    %cst_121 = arith.constant 5.000000e+00 : f32
    %653 = vector.broadcast %cst_121 : f32 to vector<5x5xf32>
    %654 = arith.select %652, %548, %653 : vector<5x5xi1>, vector<5x5xf32>
    %cst_122 = arith.constant dense<0x7F800000> : vector<5xf32>
    %655 = vector.multi_reduction <minimumf>, %654, %cst_122 [0] : vector<5x5xf32> to vector<5xf32>
    %656 = vector.shape_cast %655 : vector<5xf32> to vector<1x5xf32>
    %657 = arith.fptosi %656 : vector<1x5xf32> to vector<1x5xi32>
    %658 = vector.extract_strided_slice %543 {offsets = [5, 0], sizes = [1, 5], strides = [1, 1]} : vector<8x5xf32> to vector<1x5xf32>
    %659 = arith.addf %650, %658 : vector<1x5xf32>
    %660 = vector.broadcast %659 : vector<1x5xf32> to vector<5x5xf32>
    %661 = arith.mulf %660, %551 : vector<5x5xf32>
    %cst_123 = arith.constant dense<0.000000e+00> : vector<5xf32>
    %662 = vector.multi_reduction <add>, %661, %cst_123 [1] : vector<5x5xf32> to vector<5xf32>
    %663 = vector.shape_cast %662 : vector<5xf32> to vector<5x1xf32>
    %664 = vector.broadcast %663 : vector<5x1xf32> to vector<5x5xf32>
    %665 = arith.addf %664, %545 : vector<5x5xf32>
    %cst_124 = arith.constant dense<0xFF800000> : vector<5xf32>
    %666 = vector.multi_reduction <maximumf>, %665, %cst_124 [0] : vector<5x5xf32> to vector<5xf32>
    %667 = vector.shape_cast %666 : vector<5xf32> to vector<1x5xf32>
    %668 = vector.broadcast %667 : vector<1x5xf32> to vector<5x5xf32>
    %669 = arith.cmpf oeq, %665, %668 : vector<5x5xf32>
    %cst_125 = arith.constant 5.000000e+00 : f32
    %670 = vector.broadcast %cst_125 : f32 to vector<5x5xf32>
    %671 = arith.select %669, %548, %670 : vector<5x5xi1>, vector<5x5xf32>
    %cst_126 = arith.constant dense<0x7F800000> : vector<5xf32>
    %672 = vector.multi_reduction <minimumf>, %671, %cst_126 [0] : vector<5x5xf32> to vector<5xf32>
    %673 = vector.shape_cast %672 : vector<5xf32> to vector<1x5xf32>
    %674 = arith.fptosi %673 : vector<1x5xf32> to vector<1x5xi32>
    %675 = vector.extract_strided_slice %543 {offsets = [6, 0], sizes = [1, 5], strides = [1, 1]} : vector<8x5xf32> to vector<1x5xf32>
    %676 = arith.addf %667, %675 : vector<1x5xf32>
    %677 = vector.broadcast %676 : vector<1x5xf32> to vector<5x5xf32>
    %678 = arith.mulf %677, %551 : vector<5x5xf32>
    %cst_127 = arith.constant dense<0.000000e+00> : vector<5xf32>
    %679 = vector.multi_reduction <add>, %678, %cst_127 [1] : vector<5x5xf32> to vector<5xf32>
    %680 = vector.shape_cast %679 : vector<5xf32> to vector<5x1xf32>
    %681 = vector.broadcast %680 : vector<5x1xf32> to vector<5x5xf32>
    %682 = arith.addf %681, %545 : vector<5x5xf32>
    %cst_128 = arith.constant dense<0xFF800000> : vector<5xf32>
    %683 = vector.multi_reduction <maximumf>, %682, %cst_128 [0] : vector<5x5xf32> to vector<5xf32>
    %684 = vector.shape_cast %683 : vector<5xf32> to vector<1x5xf32>
    %685 = vector.broadcast %684 : vector<1x5xf32> to vector<5x5xf32>
    %686 = arith.cmpf oeq, %682, %685 : vector<5x5xf32>
    %cst_129 = arith.constant 5.000000e+00 : f32
    %687 = vector.broadcast %cst_129 : f32 to vector<5x5xf32>
    %688 = arith.select %686, %548, %687 : vector<5x5xi1>, vector<5x5xf32>
    %cst_130 = arith.constant dense<0x7F800000> : vector<5xf32>
    %689 = vector.multi_reduction <minimumf>, %688, %cst_130 [0] : vector<5x5xf32> to vector<5xf32>
    %690 = vector.shape_cast %689 : vector<5xf32> to vector<1x5xf32>
    %691 = arith.fptosi %690 : vector<1x5xf32> to vector<1x5xi32>
    %692 = vector.extract_strided_slice %543 {offsets = [7, 0], sizes = [1, 5], strides = [1, 1]} : vector<8x5xf32> to vector<1x5xf32>
    %693 = arith.addf %684, %692 : vector<1x5xf32>
    %694 = tpu.concatenate %572, %589, %606, %623, %640, %657, %674, %691 in 0 : vector<1x5xi32>, vector<1x5xi32>, vector<1x5xi32>, vector<1x5xi32>, vector<1x5xi32>, vector<1x5xi32>, vector<1x5xi32>, vector<1x5xi32> -> vector<8x5xi32>
    %c0_131 = arith.constant 0 : index
    %c0_132 = arith.constant 0 : index
    %695 = vector.load %arg14[%c0_131, %c0_132] : memref<8x5xi32, #tpu.memory_space<vmem>>, vector<8x5xi32>
    tpu.vector_store %arg14[%c0_131, %c0_132], %694 {strides = array<i32>} : memref<8x5xi32, #tpu.memory_space<vmem>>, vector<8x5xi32>,
    %c0_133 = arith.constant 0 : index
    %c0_134 = arith.constant 0 : index
    %696 = vector.load %arg12[%c0_133, %c0_134] : memref<1x5xf32, #tpu.memory_space<vmem>>, vector<1x5xf32>
    %697 = arith.addf %693, %696 : vector<1x5xf32>
    %c0_135 = arith.constant 0 : index
    %c0_136 = arith.constant 0 : index
    %698 = vector.load %arg15[%c0_135, %c0_136] : memref<1x5xf32, #tpu.memory_space<vmem>>, vector<1x5xf32>
    tpu.vector_store %arg15[%c0_135, %c0_136], %697 {strides = array<i32>} : memref<1x5xf32, #tpu.memory_space<vmem>>, vector<1x5xf32>,
    return
  }
}

</mosaic_0001>

<llo_original>
// kernel: bilstm_crf_forward.1
$region0: #{bilstm_crf_forward.1}
  #allocation0 [shape = 'u32[]', space=smem, size = 0x4, offset = 0x4, fixed_abs, tag = 'smem constant byte address 0x4 - core index']
  #allocation1 [shape = 'u32[144,128]{1,0:T(1,128)}', space=vmem, size = 0x12000, scoped, tag = 'internal scratch']
  %s0 = inlined_call_operand.vmem [shape: f32[8,16], index: 0, kind: input, shape index: {}]
  %s1 = inlined_call_operand.vmem [shape: f32[16,256], index: 1, kind: input, shape index: {}]
  %s2 = inlined_call_operand.vmem [shape: f32[16,256], index: 2, kind: input, shape index: {}]
  %s3 = inlined_call_operand.hbm [shape: f32[64,256], index: 3, kind: input, shape index: {}]
  %s4 = inlined_call_operand.vmem [shape: f32[1,256], index: 4, kind: input, shape index: {}]
  %s5 = inlined_call_operand.hbm [shape: f32[64,256], index: 5, kind: input, shape index: {}]
  %s6 = inlined_call_operand.hbm [shape: f32[64,256], index: 6, kind: input, shape index: {}]
  %s7 = inlined_call_operand.hbm [shape: f32[64,256], index: 7, kind: input, shape index: {}]
  %s8 = inlined_call_operand.vmem [shape: f32[1,256], index: 8, kind: input, shape index: {}]
  %s9 = inlined_call_operand.vmem [shape: f32[64,5], index: 9, kind: input, shape index: {}]
  %s10 = inlined_call_operand.vmem [shape: f32[1,5], index: 10, kind: input, shape index: {}]
  %s11 = inlined_call_operand.vmem [shape: f32[5,5], index: 11, kind: input, shape index: {}]
  %s12 = inlined_call_operand.vmem [shape: f32[1,5], index: 12, kind: input, shape index: {}]
  %s13 = inlined_call_operand.hbm [shape: f32[8,5], index: 13, kind: output, shape index: {0}]
  %s14 = inlined_call_operand.hbm [shape: s32[8,5], index: 14, kind: output, shape index: {1}]
  %s15 = inlined_call_operand.hbm [shape: f32[1,5], index: 15, kind: output, shape index: {2}]
  %16 = xla_tuple %s13, %s14, %s15
  %s17 = sld [smem:[#allocation0]]
  $region94: #{bilstm_crf_forward.1} parent=0
    _
  %s19 = ssub.s32 1, %s17
  %s20 = scalar_select 0, %s19, %s17
  $region1: #{bilstm_crf_forward.1} parent=0
    #allocation2 [shape = 'u8[65536]{0}', space=vmem, size = 0x10000, scoped, tag = 'input window, operand 3, single buffered']
    #allocation3 [shape = 's32[1]{0}', space=sflag, size = 0x4, scoped, tag = 'scoped memory for bilstm_crf_forward.1']
    #allocation4 [shape = 's32[1]{0}', space=sflag, size = 0x4, scoped, tag = 'scoped memory for bilstm_crf_forward.1']
    #allocation5 [shape = 'u8[65536]{0}', space=vmem, size = 0x10000, scoped, tag = 'input window, operand 5, single buffered']
    #allocation6 [shape = 's32[1]{0}', space=sflag, size = 0x4, scoped, tag = 'scoped memory for bilstm_crf_forward.1']
    #allocation7 [shape = 'u8[65536]{0}', space=vmem, size = 0x10000, scoped, tag = 'input window, operand 6, single buffered']
    #allocation8 [shape = 'u8[65536]{0}', space=vmem, size = 0x10000, scoped, tag = 'input window, operand 7, single buffered']
    #allocation9 [shape = 's32[1]{0}', space=sflag, size = 0x4, scoped, tag = 'scoped memory for bilstm_crf_forward.1']
    #allocation10 [shape = 'u8[4096]{0}', space=vmem, size = 0x1000, scoped, tag = 'output window, operand 0, single buffered']
    #allocation11 [shape = 'u8[4096]{0}', space=vmem, size = 0x1000, scoped, tag = 'output window, operand 1, single buffered']
    #allocation12 [shape = 's32[1]{0}', space=sflag, size = 0x4, scoped, tag = 'scoped memory for bilstm_crf_forward.1']
    #allocation13 [shape = 'u8[512]{0}', space=vmem, size = 0x400, scoped, tag = 'output window, operand 2, single buffered']
    %21 = vsyncpa [#allocation3], 0
    %22 = vsyncpa [#allocation6], 0
    %23 = vsyncpa [#allocation9], 0
    %24 = vsyncpa [#allocation4], 0
    %25 = vsyncpa [#allocation12], 0
    // Predicated region
    $region2: #{bilstm_crf_forward.1} parent=1 // pred_check
      _
    $region3: #{bilstm_crf_forward.1} parent=1 // pred_check_branch
      %27 = sbr.rel (0) target = $region5
    $region4: #{bilstm_crf_forward.1} parent=1 // pred_region
      _
    $region5: #{bilstm_crf_forward.1} parent=1 // pred_fallthru
      _
    // Predicated region
    $region6: #{bilstm_crf_forward.1} parent=1 // pred_check
      _
    $region7: #{bilstm_crf_forward.1} parent=1 // pred_check_branch
      %29 = sbr.rel (0) target = $region9
    $region8: #{bilstm_crf_forward.1} parent=1 // pred_region
      _
    $region9: #{bilstm_crf_forward.1} parent=1 // pred_fallthru
      _
    // Predicated region
    $region10: #{bilstm_crf_forward.1} parent=1 // pred_check
      _
    $region11: #{bilstm_crf_forward.1} parent=1 // pred_check_branch
      %31 = sbr.rel (0) target = $region13
    $region12: #{bilstm_crf_forward.1} parent=1 // pred_region
      _
    $region13: #{bilstm_crf_forward.1} parent=1 // pred_fallthru
      _
    // Predicated region
    $region14: #{bilstm_crf_forward.1} parent=1 // pred_check
      _
    $region15: #{bilstm_crf_forward.1} parent=1 // pred_check_branch
      %33 = sbr.rel (0) target = $region17
    $region16: #{bilstm_crf_forward.1} parent=1 // pred_region
      %s35 = ssub.s32 2048, 2048
      %36 = vsyncadd [#allocation3], %s35
      %s37 = sshll.u32 [#allocation2], 4
      %s38 = int_to_ptr.vmem [resolvable:$true] %s37
      %43 = dma.hbm_to_vmem [thread:$0]  %s3, 2048, %s38, [#allocation3], 256, 256, 16
    $region17: #{bilstm_crf_forward.1} parent=1 // pred_fallthru
      _
    // Predicated region
    $region18: #{bilstm_crf_forward.1} parent=1 // pred_check
      _
    $region19: #{bilstm_crf_forward.1} parent=1 // pred_check_branch
      %45 = sbr.rel (0) target = $region21
    $region20: #{bilstm_crf_forward.1} parent=1 // pred_region
      _
    $region21: #{bilstm_crf_forward.1} parent=1 // pred_fallthru
      _
    // Predicated region
    $region22: #{bilstm_crf_forward.1} parent=1 // pred_check
      _
    $region23: #{bilstm_crf_forward.1} parent=1 // pred_check_branch
      %47 = sbr.rel (0) target = $region25
    $region24: #{bilstm_crf_forward.1} parent=1 // pred_region
      %s49 = ssub.s32 2048, 2048
      %50 = vsyncadd [#allocation6], %s49
      %s51 = sshll.u32 [#allocation5], 4
      %s52 = int_to_ptr.vmem [resolvable:$true] %s51
      %57 = dma.hbm_to_vmem [thread:$0]  %s5, 2048, %s52, [#allocation6], 256, 256, 16
    $region25: #{bilstm_crf_forward.1} parent=1 // pred_fallthru
      _
    // Predicated region
    $region26: #{bilstm_crf_forward.1} parent=1 // pred_check
      _
    $region27: #{bilstm_crf_forward.1} parent=1 // pred_check_branch
      %59 = sbr.rel (0) target = $region29
    $region28: #{bilstm_crf_forward.1} parent=1 // pred_region
      %s61 = ssub.s32 2048, 2048
      %62 = vsyncadd [#allocation6], %s61
      %s63 = sshll.u32 [#allocation7], 4
      %s64 = int_to_ptr.vmem [resolvable:$true] %s63
      %69 = dma.hbm_to_vmem [thread:$0]  %s6, 2048, %s64, [#allocation6], 256, 256, 16
    $region29: #{bilstm_crf_forward.1} parent=1 // pred_fallthru
      _
    // Predicated region
    $region30: #{bilstm_crf_forward.1} parent=1 // pred_check
      _
    $region31: #{bilstm_crf_forward.1} parent=1 // pred_check_branch
      %71 = sbr.rel (0) target = $region33
    $region32: #{bilstm_crf_forward.1} parent=1 // pred_region
      %s73 = ssub.s32 2048, 2048
      %74 = vsyncadd [#allocation9], %s73
      %s75 = sshll.u32 [#allocation8], 4
      %s76 = int_to_ptr.vmem [resolvable:$true] %s75
      %81 = dma.hbm_to_vmem [thread:$0]  %s7, 2048, %s76, [#allocation9], 256, 256, 16
    $region33: #{bilstm_crf_forward.1} parent=1 // pred_fallthru
      _
    // Predicated region
    $region34: #{bilstm_crf_forward.1} parent=1 // pred_check
      _
    $region35: #{bilstm_crf_forward.1} parent=1 // pred_check_branch
      %83 = sbr.rel (0) target = $region37
    $region36: #{bilstm_crf_forward.1} parent=1 // pred_region
      _
    $region37: #{bilstm_crf_forward.1} parent=1 // pred_fallthru
      _
    // Predicated region
    $region38: #{bilstm_crf_forward.1} parent=1 // pred_check
      _
    $region39: #{bilstm_crf_forward.1} parent=1 // pred_check_branch
      %85 = sbr.rel (0) target = $region41
    $region40: #{bilstm_crf_forward.1} parent=1 // pred_region
      _
    $region41: #{bilstm_crf_forward.1} parent=1 // pred_fallthru
      _
    // Predicated region
    $region42: #{bilstm_crf_forward.1} parent=1 // pred_check
      _
    $region43: #{bilstm_crf_forward.1} parent=1 // pred_check_branch
      %87 = sbr.rel (0) target = $region45
    $region44: #{bilstm_crf_forward.1} parent=1 // pred_region
      _
    $region45: #{bilstm_crf_forward.1} parent=1 // pred_fallthru
      _
    // Predicated region
    $region46: #{bilstm_crf_forward.1} parent=1 // pred_check
      _
    $region47: #{bilstm_crf_forward.1} parent=1 // pred_check_branch
      %89 = sbr.rel (0) target = $region49
    $region48: #{bilstm_crf_forward.1} parent=1 // pred_region
      _
    $region49: #{bilstm_crf_forward.1} parent=1 // pred_fallthru
      _
    // Predicated region
    $region50: #{bilstm_crf_forward.1} parent=1 // pred_check
      _
    $region51: #{bilstm_crf_forward.1} parent=1 // pred_check_branch
      %91 = sbr.rel (0) target = $region53
    $region52: #{bilstm_crf_forward.1} parent=1 // pred_region
      _
    $region53: #{bilstm_crf_forward.1} parent=1 // pred_fallthru
      _
    // Predicated region
    $region54: #{bilstm_crf_forward.1} parent=1 // pred_check
      _
    $region55: #{bilstm_crf_forward.1} parent=1 // pred_check_branch
      %93 = sbr.rel (0) target = $region57
    $region56: #{bilstm_crf_forward.1} parent=1 // pred_region
      %94 = dma.done [#allocation3], 2048
    $region57: #{bilstm_crf_forward.1} parent=1 // pred_fallthru
      _
    // Predicated region
    $region58: #{bilstm_crf_forward.1} parent=1 // pred_check
      _
    $region59: #{bilstm_crf_forward.1} parent=1 // pred_check_branch
      %96 = sbr.rel (0) target = $region61
    $region60: #{bilstm_crf_forward.1} parent=1 // pred_region
      %97 = dma.done [#allocation6], 2048
    $region61: #{bilstm_crf_forward.1} parent=1 // pred_fallthru
      _
    // Predicated region
    $region62: #{bilstm_crf_forward.1} parent=1 // pred_check
      _
    $region63: #{bilstm_crf_forward.1} parent=1 // pred_check_branch
      %99 = sbr.rel (0) target = $region65
    $region64: #{bilstm_crf_forward.1} parent=1 // pred_region
      %100 = dma.done [#allocation6], 2048
    $region65: #{bilstm_crf_forward.1} parent=1 // pred_fallthru
      _
    // Predicated region
    $region66: #{bilstm_crf_forward.1} parent=1 // pred_check
      _
    $region67: #{bilstm_crf_forward.1} parent=1 // pred_check_branch
      %102 = sbr.rel (0) target = $region69
    $region68: #{bilstm_crf_forward.1} parent=1 // pred_region
      %103 = dma.done [#allocation9], 2048
    $region69: #{bilstm_crf_forward.1} parent=1 // pred_fallthru
      _
    %v104 = vld [vmem:[%s0] sm:$0xff]
    %v105 = vld [vmem:[%s1] sm:$0xff]
    %v106 = vld [vmem:[%s1 + $0x8] sm:$0xff]
    %v107 = vld [vmem:[%s1 + $0x10] sm:$0xff]
    %v108 = vld [vmem:[%s1 + $0x18] sm:$0xff]
    %v109 = vld [vmem:[%s2] sm:$0xff]
    %v110 = vld [vmem:[%s2 + $0x8] sm:$0xff]
    %v111 = vld [vmem:[%s2 + $0x10] sm:$0xff]
    %v112 = vld [vmem:[%s2 + $0x18] sm:$0xff]
    %v113 = vld [vmem:[#allocation2] sm:$0xff]
    %v114 = vld [vmem:[#allocation2 + $0x8] sm:$0xff]
    %v115 = vld [vmem:[#allocation2 + $0x10] sm:$0xff]
    %v116 = vld [vmem:[#allocation2 + $0x18] sm:$0xff]
    %v117 = vld [vmem:[#allocation2 + $0x20] sm:$0xff]
    %v118 = vld [vmem:[#allocation2 + $0x28] sm:$0xff]
    %v119 = vld [vmem:[#allocation2 + $0x30] sm:$0xff]
    %v120 = vld [vmem:[#allocation2 + $0x38] sm:$0xff]
    %v121 = vld [vmem:[#allocation2 + $0x40] sm:$0xff]
    %v122 = vld [vmem:[#allocation2 + $0x48] sm:$0xff]
    %v123 = vld [vmem:[#allocation2 + $0x50] sm:$0xff]
    %v124 = vld [vmem:[#allocation2 + $0x58] sm:$0xff]
    %v125 = vld [vmem:[#allocation2 + $0x60] sm:$0xff]
    %v126 = vld [vmem:[#allocation2 + $0x68] sm:$0xff]
    %v127 = vld [vmem:[#allocation2 + $0x70] sm:$0xff]
    %v128 = vld [vmem:[#allocation2 + $0x78] sm:$0xff]
    %v129 = vld [vmem:[%s4] sm:$0x3]
    %v131 = vlaneseq
    %v132 = vshrl.u32 %v131, 7
    %v133 = vsub.s32 0, %v132
    %v134 = vrot.slane %v129, %v133
    %v135 = vlaneseq
    %v136 = vshrl.u32 %v135, 7
    %v137 = vsub.s32 1, %v136
    %v138 = vrot.slane %v129, %v137
    %vm141 = vcmask 130048
    %v143 = vsel %vm141, %v104, 0
    %145 = vmatprep.subr.mxu0 %v106
    %146 = vmatpush1.msra.mxu0 %v105
    %147 = vmatprep.subr.mxu0 %v108
    %148 = vmatpush1.msra.mxu0 %v107
    %149 = vmatprep.subr.mxu0 0.0
    %150 = vmatpush1.msra.mxu0 0.0
    %151 = vmatprep.subr.mxu0 0.0
    %152 = vmatpush1.msra.mxu0 0.0
    %153 = vmatprep.subr.mxu0 0.0
    %154 = vmatpush1.msra.mxu0 0.0
    %155 = vmatprep.subr.mxu0 0.0
    %156 = vmatpush1.msra.mxu0 0.0
    %157 = vmatprep.subr.mxu0 0.0
    %158 = vmatpush1.msra.mxu0 0.0
    %159 = vmatprep.subr.mxu0 0.0
    %160 = vmatpush1.msra.mxu0 0.0
    %161 = vmatprep.subr.mxu0 0.0
    %162 = vmatpush1.msra.mxu0 0.0
    %163 = vmatprep.subr.mxu0 0.0
    %164 = vmatpush1.msra.mxu0 0.0
    %165 = vmatprep.subr.mxu0 0.0
    %166 = vmatpush1.msra.mxu0 0.0
    %167 = vmatprep.subr.mxu0 0.0
    %168 = vmatpush1.msra.mxu0 0.0
    %169 = vmatprep.subr.mxu0 0.0
    %170 = vmatpush1.msra.mxu0 0.0
    %171 = vmatprep.subr.mxu0 0.0
    %172 = vmatpush1.msra.mxu0 0.0
    %173 = vmatprep.subr.mxu0 0.0
    %174 = vmatpush1.msra.mxu0 0.0
    %175 = vmatprep.subr.mxu0 0.0
    %176 = vmatpush1.msra.mxu0 0.0
    %177 = vmatprep.subr.mxu0 0.0
    %178 = vmatpush1.msra.mxu0 0.0
    %179 = vmatprep.subr.mxu0 0.0
    %180 = vmatpush1.msra.mxu0 0.0
    %181 = vmatprep.subr.mxu0 0.0
    %182 = vmatpush1.msra.mxu0 0.0
    %183 = vmatprep.subr.mxu0 0.0
    %184 = vmatpush1.msra.mxu0 0.0
    %185 = vmatprep.subr.mxu0 0.0
    %186 = vmatpush1.msra.mxu0 0.0
    %187 = vmatprep.subr.mxu0 0.0
    %188 = vmatpush1.msra.mxu0 0.0
    %189 = vmatprep.subr.mxu0 0.0
    %190 = vmatpush1.msra.mxu0 0.0
    %191 = vmatprep.subr.mxu0 0.0
    %192 = vmatpush1.msra.mxu0 0.0
    %193 = vmatprep.subr.mxu0 0.0
    %194 = vmatpush1.msra.mxu0 0.0
    %195 = vmatprep.subr.mxu0 0.0
    %196 = vmatpush1.msra.mxu0 0.0
    %197 = vmatprep.subr.mxu0 0.0
    %198 = vmatpush1.msra.mxu0 0.0
    %199 = vmatprep.subr.mxu0 0.0
    %200 = vmatpush1.msra.mxu0 0.0
    %201 = vmatprep.subr.mxu0 0.0
    %202 = vmatpush1.msra.mxu0 0.0
    %203 = vmatprep.subr.mxu0 0.0
    %204 = vmatpush1.msra.mxu0 0.0
    %205 = vmatprep.subr.mxu0 0.0
    %206 = vmatpush1.msra.mxu0 0.0
    %207 = vmatprep.subr.mxu0 0.0
    %208 = vmatpush1.msra.mxu0 0.0
    %209 = vmatprep.mubr.f32.mxu0 0.0
    %210 = vmatmul.mubr.f32.gmra.mrb[0].mxu0 %v143
    %v211 = vpop.f32.mrb[0].mxu0
    %v212 = vadd.f32 %v134, %v211
    %v213 = vpop.f32.mrb[0].mxu0
    %v214 = vadd.f32 %v138, %v213
    %215 = vdwg.mxu0
    %216 = vmatprep.subr.mxu0 %v110
    %217 = vmatpush1.msra.mxu0 %v109
    %218 = vmatprep.subr.mxu0 %v112
    %219 = vmatpush1.msra.mxu0 %v111
    %220 = vmatprep.subr.mxu0 0.0
    %221 = vmatpush1.msra.mxu0 0.0
    %222 = vmatprep.subr.mxu0 0.0
    %223 = vmatpush1.msra.mxu0 0.0
    %224 = vmatprep.subr.mxu0 0.0
    %225 = vmatpush1.msra.mxu0 0.0
    %226 = vmatprep.subr.mxu0 0.0
    %227 = vmatpush1.msra.mxu0 0.0
    %228 = vmatprep.subr.mxu0 0.0
    %229 = vmatpush1.msra.mxu0 0.0
    %230 = vmatprep.subr.mxu0 0.0
    %231 = vmatpush1.msra.mxu0 0.0
    %232 = vmatprep.subr.mxu0 0.0
    %233 = vmatpush1.msra.mxu0 0.0
    %234 = vmatprep.subr.mxu0 0.0
    %235 = vmatpush1.msra.mxu0 0.0
    %236 = vmatprep.subr.mxu0 0.0
    %237 = vmatpush1.msra.mxu0 0.0
    %238 = vmatprep.subr.mxu0 0.0
    %239 = vmatpush1.msra.mxu0 0.0
    %240 = vmatprep.subr.mxu0 0.0
    %241 = vmatpush1.msra.mxu0 0.0
    %242 = vmatprep.subr.mxu0 0.0
    %243 = vmatpush1.msra.mxu0 0.0
    %244 = vmatprep.subr.mxu0 0.0
    %245 = vmatpush1.msra.mxu0 0.0
    %246 = vmatprep.subr.mxu0 0.0
    %247 = vmatpush1.msra.mxu0 0.0
    %248 = vmatprep.subr.mxu0 0.0
    %249 = vmatpush1.msra.mxu0 0.0
    %250 = vmatprep.subr.mxu0 0.0
    %251 = vmatpush1.msra.mxu0 0.0
    %252 = vmatprep.subr.mxu0 0.0
    %253 = vmatpush1.msra.mxu0 0.0
    %254 = vmatprep.subr.mxu0 0.0
    %255 = vmatpush1.msra.mxu0 0.0
    %256 = vmatprep.subr.mxu0 0.0
    %257 = vmatpush1.msra.mxu0 0.0
    %258 = vmatprep.subr.mxu0 0.0
    %259 = vmatpush1.msra.mxu0 0.0
    %260 = vmatprep.subr.mxu0 0.0
    %261 = vmatpush1.msra.mxu0 0.0
    %262 = vmatprep.subr.mxu0 0.0
    %263 = vmatpush1.msra.mxu0 0.0
    %264 = vmatprep.subr.mxu0 0.0
    %265 = vmatpush1.msra.mxu0 0.0
    %266 = vmatprep.subr.mxu0 0.0
    %267 = vmatpush1.msra.mxu0 0.0
    %268 = vmatprep.subr.mxu0 0.0
    %269 = vmatpush1.msra.mxu0 0.0
    %270 = vmatprep.subr.mxu0 0.0
    %271 = vmatpush1.msra.mxu0 0.0
    %272 = vmatprep.subr.mxu0 0.0
    %273 = vmatpush1.msra.mxu0 0.0
    %274 = vmatprep.subr.mxu0 0.0
    %275 = vmatpush1.msra.mxu0 0.0
    %276 = vmatprep.subr.mxu0 0.0
    %277 = vmatpush1.msra.mxu0 0.0
    %278 = vmatprep.subr.mxu0 0.0
    %279 = vmatpush1.msra.mxu0 0.0
    %280 = vmatprep.mubr.f32.mxu0 0.0
    %281 = vmatmul.mubr.f32.gmra.mrb[0].mxu0 %v143
    %v282 = vpop.f32.mrb[0].mxu0
    %v283 = vadd.f32 0.0, %v282
    %v284 = vpop.f32.mrb[0].mxu0
    %v285 = vadd.f32 0.0, %v284
    %286 = vdwg.mxu0
    %v289 = vrot.slane %v283, 7
    %v290 = vrot.slane %v285, 7
    %v293 = vadd.f32 %v212, %v289
    %v294 = vadd.f32 %v214, %v290
    %vm295 = vcmask 523264
    %v297 = vsel %vm295, 0.0, 0
    %299 = vmatprep.subr.mxu0 %v114
    %300 = vmatpush1.msra.mxu0 %v113
    %301 = vmatprep.subr.mxu0 %v116
    %302 = vmatpush1.msra.mxu0 %v115
    %303 = vmatprep.subr.mxu0 %v118
    %304 = vmatpush1.msra.mxu0 %v117
    %305 = vmatprep.subr.mxu0 %v120
    %306 = vmatpush1.msra.mxu0 %v119
    %307 = vmatprep.subr.mxu0 %v122
    %308 = vmatpush1.msra.mxu0 %v121
    %309 = vmatprep.subr.mxu0 %v124
    %310 = vmatpush1.msra.mxu0 %v123
    %311 = vmatprep.subr.mxu0 %v126
    %312 = vmatpush1.msra.mxu0 %v125
    %313 = vmatprep.subr.mxu0 %v128
    %314 = vmatpush1.msra.mxu0 %v127
    %315 = vmatprep.subr.mxu0 0.0
    %316 = vmatpush1.msra.mxu0 0.0
    %317 = vmatprep.subr.mxu0 0.0
    %318 = vmatpush1.msra.mxu0 0.0
    %319 = vmatprep.subr.mxu0 0.0
    %320 = vmatpush1.msra.mxu0 0.0
    %321 = vmatprep.subr.mxu0 0.0
    %322 = vmatpush1.msra.mxu0 0.0
    %323 = vmatprep.subr.mxu0 0.0
    %324 = vmatpush1.msra.mxu0 0.0
    %325 = vmatprep.subr.mxu0 0.0
    %326 = vmatpush1.msra.mxu0 0.0
    %327 = vmatprep.subr.mxu0 0.0
    %328 = vmatpush1.msra.mxu0 0.0
    %329 = vmatprep.subr.mxu0 0.0
    %330 = vmatpush1.msra.mxu0 0.0
    %331 = vmatprep.subr.mxu0 0.0
    %332 = vmatpush1.msra.mxu0 0.0
    %333 = vmatprep.subr.mxu0 0.0
    %334 = vmatpush1.msra.mxu0 0.0
    %335 = vmatprep.subr.mxu0 0.0
    %336 = vmatpush1.msra.mxu0 0.0
    %337 = vmatprep.subr.mxu0 0.0
    %338 = vmatpush1.msra.mxu0 0.0
    %339 = vmatprep.subr.mxu0 0.0
    %340 = vmatpush1.msra.mxu0 0.0
    %341 = vmatprep.subr.mxu0 0.0
    %342 = vmatpush1.msra.mxu0 0.0
    %343 = vmatprep.subr.mxu0 0.0
    %344 = vmatpush1.msra.mxu0 0.0
    %345 = vmatprep.subr.mxu0 0.0
    %346 = vmatpush1.msra.mxu0 0.0
    %347 = vmatprep.subr.mxu0 0.0
    %348 = vmatpush1.msra.mxu0 0.0
    %349 = vmatprep.subr.mxu0 0.0
    %350 = vmatpush1.msra.mxu0 0.0
    %351 = vmatprep.subr.mxu0 0.0
    %352 = vmatpush1.msra.mxu0 0.0
    %353 = vmatprep.subr.mxu0 0.0
    %354 = vmatpush1.msra.mxu0 0.0
    %355 = vmatprep.subr.mxu0 0.0
    %356 = vmatpush1.msra.mxu0 0.0
    %357 = vmatprep.subr.mxu0 0.0
    %358 = vmatpush1.msra.mxu0 0.0
    %359 = vmatprep.subr.mxu0 0.0
    %360 = vmatpush1.msra.mxu0 0.0
    %361 = vmatprep.subr.mxu0 0.0
    %362 = vmatpush1.msra.mxu0 0.0
    %363 = vmatprep.mubr.f32.mxu0 0.0
    %364 = vmatmul.mubr.f32.gmra.mrb[0].mxu0 %v297
    %v365 = vpop.f32.mrb[0].mxu0
    %v366 = vadd.f32 0.0, %v365
    %v367 = vpop.f32.mrb[0].mxu0
    %v368 = vadd.f32 0.0, %v367
    %369 = vdwg.mxu0
    %v370 = vadd.f32 %v293, %v366
    %v371 = vadd.f32 %v294, %v368
    %v372 = vxor.u32 %v370, 2147483648
    %v373 = vmul.f32 %v372, 1.442695
    %v374 = vpow.pop %v373
    %v375 = vadd.f32 %v374, 1.0
    %v376 = vrcp.pop %v375
    %v377 = vmul.f32 1.0, %v376
    %v378 = vtanh.pop %v371
    %v379 = vxor.u32 %v371, 2147483648
    %v380 = vmul.f32 %v379, 1.442695
    %v381 = vpow.pop %v380
    %v382 = vadd.f32 %v381, 1.0
    %v383 = vrcp.pop %v382
    %v384 = vmul.f32 1.0, %v383
    %v385 = vmul.f32 %v377, 0.0
    %v386 = vmul.f32 %v377, %v378
    %388 = vrot.lane.b32.xlu0 %v386, 64
    %v389 = vpop.permute.xlu0 %388
    %v391 = vadd.f32 %v385, %v389
    %v392 = vtanh.pop %v391
    %v393 = vmul.f32 %v384, %v392
    %v394 = vrot.slane %v283, 5
    %v395 = vrot.slane %v285, 5
    %v398 = vadd.f32 %v212, %v394
    %v399 = vadd.f32 %v214, %v395
    %401 = vrot.lane.b32.xlu0 %v393, 64
    %v402 = vpop.permute.xlu0 %401
    %v403 = vsel %vm295, %v402, 0
    %405 = vmatprep.subr.mxu0 %v114
    %406 = vmatpush1.msra.mxu0 %v113
    %407 = vmatprep.subr.mxu0 %v116
    %408 = vmatpush1.msra.mxu0 %v115
    %409 = vmatprep.subr.mxu0 %v118
    %410 = vmatpush1.msra.mxu0 %v117
    %411 = vmatprep.subr.mxu0 %v120
    %412 = vmatpush1.msra.mxu0 %v119
    %413 = vmatprep.subr.mxu0 %v122
    %414 = vmatpush1.msra.mxu0 %v121
    %415 = vmatprep.subr.mxu0 %v124
    %416 = vmatpush1.msra.mxu0 %v123
    %417 = vmatprep.subr.mxu0 %v126
    %418 = vmatpush1.msra.mxu0 %v125
    %419 = vmatprep.subr.mxu0 %v128
    %420 = vmatpush1.msra.mxu0 %v127
    %421 = vmatprep.subr.mxu0 0.0
    %422 = vmatpush1.msra.mxu0 0.0
    %423 = vmatprep.subr.mxu0 0.0
    %424 = vmatpush1.msra.mxu0 0.0
    %425 = vmatprep.subr.mxu0 0.0
    %426 = vmatpush1.msra.mxu0 0.0
    %427 = vmatprep.subr.mxu0 0.0
    %428 = vmatpush1.msra.mxu0 0.0
    %429 = vmatprep.subr.mxu0 0.0
    %430 = vmatpush1.msra.mxu0 0.0
    %431 = vmatprep.subr.mxu0 0.0
    %432 = vmatpush1.msra.mxu0 0.0
    %433 = vmatprep.subr.mxu0 0.0
    %434 = vmatpush1.msra.mxu0 0.0
    %435 = vmatprep.subr.mxu0 0.0
    %436 = vmatpush1.msra.mxu0 0.0
    %437 = vmatprep.subr.mxu0 0.0
    %438 = vmatpush1.msra.mxu0 0.0
    %439 = vmatprep.subr.mxu0 0.0
    %440 = vmatpush1.msra.mxu0 0.0
    %441 = vmatprep.subr.mxu0 0.0
    %442 = vmatpush1.msra.mxu0 0.0
    %443 = vmatprep.subr.mxu0 0.0
    %444 = vmatpush1.msra.mxu0 0.0
    %445 = vmatprep.subr.mxu0 0.0
    %446 = vmatpush1.msra.mxu0 0.0
    %447 = vmatprep.subr.mxu0 0.0
    %448 = vmatpush1.msra.mxu0 0.0
    %449 = vmatprep.subr.mxu0 0.0
    %450 = vmatpush1.msra.mxu0 0.0
    %451 = vmatprep.subr.mxu0 0.0
    %452 = vmatpush1.msra.mxu0 0.0
    %453 = vmatprep.subr.mxu0 0.0
    %454 = vmatpush1.msra.mxu0 0.0
    %455 = vmatprep.subr.mxu0 0.0
    %456 = vmatpush1.msra.mxu0 0.0
    %457 = vmatprep.subr.mxu0 0.0
    %458 = vmatpush1.msra.mxu0 0.0
    %459 = vmatprep.subr.mxu0 0.0
    %460 = vmatpush1.msra.mxu0 0.0
    %461 = vmatprep.subr.mxu0 0.0
    %462 = vmatpush1.msra.mxu0 0.0
    %463 = vmatprep.subr.mxu0 0.0
    %464 = vmatpush1.msra.mxu0 0.0
    %465 = vmatprep.subr.mxu0 0.0
    %466 = vmatpush1.msra.mxu0 0.0
    %467 = vmatprep.subr.mxu0 0.0
    %468 = vmatpush1.msra.mxu0 0.0
    %469 = vmatprep.mubr.f32.mxu0 0.0
    %470 = vmatmul.mubr.f32.gmra.mrb[0].mxu0 %v403
    %v471 = vpop.f32.mrb[0].mxu0
    %v472 = vadd.f32 0.0, %v471
    %v473 = vpop.f32.mrb[0].mxu0
    %v474 = vadd.f32 0.0, %v473
    %475 = vdwg.mxu0
    %v478 = vrot.slane %v472, 7
    %v479 = vrot.slane %v474, 7
    %v482 = vadd.f32 %v398, %v478
    %v483 = vadd.f32 %v399, %v479
    %v484 = vxor.u32 %v482, 2147483648
    %v485 = vmul.f32 %v484, 1.442695
    %v486 = vpow.pop %v485
    %v487 = vadd.f32 %v486, 1.0
    %v488 = vrcp.pop %v487
    %v489 = vmul.f32 1.0, %v488
    %v490 = vtanh.pop %v483
    %v491 = vxor.u32 %v483, 2147483648
    %v492 = vmul.f32 %v491, 1.442695
    %v493 = vpow.pop %v492
    %v494 = vadd.f32 %v493, 1.0
    %v495 = vrcp.pop %v494
    %v496 = vmul.f32 1.0, %v495
    %v498 = vrot.slane %v391, 7
    %v500 = vmul.f32 %v489, %v498
    %v501 = vmul.f32 %v489, %v490
    %503 = vrot.lane.b32.xlu0 %v501, 64
    %v504 = vpop.permute.xlu0 %503
    %v506 = vadd.f32 %v500, %v504
    %v507 = vtanh.pop %v506
    %v508 = vmul.f32 %v496, %v507
    %v509 = vrot.slane %v283, 3
    %v510 = vrot.slane %v285, 3
    %v513 = vadd.f32 %v212, %v509
    %v514 = vadd.f32 %v214, %v510
    %v516 = vrot.slane %v508, 1
    %517 = vrot.lane.b32.xlu0 %v516, 64
    %v518 = vpop.permute.xlu0 %517
    %v519 = vsel %vm295, %v518, 0
    %521 = vmatprep.subr.mxu0 %v114
    %522 = vmatpush1.msra.mxu0 %v113
    %523 = vmatprep.subr.mxu0 %v116
    %524 = vmatpush1.msra.mxu0 %v115
    %525 = vmatprep.subr.mxu0 %v118
    %526 = vmatpush1.msra.mxu0 %v117
    %527 = vmatprep.subr.mxu0 %v120
    %528 = vmatpush1.msra.mxu0 %v119
    %529 = vmatprep.subr.mxu0 %v122
    %530 = vmatpush1.msra.mxu0 %v121
    %531 = vmatprep.subr.mxu0 %v124
    %532 = vmatpush1.msra.mxu0 %v123
    %533 = vmatprep.subr.mxu0 %v126
    %534 = vmatpush1.msra.mxu0 %v125
    %535 = vmatprep.subr.mxu0 %v128
    %536 = vmatpush1.msra.mxu0 %v127
    %537 = vmatprep.subr.mxu0 0.0
    %538 = vmatpush1.msra.mxu0 0.0
    %539 = vmatprep.subr.mxu0 0.0
    %540 = vmatpush1.msra.mxu0 0.0
    %541 = vmatprep.subr.mxu0 0.0
    %542 = vmatpush1.msra.mxu0 0.0
    %543 = vmatprep.subr.mxu0 0.0
    %544 = vmatpush1.msra.mxu0 0.0
    %545 = vmatprep.subr.mxu0 0.0
    %546 = vmatpush1.msra.mxu0 0.0
    %547 = vmatprep.subr.mxu0 0.0
    %548 = vmatpush1.msra.mxu0 0.0
    %549 = vmatprep.subr.mxu0 0.0
    %550 = vmatpush1.msra.mxu0 0.0
    %551 = vmatprep.subr.mxu0 0.0
    %552 = vmatpush1.msra.mxu0 0.0
    %553 = vmatprep.subr.mxu0 0.0
    %554 = vmatpush1.msra.mxu0 0.0
    %555 = vmatprep.subr.mxu0 0.0
    %556 = vmatpush1.msra.mxu0 0.0
    %557 = vmatprep.subr.mxu0 0.0
    %558 = vmatpush1.msra.mxu0 0.0
    %559 = vmatprep.subr.mxu0 0.0
    %560 = vmatpush1.msra.mxu0 0.0
    %561 = vmatprep.subr.mxu0 0.0
    %562 = vmatpush1.msra.mxu0 0.0
    %563 = vmatprep.subr.mxu0 0.0
    %564 = vmatpush1.msra.mxu0 0.0
    %565 = vmatprep.subr.mxu0 0.0
    %566 = vmatpush1.msra.mxu0 0.0
    %567 = vmatprep.subr.mxu0 0.0
    %568 = vmatpush1.msra.mxu0 0.0
    %569 = vmatprep.subr.mxu0 0.0
    %570 = vmatpush1.msra.mxu0 0.0
    %571 = vmatprep.subr.mxu0 0.0
    %572 = vmatpush1.msra.mxu0 0.0
    %573 = vmatprep.subr.mxu0 0.0
    %574 = vmatpush1.msra.mxu0 0.0
    %575 = vmatprep.subr.mxu0 0.0
    %576 = vmatpush1.msra.mxu0 0.0
    %577 = vmatprep.subr.mxu0 0.0
    %578 = vmatpush1.msra.mxu0 0.0
    %579 = vmatprep.subr.mxu0 0.0
    %580 = vmatpush1.msra.mxu0 0.0
    %581 = vmatprep.subr.mxu0 0.0
    %582 = vmatpush1.msra.mxu0 0.0
    %583 = vmatprep.subr.mxu0 0.0
    %584 = vmatpush1.msra.mxu0 0.0
    %585 = vmatprep.mubr.f32.mxu0 0.0
    %586 = vmatmul.mubr.f32.gmra.mrb[0].mxu0 %v519
    %v587 = vpop.f32.mrb[0].mxu0
    %v588 = vadd.f32 0.0, %v587
    %v589 = vpop.f32.mrb[0].mxu0
    %v590 = vadd.f32 0.0, %v589
    %591 = vdwg.mxu0
    %v594 = vrot.slane %v588, 6
    %v595 = vrot.slane %v590, 6
    %v598 = vadd.f32 %v513, %v594
    %v599 = vadd.f32 %v514, %v595
    %v600 = vxor.u32 %v598, 2147483648
    %v601 = vmul.f32 %v600, 1.442695
    %v602 = vpow.pop %v601
    %v603 = vadd.f32 %v602, 1.0
    %v604 = vrcp.pop %v603
    %v605 = vmul.f32 1.0, %v604
    %v606 = vtanh.pop %v599
    %v607 = vxor.u32 %v599, 2147483648
    %v608 = vmul.f32 %v607, 1.442695
    %v609 = vpow.pop %v608
    %v610 = vadd.f32 %v609, 1.0
    %v611 = vrcp.pop %v610
    %v612 = vmul.f32 1.0, %v611
    %v614 = vrot.slane %v506, 7
    %v616 = vmul.f32 %v605, %v614
    %v617 = vmul.f32 %v605, %v606
    %619 = vrot.lane.b32.xlu0 %v617, 64
    %v620 = vpop.permute.xlu0 %619
    %v622 = vadd.f32 %v616, %v620
    %v623 = vtanh.pop %v622
    %v624 = vmul.f32 %v612, %v623
    %v625 = vrot.slane %v283, 1
    %v626 = vrot.slane %v285, 1
    %v629 = vadd.f32 %v212, %v625
    %v630 = vadd.f32 %v214, %v626
    %v632 = vrot.slane %v624, 2
    %633 = vrot.lane.b32.xlu0 %v632, 64
    %v634 = vpop.permute.xlu0 %633
    %v635 = vsel %vm295, %v634, 0
    %637 = vmatprep.subr.mxu0 %v114
    %638 = vmatpush1.msra.mxu0 %v113
    %639 = vmatprep.subr.mxu0 %v116
    %640 = vmatpush1.msra.mxu0 %v115
    %641 = vmatprep.subr.mxu0 %v118
    %642 = vmatpush1.msra.mxu0 %v117
    %643 = vmatprep.subr.mxu0 %v120
    %644 = vmatpush1.msra.mxu0 %v119
    %645 = vmatprep.subr.mxu0 %v122
    %646 = vmatpush1.msra.mxu0 %v121
    %647 = vmatprep.subr.mxu0 %v124
    %648 = vmatpush1.msra.mxu0 %v123
    %649 = vmatprep.subr.mxu0 %v126
    %650 = vmatpush1.msra.mxu0 %v125
    %651 = vmatprep.subr.mxu0 %v128
    %652 = vmatpush1.msra.mxu0 %v127
    %653 = vmatprep.subr.mxu0 0.0
    %654 = vmatpush1.msra.mxu0 0.0
    %655 = vmatprep.subr.mxu0 0.0
    %656 = vmatpush1.msra.mxu0 0.0
    %657 = vmatprep.subr.mxu0 0.0
    %658 = vmatpush1.msra.mxu0 0.0
    %659 = vmatprep.subr.mxu0 0.0
    %660 = vmatpush1.msra.mxu0 0.0
    %661 = vmatprep.subr.mxu0 0.0
    %662 = vmatpush1.msra.mxu0 0.0
    %663 = vmatprep.subr.mxu0 0.0
    %664 = vmatpush1.msra.mxu0 0.0
    %665 = vmatprep.subr.mxu0 0.0
    %666 = vmatpush1.msra.mxu0 0.0
    %667 = vmatprep.subr.mxu0 0.0
    %668 = vmatpush1.msra.mxu0 0.0
    %669 = vmatprep.subr.mxu0 0.0
    %670 = vmatpush1.msra.mxu0 0.0
    %671 = vmatprep.subr.mxu0 0.0
    %672 = vmatpush1.msra.mxu0 0.0
    %673 = vmatprep.subr.mxu0 0.0
    %674 = vmatpush1.msra.mxu0 0.0
    %675 = vmatprep.subr.mxu0 0.0
    %676 = vmatpush1.msra.mxu0 0.0
    %677 = vmatprep.subr.mxu0 0.0
    %678 = vmatpush1.msra.mxu0 0.0
    %679 = vmatprep.subr.mxu0 0.0
    %680 = vmatpush1.msra.mxu0 0.0
    %681 = vmatprep.subr.mxu0 0.0
    %682 = vmatpush1.msra.mxu0 0.0
    %683 = vmatprep.subr.mxu0 0.0
    %684 = vmatpush1.msra.mxu0 0.0
    %685 = vmatprep.subr.mxu0 0.0
    %686 = vmatpush1.msra.mxu0 0.0
    %687 = vmatprep.subr.mxu0 0.0
    %688 = vmatpush1.msra.mxu0 0.0
    %689 = vmatprep.subr.mxu0 0.0
    %690 = vmatpush1.msra.mxu0 0.0
    %691 = vmatprep.subr.mxu0 0.0
    %692 = vmatpush1.msra.mxu0 0.0
    %693 = vmatprep.subr.mxu0 0.0
    %694 = vmatpush1.msra.mxu0 0.0
    %695 = vmatprep.subr.mxu0 0.0
    %696 = vmatpush1.msra.mxu0 0.0
    %697 = vmatprep.subr.mxu0 0.0
    %698 = vmatpush1.msra.mxu0 0.0
    %699 = vmatprep.subr.mxu0 0.0
    %700 = vmatpush1.msra.mxu0 0.0
    %701 = vmatprep.mubr.f32.mxu0 0.0
    %702 = vmatmul.mubr.f32.gmra.mrb[0].mxu0 %v635
    %v703 = vpop.f32.mrb[0].mxu0
    %v704 = vadd.f32 0.0, %v703
    %v705 = vpop.f32.mrb[0].mxu0
    %v706 = vadd.f32 0.0, %v705
    %707 = vdwg.mxu0
    %v710 = vrot.slane %v704, 5
    %v711 = vrot.slane %v706, 5
    %v714 = vadd.f32 %v629, %v710
    %v715 = vadd.f32 %v630, %v711
    %v716 = vxor.u32 %v714, 2147483648
    %v717 = vmul.f32 %v716, 1.442695
    %v718 = vpow.pop %v717
    %v719 = vadd.f32 %v718, 1.0
    %v720 = vrcp.pop %v719
    %v721 = vmul.f32 1.0, %v720
    %v722 = vtanh.pop %v715
    %v723 = vxor.u32 %v715, 2147483648
    %v724 = vmul.f32 %v723, 1.442695
    %v725 = vpow.pop %v724
    %v726 = vadd.f32 %v725, 1.0
    %v727 = vrcp.pop %v726
    %v728 = vmul.f32 1.0, %v727
    %v730 = vrot.slane %v622, 7
    %v732 = vmul.f32 %v721, %v730
    %v733 = vmul.f32 %v721, %v722
    %735 = vrot.lane.b32.xlu0 %v733, 64
    %v736 = vpop.permute.xlu0 %735
    %v738 = vadd.f32 %v732, %v736
    %v739 = vtanh.pop %v738
    %v740 = vmul.f32 %v728, %v739
    %v742 = vrot.slane %v740, 3
    %743 = vrot.lane.b32.xlu0 %v742, 64
    %v744 = vpop.permute.xlu0 %743
    %v745 = vsel %vm295, %v744, 0
    %747 = vmatprep.subr.mxu0 %v114
    %748 = vmatpush1.msra.mxu0 %v113
    %749 = vmatprep.subr.mxu0 %v116
    %750 = vmatpush1.msra.mxu0 %v115
    %751 = vmatprep.subr.mxu0 %v118
    %752 = vmatpush1.msra.mxu0 %v117
    %753 = vmatprep.subr.mxu0 %v120
    %754 = vmatpush1.msra.mxu0 %v119
    %755 = vmatprep.subr.mxu0 %v122
    %756 = vmatpush1.msra.mxu0 %v121
    %757 = vmatprep.subr.mxu0 %v124
    %758 = vmatpush1.msra.mxu0 %v123
    %759 = vmatprep.subr.mxu0 %v126
    %760 = vmatpush1.msra.mxu0 %v125
    %761 = vmatprep.subr.mxu0 %v128
    %762 = vmatpush1.msra.mxu0 %v127
    %763 = vmatprep.subr.mxu0 0.0
    %764 = vmatpush1.msra.mxu0 0.0
    %765 = vmatprep.subr.mxu0 0.0
    %766 = vmatpush1.msra.mxu0 0.0
    %767 = vmatprep.subr.mxu0 0.0
    %768 = vmatpush1.msra.mxu0 0.0
    %769 = vmatprep.subr.mxu0 0.0
    %770 = vmatpush1.msra.mxu0 0.0
    %771 = vmatprep.subr.mxu0 0.0
    %772 = vmatpush1.msra.mxu0 0.0
    %773 = vmatprep.subr.mxu0 0.0
    %774 = vmatpush1.msra.mxu0 0.0
    %775 = vmatprep.subr.mxu0 0.0
    %776 = vmatpush1.msra.mxu0 0.0
    %777 = vmatprep.subr.mxu0 0.0
    %778 = vmatpush1.msra.mxu0 0.0
    %779 = vmatprep.subr.mxu0 0.0
    %780 = vmatpush1.msra.mxu0 0.0
    %781 = vmatprep.subr.mxu0 0.0
    %782 = vmatpush1.msra.mxu0 0.0
    %783 = vmatprep.subr.mxu0 0.0
    %784 = vmatpush1.msra.mxu0 0.0
    %785 = vmatprep.subr.mxu0 0.0
    %786 = vmatpush1.msra.mxu0 0.0
    %787 = vmatprep.subr.mxu0 0.0
    %788 = vmatpush1.msra.mxu0 0.0
    %789 = vmatprep.subr.mxu0 0.0
    %790 = vmatpush1.msra.mxu0 0.0
    %791 = vmatprep.subr.mxu0 0.0
    %792 = vmatpush1.msra.mxu0 0.0
    %793 = vmatprep.subr.mxu0 0.0
    %794 = vmatpush1.msra.mxu0 0.0
    %795 = vmatprep.subr.mxu0 0.0
    %796 = vmatpush1.msra.mxu0 0.0
    %797 = vmatprep.subr.mxu0 0.0
    %798 = vmatpush1.msra.mxu0 0.0
    %799 = vmatprep.subr.mxu0 0.0
    %800 = vmatpush1.msra.mxu0 0.0
    %801 = vmatprep.subr.mxu0 0.0
    %802 = vmatpush1.msra.mxu0 0.0
    %803 = vmatprep.subr.mxu0 0.0
    %804 = vmatpush1.msra.mxu0 0.0
    %805 = vmatprep.subr.mxu0 0.0
    %806 = vmatpush1.msra.mxu0 0.0
    %807 = vmatprep.subr.mxu0 0.0
    %808 = vmatpush1.msra.mxu0 0.0
    %809 = vmatprep.subr.mxu0 0.0
    %810 = vmatpush1.msra.mxu0 0.0
    %811 = vmatprep.mubr.f32.mxu0 0.0
    %812 = vmatmul.mubr.f32.gmra.mrb[0].mxu0 %v745
    %v813 = vpop.f32.mrb[0].mxu0
    %v814 = vadd.f32 0.0, %v813
    %v815 = vpop.f32.mrb[0].mxu0
    %v816 = vadd.f32 0.0, %v815
    %817 = vdwg.mxu0
    %v820 = vrot.slane %v814, 4
    %v821 = vrot.slane %v816, 4
    %v824 = vadd.f32 %v293, %v820
    %v825 = vadd.f32 %v294, %v821
    %v826 = vxor.u32 %v824, 2147483648
    %v827 = vmul.f32 %v826, 1.442695
    %v828 = vpow.pop %v827
    %v829 = vadd.f32 %v828, 1.0
    %v830 = vrcp.pop %v829
    %v831 = vmul.f32 1.0, %v830
    %v832 = vtanh.pop %v825
    %v833 = vxor.u32 %v825, 2147483648
    %v834 = vmul.f32 %v833, 1.442695
    %v835 = vpow.pop %v834
    %v836 = vadd.f32 %v835, 1.0
    %v837 = vrcp.pop %v836
    %v838 = vmul.f32 1.0, %v837
    %v840 = vrot.slane %v738, 7
    %v842 = vmul.f32 %v831, %v840
    %v843 = vmul.f32 %v831, %v832
    %845 = vrot.lane.b32.xlu0 %v843, 64
    %v846 = vpop.permute.xlu0 %845
    %v848 = vadd.f32 %v842, %v846
    %v849 = vtanh.pop %v848
    %v850 = vmul.f32 %v838, %v849
    %v852 = vrot.slane %v850, 4
    %853 = vrot.lane.b32.xlu0 %v852, 64
    %v854 = vpop.permute.xlu0 %853
    %v855 = vsel %vm295, %v854, 0
    %857 = vmatprep.subr.mxu0 %v114
    %858 = vmatpush1.msra.mxu0 %v113
    %859 = vmatprep.subr.mxu0 %v116
    %860 = vmatpush1.msra.mxu0 %v115
    %861 = vmatprep.subr.mxu0 %v118
    %862 = vmatpush1.msra.mxu0 %v117
    %863 = vmatprep.subr.mxu0 %v120
    %864 = vmatpush1.msra.mxu0 %v119
    %865 = vmatprep.subr.mxu0 %v122
    %866 = vmatpush1.msra.mxu0 %v121
    %867 = vmatprep.subr.mxu0 %v124
    %868 = vmatpush1.msra.mxu0 %v123
    %869 = vmatprep.subr.mxu0 %v126
    %870 = vmatpush1.msra.mxu0 %v125
    %871 = vmatprep.subr.mxu0 %v128
    %872 = vmatpush1.msra.mxu0 %v127
    %873 = vmatprep.subr.mxu0 0.0
    %874 = vmatpush1.msra.mxu0 0.0
    %875 = vmatprep.subr.mxu0 0.0
    %876 = vmatpush1.msra.mxu0 0.0
    %877 = vmatprep.subr.mxu0 0.0
    %878 = vmatpush1.msra.mxu0 0.0
    %879 = vmatprep.subr.mxu0 0.0
    %880 = vmatpush1.msra.mxu0 0.0
    %881 = vmatprep.subr.mxu0 0.0
    %882 = vmatpush1.msra.mxu0 0.0
    %883 = vmatprep.subr.mxu0 0.0
    %884 = vmatpush1.msra.mxu0 0.0
    %885 = vmatprep.subr.mxu0 0.0
    %886 = vmatpush1.msra.mxu0 0.0
    %887 = vmatprep.subr.mxu0 0.0
    %888 = vmatpush1.msra.mxu0 0.0
    %889 = vmatprep.subr.mxu0 0.0
    %890 = vmatpush1.msra.mxu0 0.0
    %891 = vmatprep.subr.mxu0 0.0
    %892 = vmatpush1.msra.mxu0 0.0
    %893 = vmatprep.subr.mxu0 0.0
    %894 = vmatpush1.msra.mxu0 0.0
    %895 = vmatprep.subr.mxu0 0.0
    %896 = vmatpush1.msra.mxu0 0.0
    %897 = vmatprep.subr.mxu0 0.0
    %898 = vmatpush1.msra.mxu0 0.0
    %899 = vmatprep.subr.mxu0 0.0
    %900 = vmatpush1.msra.mxu0 0.0
    %901 = vmatprep.subr.mxu0 0.0
    %902 = vmatpush1.msra.mxu0 0.0
    %903 = vmatprep.subr.mxu0 0.0
    %904 = vmatpush1.msra.mxu0 0.0
    %905 = vmatprep.subr.mxu0 0.0
    %906 = vmatpush1.msra.mxu0 0.0
    %907 = vmatprep.subr.mxu0 0.0
    %908 = vmatpush1.msra.mxu0 0.0
    %909 = vmatprep.subr.mxu0 0.0
    %910 = vmatpush1.msra.mxu0 0.0
    %911 = vmatprep.subr.mxu0 0.0
    %912 = vmatpush1.msra.mxu0 0.0
    %913 = vmatprep.subr.mxu0 0.0
    %914 = vmatpush1.msra.mxu0 0.0
    %915 = vmatprep.subr.mxu0 0.0
    %916 = vmatpush1.msra.mxu0 0.0
    %917 = vmatprep.subr.mxu0 0.0
    %918 = vmatpush1.msra.mxu0 0.0
    %919 = vmatprep.subr.mxu0 0.0
    %920 = vmatpush1.msra.mxu0 0.0
    %921 = vmatprep.mubr.f32.mxu0 0.0
    %922 = vmatmul.mubr.f32.gmra.mrb[0].mxu0 %v855
    %v923 = vpop.f32.mrb[0].mxu0
    %v924 = vadd.f32 0.0, %v923
    %v925 = vpop.f32.mrb[0].mxu0
    %v926 = vadd.f32 0.0, %v925
    %927 = vdwg.mxu0
    %v930 = vrot.slane %v924, 3
    %v931 = vrot.slane %v926, 3
    %v934 = vadd.f32 %v398, %v930
    %v935 = vadd.f32 %v399, %v931
    %v936 = vxor.u32 %v934, 2147483648
    %v937 = vmul.f32 %v936, 1.442695
    %v938 = vpow.pop %v937
    %v939 = vadd.f32 %v938, 1.0
    %v940 = vrcp.pop %v939
    %v941 = vmul.f32 1.0, %v940
    %v942 = vtanh.pop %v935
    %v943 = vxor.u32 %v935, 2147483648
    %v944 = vmul.f32 %v943, 1.442695
    %v945 = vpow.pop %v944
    %v946 = vadd.f32 %v945, 1.0
    %v947 = vrcp.pop %v946
    %v948 = vmul.f32 1.0, %v947
    %v950 = vrot.slane %v848, 7
    %v952 = vmul.f32 %v941, %v950
    %v953 = vmul.f32 %v941, %v942
    %955 = vrot.lane.b32.xlu0 %v953, 64
    %v956 = vpop.permute.xlu0 %955
    %v958 = vadd.f32 %v952, %v956
    %v959 = vtanh.pop %v958
    %v960 = vmul.f32 %v948, %v959
    %v962 = vrot.slane %v960, 5
    %963 = vrot.lane.b32.xlu0 %v962, 64
    %v964 = vpop.permute.xlu0 %963
    %v965 = vsel %vm295, %v964, 0
    %967 = vmatprep.subr.mxu0 %v114
    %968 = vmatpush1.msra.mxu0 %v113
    %969 = vmatprep.subr.mxu0 %v116
    %970 = vmatpush1.msra.mxu0 %v115
    %971 = vmatprep.subr.mxu0 %v118
    %972 = vmatpush1.msra.mxu0 %v117
    %973 = vmatprep.subr.mxu0 %v120
    %974 = vmatpush1.msra.mxu0 %v119
    %975 = vmatprep.subr.mxu0 %v122
    %976 = vmatpush1.msra.mxu0 %v121
    %977 = vmatprep.subr.mxu0 %v124
    %978 = vmatpush1.msra.mxu0 %v123
    %979 = vmatprep.subr.mxu0 %v126
    %980 = vmatpush1.msra.mxu0 %v125
    %981 = vmatprep.subr.mxu0 %v128
    %982 = vmatpush1.msra.mxu0 %v127
    %983 = vmatprep.subr.mxu0 0.0
    %984 = vmatpush1.msra.mxu0 0.0
    %985 = vmatprep.subr.mxu0 0.0
    %986 = vmatpush1.msra.mxu0 0.0
    %987 = vmatprep.subr.mxu0 0.0
    %988 = vmatpush1.msra.mxu0 0.0
    %989 = vmatprep.subr.mxu0 0.0
    %990 = vmatpush1.msra.mxu0 0.0
    %991 = vmatprep.subr.mxu0 0.0
    %992 = vmatpush1.msra.mxu0 0.0
    %993 = vmatprep.subr.mxu0 0.0
    %994 = vmatpush1.msra.mxu0 0.0
    %995 = vmatprep.subr.mxu0 0.0
    %996 = vmatpush1.msra.mxu0 0.0
    %997 = vmatprep.subr.mxu0 0.0
    %998 = vmatpush1.msra.mxu0 0.0
    %999 = vmatprep.subr.mxu0 0.0
    %1000 = vmatpush1.msra.mxu0 0.0
    %1001 = vmatprep.subr.mxu0 0.0
    %1002 = vmatpush1.msra.mxu0 0.0
    %1003 = vmatprep.subr.mxu0 0.0
    %1004 = vmatpush1.msra.mxu0 0.0
    %1005 = vmatprep.subr.mxu0 0.0
    %1006 = vmatpush1.msra.mxu0 0.0
    %1007 = vmatprep.subr.mxu0 0.0
    %1008 = vmatpush1.msra.mxu0 0.0
    %1009 = vmatprep.subr.mxu0 0.0
    %1010 = vmatpush1.msra.mxu0 0.0
    %1011 = vmatprep.subr.mxu0 0.0
    %1012 = vmatpush1.msra.mxu0 0.0
    %1013 = vmatprep.subr.mxu0 0.0
    %1014 = vmatpush1.msra.mxu0 0.0
    %1015 = vmatprep.subr.mxu0 0.0
    %1016 = vmatpush1.msra.mxu0 0.0
    %1017 = vmatprep.subr.mxu0 0.0
    %1018 = vmatpush1.msra.mxu0 0.0
    %1019 = vmatprep.subr.mxu0 0.0
    %1020 = vmatpush1.msra.mxu0 0.0
    %1021 = vmatprep.subr.mxu0 0.0
    %1022 = vmatpush1.msra.mxu0 0.0
    %1023 = vmatprep.subr.mxu0 0.0
    %1024 = vmatpush1.msra.mxu0 0.0
    %1025 = vmatprep.subr.mxu0 0.0
    %1026 = vmatpush1.msra.mxu0 0.0
    %1027 = vmatprep.subr.mxu0 0.0
    %1028 = vmatpush1.msra.mxu0 0.0
    %1029 = vmatprep.subr.mxu0 0.0
    %1030 = vmatpush1.msra.mxu0 0.0
    %1031 = vmatprep.mubr.f32.mxu0 0.0
    %1032 = vmatmul.mubr.f32.gmra.mrb[0].mxu0 %v965
    %v1033 = vpop.f32.mrb[0].mxu0
    %v1034 = vadd.f32 0.0, %v1033
    %v1035 = vpop.f32.mrb[0].mxu0
    %v1036 = vadd.f32 0.0, %v1035
    %1037 = vdwg.mxu0
    %v1040 = vrot.slane %v1034, 2
    %v1041 = vrot.slane %v1036, 2
    %v1044 = vadd.f32 %v513, %v1040
    %v1045 = vadd.f32 %v514, %v1041
    %v1046 = vxor.u32 %v1044, 2147483648
    %v1047 = vmul.f32 %v1046, 1.442695
    %v1048 = vpow.pop %v1047
    %v1049 = vadd.f32 %v1048, 1.0
    %v1050 = vrcp.pop %v1049
    %v1051 = vmul.f32 1.0, %v1050
    %v1052 = vtanh.pop %v1045
    %v1053 = vxor.u32 %v1045, 2147483648
    %v1054 = vmul.f32 %v1053, 1.442695
    %v1055 = vpow.pop %v1054
    %v1056 = vadd.f32 %v1055, 1.0
    %v1057 = vrcp.pop %v1056
    %v1058 = vmul.f32 1.0, %v1057
    %v1060 = vrot.slane %v958, 7
    %v1062 = vmul.f32 %v1051, %v1060
    %v1063 = vmul.f32 %v1051, %v1052
    %1065 = vrot.lane.b32.xlu0 %v1063, 64
    %v1066 = vpop.permute.xlu0 %1065
    %v1068 = vadd.f32 %v1062, %v1066
    %v1069 = vtanh.pop %v1068
    %v1070 = vmul.f32 %v1058, %v1069
    %v1072 = vrot.slane %v1070, 6
    %1073 = vrot.lane.b32.xlu0 %v1072, 64
    %v1074 = vpop.permute.xlu0 %1073
    %v1075 = vsel %vm295, %v1074, 0
    %1077 = vmatprep.subr.mxu0 %v114
    %1078 = vmatpush1.msra.mxu0 %v113
    %1079 = vmatprep.subr.mxu0 %v116
    %1080 = vmatpush1.msra.mxu0 %v115
    %1081 = vmatprep.subr.mxu0 %v118
    %1082 = vmatpush1.msra.mxu0 %v117
    %1083 = vmatprep.subr.mxu0 %v120
    %1084 = vmatpush1.msra.mxu0 %v119
    %1085 = vmatprep.subr.mxu0 %v122
    %1086 = vmatpush1.msra.mxu0 %v121
    %1087 = vmatprep.subr.mxu0 %v124
    %1088 = vmatpush1.msra.mxu0 %v123
    %1089 = vmatprep.subr.mxu0 %v126
    %1090 = vmatpush1.msra.mxu0 %v125
    %1091 = vmatprep.subr.mxu0 %v128
    %1092 = vmatpush1.msra.mxu0 %v127
    %1093 = vmatprep.subr.mxu0 0.0
    %1094 = vmatpush1.msra.mxu0 0.0
    %1095 = vmatprep.subr.mxu0 0.0
    %1096 = vmatpush1.msra.mxu0 0.0
    %1097 = vmatprep.subr.mxu0 0.0
    %1098 = vmatpush1.msra.mxu0 0.0
    %1099 = vmatprep.subr.mxu0 0.0
    %1100 = vmatpush1.msra.mxu0 0.0
    %1101 = vmatprep.subr.mxu0 0.0
    %1102 = vmatpush1.msra.mxu0 0.0
    %1103 = vmatprep.subr.mxu0 0.0
    %1104 = vmatpush1.msra.mxu0 0.0
    %1105 = vmatprep.subr.mxu0 0.0
    %1106 = vmatpush1.msra.mxu0 0.0
    %1107 = vmatprep.subr.mxu0 0.0
    %1108 = vmatpush1.msra.mxu0 0.0
    %1109 = vmatprep.subr.mxu0 0.0
    %1110 = vmatpush1.msra.mxu0 0.0
    %1111 = vmatprep.subr.mxu0 0.0
    %1112 = vmatpush1.msra.mxu0 0.0
    %1113 = vmatprep.subr.mxu0 0.0
    %1114 = vmatpush1.msra.mxu0 0.0
    %1115 = vmatprep.subr.mxu0 0.0
    %1116 = vmatpush1.msra.mxu0 0.0
    %1117 = vmatprep.subr.mxu0 0.0
    %1118 = vmatpush1.msra.mxu0 0.0
    %1119 = vmatprep.subr.mxu0 0.0
    %1120 = vmatpush1.msra.mxu0 0.0
    %1121 = vmatprep.subr.mxu0 0.0
    %1122 = vmatpush1.msra.mxu0 0.0
    %1123 = vmatprep.subr.mxu0 0.0
    %1124 = vmatpush1.msra.mxu0 0.0
    %1125 = vmatprep.subr.mxu0 0.0
    %1126 = vmatpush1.msra.mxu0 0.0
    %1127 = vmatprep.subr.mxu0 0.0
    %1128 = vmatpush1.msra.mxu0 0.0
    %1129 = vmatprep.subr.mxu0 0.0
    %1130 = vmatpush1.msra.mxu0 0.0
    %1131 = vmatprep.subr.mxu0 0.0
    %1132 = vmatpush1.msra.mxu0 0.0
    %1133 = vmatprep.subr.mxu0 0.0
    %1134 = vmatpush1.msra.mxu0 0.0
    %1135 = vmatprep.subr.mxu0 0.0
    %1136 = vmatpush1.msra.mxu0 0.0
    %1137 = vmatprep.subr.mxu0 0.0
    %1138 = vmatpush1.msra.mxu0 0.0
    %1139 = vmatprep.subr.mxu0 0.0
    %1140 = vmatpush1.msra.mxu0 0.0
    %1141 = vmatprep.mubr.f32.mxu0 0.0
    %1142 = vmatmul.mubr.f32.gmra.mrb[0].mxu0 %v1075
    %v1143 = vpop.f32.mrb[0].mxu0
    %v1144 = vadd.f32 0.0, %v1143
    %v1145 = vpop.f32.mrb[0].mxu0
    %v1146 = vadd.f32 0.0, %v1145
    %1147 = vdwg.mxu0
    %v1150 = vrot.slane %v1144, 1
    %v1151 = vrot.slane %v1146, 1
    %v1154 = vadd.f32 %v629, %v1150
    %v1155 = vadd.f32 %v630, %v1151
    %v1156 = vxor.u32 %v1154, 2147483648
    %v1157 = vmul.f32 %v1156, 1.442695
    %v1158 = vpow.pop %v1157
    %v1159 = vadd.f32 %v1158, 1.0
    %v1160 = vrcp.pop %v1159
    %v1161 = vmul.f32 1.0, %v1160
    %v1162 = vtanh.pop %v1155
    %v1163 = vxor.u32 %v1155, 2147483648
    %v1164 = vmul.f32 %v1163, 1.442695
    %v1165 = vpow.pop %v1164
    %v1166 = vadd.f32 %v1165, 1.0
    %v1167 = vrcp.pop %v1166
    %v1168 = vmul.f32 1.0, %v1167
    %v1170 = vrot.slane %v1068, 7
    %v1172 = vmul.f32 %v1161, %v1170
    %v1173 = vmul.f32 %v1161, %v1162
    %1175 = vrot.lane.b32.xlu0 %v1173, 64
    %v1176 = vpop.permute.xlu0 %1175
    %v1178 = vadd.f32 %v1172, %v1176
    %v1179 = vtanh.pop %v1178
    %v1180 = vmul.f32 %v1168, %v1179
    %vm1181 = vcmask 1040384
    %v1182 = vsel %vm1181, %v393, %v508
    %vm1183 = vcmask 1041408
    %v1184 = vsel %vm1183, %v1182, %v624
    %vm1185 = vcmask 1042432
    %v1186 = vsel %vm1185, %v1184, %v740
    %vm1187 = vcmask 1043456
    %v1188 = vsel %vm1187, %v1186, %v850
    %vm1189 = vcmask 1044480
    %v1190 = vsel %vm1189, %v1188, %v960
    %vm1191 = vcmask 1045504
    %v1192 = vsel %vm1191, %v1190, %v1070
    %vm1193 = vcmask 1046528
    %v1194 = vsel %vm1193, %v1192, %v1180
    %v1196 = vrot.slane %v1180, 7
    %v1198 = vrot.slane %v1070, 5
    %v1200 = vrot.slane %v960, 3
    %v1202 = vrot.slane %v850, 1
    %v1204 = vrot.slane %v740, 7
    %v1206 = vrot.slane %v624, 5
    %v1208 = vrot.slane %v508, 3
    %v1210 = vrot.slane %v393, 1
    %v1212 = vsel %vm1181, %v1196, %v1198
    %v1213 = vsel %vm1183, %v1212, %v1200
    %v1214 = vsel %vm1185, %v1213, %v1202
    %v1215 = vsel %vm1187, %v1214, %v1204
    %v1216 = vsel %vm1189, %v1215, %v1206
    %v1217 = vsel %vm1191, %v1216, %v1208
    %v1218 = vsel %vm1193, %v1217, %v1210
    %1220 = vrot.lane.b32.xlu0 %v1194, 64
    %v1221 = vpop.permute.xlu0 %1220
    %1224 = vrot.lane.b32.xlu0 %v1218, 64
    %v1225 = vpop.permute.xlu0 %1224
    %vm1227 = vcmask 261120
    %v1228 = vsel %vm1227, %v1221, %v1225
    %v1229 = vld [vmem:[#allocation5] sm:$0xff]
    %v1230 = vld [vmem:[#allocation5 + $0x8] sm:$0xff]
    %v1231 = vld [vmem:[#allocation5 + $0x10] sm:$0xff]
    %v1232 = vld [vmem:[#allocation5 + $0x18] sm:$0xff]
    %v1233 = vld [vmem:[#allocation5 + $0x20] sm:$0xff]
    %v1234 = vld [vmem:[#allocation5 + $0x28] sm:$0xff]
    %v1235 = vld [vmem:[#allocation5 + $0x30] sm:$0xff]
    %v1236 = vld [vmem:[#allocation5 + $0x38] sm:$0xff]
    %v1237 = vld [vmem:[#allocation5 + $0x40] sm:$0xff]
    %v1238 = vld [vmem:[#allocation5 + $0x48] sm:$0xff]
    %v1239 = vld [vmem:[#allocation5 + $0x50] sm:$0xff]
    %v1240 = vld [vmem:[#allocation5 + $0x58] sm:$0xff]
    %v1241 = vld [vmem:[#allocation5 + $0x60] sm:$0xff]
    %v1242 = vld [vmem:[#allocation5 + $0x68] sm:$0xff]
    %v1243 = vld [vmem:[#allocation5 + $0x70] sm:$0xff]
    %v1244 = vld [vmem:[#allocation5 + $0x78] sm:$0xff]
    %v1245 = vld [vmem:[#allocation7] sm:$0xff]
    %v1246 = vld [vmem:[#allocation7 + $0x8] sm:$0xff]
    %v1247 = vld [vmem:[#allocation7 + $0x10] sm:$0xff]
    %v1248 = vld [vmem:[#allocation7 + $0x18] sm:$0xff]
    %v1249 = vld [vmem:[#allocation7 + $0x20] sm:$0xff]
    %v1250 = vld [vmem:[#allocation7 + $0x28] sm:$0xff]
    %v1251 = vld [vmem:[#allocation7 + $0x30] sm:$0xff]
    %v1252 = vld [vmem:[#allocation7 + $0x38] sm:$0xff]
    %v1253 = vld [vmem:[#allocation7 + $0x40] sm:$0xff]
    %v1254 = vld [vmem:[#allocation7 + $0x48] sm:$0xff]
    %v1255 = vld [vmem:[#allocation7 + $0x50] sm:$0xff]
    %v1256 = vld [vmem:[#allocation7 + $0x58] sm:$0xff]
    %v1257 = vld [vmem:[#allocation7 + $0x60] sm:$0xff]
    %v1258 = vld [vmem:[#allocation7 + $0x68] sm:$0xff]
    %v1259 = vld [vmem:[#allocation7 + $0x70] sm:$0xff]
    %v1260 = vld [vmem:[#allocation7 + $0x78] sm:$0xff]
    %v1261 = vld [vmem:[#allocation8] sm:$0xff]
    %v1262 = vld [vmem:[#allocation8 + $0x8] sm:$0xff]
    %v1263 = vld [vmem:[#allocation8 + $0x10] sm:$0xff]
    %v1264 = vld [vmem:[#allocation8 + $0x18] sm:$0xff]
    %v1265 = vld [vmem:[#allocation8 + $0x20] sm:$0xff]
    %v1266 = vld [vmem:[#allocation8 + $0x28] sm:$0xff]
    %v1267 = vld [vmem:[#allocation8 + $0x30] sm:$0xff]
    %v1268 = vld [vmem:[#allocation8 + $0x38] sm:$0xff]
    %v1269 = vld [vmem:[#allocation8 + $0x40] sm:$0xff]
    %v1270 = vld [vmem:[#allocation8 + $0x48] sm:$0xff]
    %v1271 = vld [vmem:[#allocation8 + $0x50] sm:$0xff]
    %v1272 = vld [vmem:[#allocation8 + $0x58] sm:$0xff]
    %v1273 = vld [vmem:[#allocation8 + $0x60] sm:$0xff]
    %v1274 = vld [vmem:[#allocation8 + $0x68] sm:$0xff]
    %v1275 = vld [vmem:[#allocation8 + $0x70] sm:$0xff]
    %v1276 = vld [vmem:[#allocation8 + $0x78] sm:$0xff]
    %v1277 = vld [vmem:[%s8] sm:$0x3]
    %v1279 = vlaneseq
    %v1280 = vshrl.u32 %v1279, 7
    %v1281 = vsub.s32 0, %v1280
    %v1282 = vrot.slane %v1277, %v1281
    %v1283 = vlaneseq
    %v1284 = vshrl.u32 %v1283, 7
    %v1285 = vsub.s32 1, %v1284
    %v1286 = vrot.slane %v1277, %v1285
    %v1290 = vsel %vm295, %v1228, 0
    %1292 = vmatprep.subr.mxu0 %v1230
    %1293 = vmatpush1.msra.mxu0 %v1229
    %1294 = vmatprep.subr.mxu0 %v1232
    %1295 = vmatpush1.msra.mxu0 %v1231
    %1296 = vmatprep.subr.mxu0 %v1234
    %1297 = vmatpush1.msra.mxu0 %v1233
    %1298 = vmatprep.subr.mxu0 %v1236
    %1299 = vmatpush1.msra.mxu0 %v1235
    %1300 = vmatprep.subr.mxu0 %v1238
    %1301 = vmatpush1.msra.mxu0 %v1237
    %1302 = vmatprep.subr.mxu0 %v1240
    %1303 = vmatpush1.msra.mxu0 %v1239
    %1304 = vmatprep.subr.mxu0 %v1242
    %1305 = vmatpush1.msra.mxu0 %v1241
    %1306 = vmatprep.subr.mxu0 %v1244
    %1307 = vmatpush1.msra.mxu0 %v1243
    %1308 = vmatprep.subr.mxu0 0.0
    %1309 = vmatpush1.msra.mxu0 0.0
    %1310 = vmatprep.subr.mxu0 0.0
    %1311 = vmatpush1.msra.mxu0 0.0
    %1312 = vmatprep.subr.mxu0 0.0
    %1313 = vmatpush1.msra.mxu0 0.0
    %1314 = vmatprep.subr.mxu0 0.0
    %1315 = vmatpush1.msra.mxu0 0.0
    %1316 = vmatprep.subr.mxu0 0.0
    %1317 = vmatpush1.msra.mxu0 0.0
    %1318 = vmatprep.subr.mxu0 0.0
    %1319 = vmatpush1.msra.mxu0 0.0
    %1320 = vmatprep.subr.mxu0 0.0
    %1321 = vmatpush1.msra.mxu0 0.0
    %1322 = vmatprep.subr.mxu0 0.0
    %1323 = vmatpush1.msra.mxu0 0.0
    %1324 = vmatprep.subr.mxu0 0.0
    %1325 = vmatpush1.msra.mxu0 0.0
    %1326 = vmatprep.subr.mxu0 0.0
    %1327 = vmatpush1.msra.mxu0 0.0
    %1328 = vmatprep.subr.mxu0 0.0
    %1329 = vmatpush1.msra.mxu0 0.0
    %1330 = vmatprep.subr.mxu0 0.0
    %1331 = vmatpush1.msra.mxu0 0.0
    %1332 = vmatprep.subr.mxu0 0.0
    %1333 = vmatpush1.msra.mxu0 0.0
    %1334 = vmatprep.subr.mxu0 0.0
    %1335 = vmatpush1.msra.mxu0 0.0
    %1336 = vmatprep.subr.mxu0 0.0
    %1337 = vmatpush1.msra.mxu0 0.0
    %1338 = vmatprep.subr.mxu0 0.0
    %1339 = vmatpush1.msra.mxu0 0.0
    %1340 = vmatprep.subr.mxu0 0.0
    %1341 = vmatpush1.msra.mxu0 0.0
    %1342 = vmatprep.subr.mxu0 0.0
    %1343 = vmatpush1.msra.mxu0 0.0
    %1344 = vmatprep.subr.mxu0 0.0
    %1345 = vmatpush1.msra.mxu0 0.0
    %1346 = vmatprep.subr.mxu0 0.0
    %1347 = vmatpush1.msra.mxu0 0.0
    %1348 = vmatprep.subr.mxu0 0.0
    %1349 = vmatpush1.msra.mxu0 0.0
    %1350 = vmatprep.subr.mxu0 0.0
    %1351 = vmatpush1.msra.mxu0 0.0
    %1352 = vmatprep.subr.mxu0 0.0
    %1353 = vmatpush1.msra.mxu0 0.0
    %1354 = vmatprep.subr.mxu0 0.0
    %1355 = vmatpush1.msra.mxu0 0.0
    %1356 = vmatprep.mubr.f32.mxu0 0.0
    %1357 = vmatmul.mubr.f32.gmra.mrb[0].mxu0 %v1290
    %v1358 = vpop.f32.mrb[0].mxu0
    %v1359 = vadd.f32 %v1282, %v1358
    %v1360 = vpop.f32.mrb[0].mxu0
    %v1361 = vadd.f32 %v1286, %v1360
    %1362 = vdwg.mxu0
    %1363 = vmatprep.subr.mxu0 %v1246
    %1364 = vmatpush1.msra.mxu0 %v1245
    %1365 = vmatprep.subr.mxu0 %v1248
    %1366 = vmatpush1.msra.mxu0 %v1247
    %1367 = vmatprep.subr.mxu0 %v1250
    %1368 = vmatpush1.msra.mxu0 %v1249
    %1369 = vmatprep.subr.mxu0 %v1252
    %1370 = vmatpush1.msra.mxu0 %v1251
    %1371 = vmatprep.subr.mxu0 %v1254
    %1372 = vmatpush1.msra.mxu0 %v1253
    %1373 = vmatprep.subr.mxu0 %v1256
    %1374 = vmatpush1.msra.mxu0 %v1255
    %1375 = vmatprep.subr.mxu0 %v1258
    %1376 = vmatpush1.msra.mxu0 %v1257
    %1377 = vmatprep.subr.mxu0 %v1260
    %1378 = vmatpush1.msra.mxu0 %v1259
    %1379 = vmatprep.subr.mxu0 0.0
    %1380 = vmatpush1.msra.mxu0 0.0
    %1381 = vmatprep.subr.mxu0 0.0
    %1382 = vmatpush1.msra.mxu0 0.0
    %1383 = vmatprep.subr.mxu0 0.0
    %1384 = vmatpush1.msra.mxu0 0.0
    %1385 = vmatprep.subr.mxu0 0.0
    %1386 = vmatpush1.msra.mxu0 0.0
    %1387 = vmatprep.subr.mxu0 0.0
    %1388 = vmatpush1.msra.mxu0 0.0
    %1389 = vmatprep.subr.mxu0 0.0
    %1390 = vmatpush1.msra.mxu0 0.0
    %1391 = vmatprep.subr.mxu0 0.0
    %1392 = vmatpush1.msra.mxu0 0.0
    %1393 = vmatprep.subr.mxu0 0.0
    %1394 = vmatpush1.msra.mxu0 0.0
    %1395 = vmatprep.subr.mxu0 0.0
    %1396 = vmatpush1.msra.mxu0 0.0
    %1397 = vmatprep.subr.mxu0 0.0
    %1398 = vmatpush1.msra.mxu0 0.0
    %1399 = vmatprep.subr.mxu0 0.0
    %1400 = vmatpush1.msra.mxu0 0.0
    %1401 = vmatprep.subr.mxu0 0.0
    %1402 = vmatpush1.msra.mxu0 0.0
    %1403 = vmatprep.subr.mxu0 0.0
    %1404 = vmatpush1.msra.mxu0 0.0
    %1405 = vmatprep.subr.mxu0 0.0
    %1406 = vmatpush1.msra.mxu0 0.0
    %1407 = vmatprep.subr.mxu0 0.0
    %1408 = vmatpush1.msra.mxu0 0.0
    %1409 = vmatprep.subr.mxu0 0.0
    %1410 = vmatpush1.msra.mxu0 0.0
    %1411 = vmatprep.subr.mxu0 0.0
    %1412 = vmatpush1.msra.mxu0 0.0
    %1413 = vmatprep.subr.mxu0 0.0
    %1414 = vmatpush1.msra.mxu0 0.0
    %1415 = vmatprep.subr.mxu0 0.0
    %1416 = vmatpush1.msra.mxu0 0.0
    %1417 = vmatprep.subr.mxu0 0.0
    %1418 = vmatpush1.msra.mxu0 0.0
    %1419 = vmatprep.subr.mxu0 0.0
    %1420 = vmatpush1.msra.mxu0 0.0
    %1421 = vmatprep.subr.mxu0 0.0
    %1422 = vmatpush1.msra.mxu0 0.0
    %1423 = vmatprep.subr.mxu0 0.0
    %1424 = vmatpush1.msra.mxu0 0.0
    %1425 = vmatprep.subr.mxu0 0.0
    %1426 = vmatpush1.msra.mxu0 0.0
    %1427 = vmatprep.mubr.f32.mxu0 0.0
    %1428 = vmatmul.mubr.f32.gmra.mrb[0].mxu0 %v1290
    %v1429 = vpop.f32.mrb[0].mxu0
    %v1430 = vadd.f32 0.0, %v1429
    %v1431 = vpop.f32.mrb[0].mxu0
    %v1432 = vadd.f32 0.0, %v1431
    %1433 = vdwg.mxu0
    %v1436 = vrot.slane %v1430, 7
    %v1437 = vrot.slane %v1432, 7
    %v1440 = vadd.f32 %v1359, %v1436
    %v1441 = vadd.f32 %v1361, %v1437
    %1442 = vmatprep.subr.mxu0 %v1262
    %1443 = vmatpush1.msra.mxu0 %v1261
    %1444 = vmatprep.subr.mxu0 %v1264
    %1445 = vmatpush1.msra.mxu0 %v1263
    %1446 = vmatprep.subr.mxu0 %v1266
    %1447 = vmatpush1.msra.mxu0 %v1265
    %1448 = vmatprep.subr.mxu0 %v1268
    %1449 = vmatpush1.msra.mxu0 %v1267
    %1450 = vmatprep.subr.mxu0 %v1270
    %1451 = vmatpush1.msra.mxu0 %v1269
    %1452 = vmatprep.subr.mxu0 %v1272
    %1453 = vmatpush1.msra.mxu0 %v1271
    %1454 = vmatprep.subr.mxu0 %v1274
    %1455 = vmatpush1.msra.mxu0 %v1273
    %1456 = vmatprep.subr.mxu0 %v1276
    %1457 = vmatpush1.msra.mxu0 %v1275
    %1458 = vmatprep.subr.mxu0 0.0
    %1459 = vmatpush1.msra.mxu0 0.0
    %1460 = vmatprep.subr.mxu0 0.0
    %1461 = vmatpush1.msra.mxu0 0.0
    %1462 = vmatprep.subr.mxu0 0.0
    %1463 = vmatpush1.msra.mxu0 0.0
    %1464 = vmatprep.subr.mxu0 0.0
    %1465 = vmatpush1.msra.mxu0 0.0
    %1466 = vmatprep.subr.mxu0 0.0
    %1467 = vmatpush1.msra.mxu0 0.0
    %1468 = vmatprep.subr.mxu0 0.0
    %1469 = vmatpush1.msra.mxu0 0.0
    %1470 = vmatprep.subr.mxu0 0.0
    %1471 = vmatpush1.msra.mxu0 0.0
    %1472 = vmatprep.subr.mxu0 0.0
    %1473 = vmatpush1.msra.mxu0 0.0
    %1474 = vmatprep.subr.mxu0 0.0
    %1475 = vmatpush1.msra.mxu0 0.0
    %1476 = vmatprep.subr.mxu0 0.0
    %1477 = vmatpush1.msra.mxu0 0.0
    %1478 = vmatprep.subr.mxu0 0.0
    %1479 = vmatpush1.msra.mxu0 0.0
    %1480 = vmatprep.subr.mxu0 0.0
    %1481 = vmatpush1.msra.mxu0 0.0
    %1482 = vmatprep.subr.mxu0 0.0
    %1483 = vmatpush1.msra.mxu0 0.0
    %1484 = vmatprep.subr.mxu0 0.0
    %1485 = vmatpush1.msra.mxu0 0.0
    %1486 = vmatprep.subr.mxu0 0.0
    %1487 = vmatpush1.msra.mxu0 0.0
    %1488 = vmatprep.subr.mxu0 0.0
    %1489 = vmatpush1.msra.mxu0 0.0
    %1490 = vmatprep.subr.mxu0 0.0
    %1491 = vmatpush1.msra.mxu0 0.0
    %1492 = vmatprep.subr.mxu0 0.0
    %1493 = vmatpush1.msra.mxu0 0.0
    %1494 = vmatprep.subr.mxu0 0.0
    %1495 = vmatpush1.msra.mxu0 0.0
    %1496 = vmatprep.subr.mxu0 0.0
    %1497 = vmatpush1.msra.mxu0 0.0
    %1498 = vmatprep.subr.mxu0 0.0
    %1499 = vmatpush1.msra.mxu0 0.0
    %1500 = vmatprep.subr.mxu0 0.0
    %1501 = vmatpush1.msra.mxu0 0.0
    %1502 = vmatprep.subr.mxu0 0.0
    %1503 = vmatpush1.msra.mxu0 0.0
    %1504 = vmatprep.subr.mxu0 0.0
    %1505 = vmatpush1.msra.mxu0 0.0
    %1506 = vmatprep.mubr.f32.mxu0 0.0
    %1507 = vmatmul.mubr.f32.gmra.mrb[0].mxu0 %v297
    %v1508 = vpop.f32.mrb[0].mxu0
    %v1509 = vadd.f32 0.0, %v1508
    %v1510 = vpop.f32.mrb[0].mxu0
    %v1511 = vadd.f32 0.0, %v1510
    %1512 = vdwg.mxu0
    %v1513 = vadd.f32 %v1440, %v1509
    %v1514 = vadd.f32 %v1441, %v1511
    %v1515 = vxor.u32 %v1513, 2147483648
    %v1516 = vmul.f32 %v1515, 1.442695
    %v1517 = vpow.pop %v1516
    %v1518 = vadd.f32 %v1517, 1.0
    %v1519 = vrcp.pop %v1518
    %v1520 = vmul.f32 1.0, %v1519
    %v1521 = vtanh.pop %v1514
    %v1522 = vxor.u32 %v1514, 2147483648
    %v1523 = vmul.f32 %v1522, 1.442695
    %v1524 = vpow.pop %v1523
    %v1525 = vadd.f32 %v1524, 1.0
    %v1526 = vrcp.pop %v1525
    %v1527 = vmul.f32 1.0, %v1526
    %v1528 = vmul.f32 %v1520, 0.0
    %v1529 = vmul.f32 %v1520, %v1521
    %1531 = vrot.lane.b32.xlu0 %v1529, 64
    %v1532 = vpop.permute.xlu0 %1531
    %v1534 = vadd.f32 %v1528, %v1532
    %v1535 = vtanh.pop %v1534
    %v1536 = vmul.f32 %v1527, %v1535
    %v1537 = vrot.slane %v1430, 5
    %v1538 = vrot.slane %v1432, 5
    %v1541 = vadd.f32 %v1359, %v1537
    %v1542 = vadd.f32 %v1361, %v1538
    %1544 = vrot.lane.b32.xlu0 %v1536, 64
    %v1545 = vpop.permute.xlu0 %1544
    %v1546 = vsel %vm295, %v1545, 0
    %1548 = vmatprep.subr.mxu0 %v1262
    %1549 = vmatpush1.msra.mxu0 %v1261
    %1550 = vmatprep.subr.mxu0 %v1264
    %1551 = vmatpush1.msra.mxu0 %v1263
    %1552 = vmatprep.subr.mxu0 %v1266
    %1553 = vmatpush1.msra.mxu0 %v1265
    %1554 = vmatprep.subr.mxu0 %v1268
    %1555 = vmatpush1.msra.mxu0 %v1267
    %1556 = vmatprep.subr.mxu0 %v1270
    %1557 = vmatpush1.msra.mxu0 %v1269
    %1558 = vmatprep.subr.mxu0 %v1272
    %1559 = vmatpush1.msra.mxu0 %v1271
    %1560 = vmatprep.subr.mxu0 %v1274
    %1561 = vmatpush1.msra.mxu0 %v1273
    %1562 = vmatprep.subr.mxu0 %v1276
    %1563 = vmatpush1.msra.mxu0 %v1275
    %1564 = vmatprep.subr.mxu0 0.0
    %1565 = vmatpush1.msra.mxu0 0.0
    %1566 = vmatprep.subr.mxu0 0.0
    %1567 = vmatpush1.msra.mxu0 0.0
    %1568 = vmatprep.subr.mxu0 0.0
    %1569 = vmatpush1.msra.mxu0 0.0
    %1570 = vmatprep.subr.mxu0 0.0
    %1571 = vmatpush1.msra.mxu0 0.0
    %1572 = vmatprep.subr.mxu0 0.0
    %1573 = vmatpush1.msra.mxu0 0.0
    %1574 = vmatprep.subr.mxu0 0.0
    %1575 = vmatpush1.msra.mxu0 0.0
    %1576 = vmatprep.subr.mxu0 0.0
    %1577 = vmatpush1.msra.mxu0 0.0
    %1578 = vmatprep.subr.mxu0 0.0
    %1579 = vmatpush1.msra.mxu0 0.0
    %1580 = vmatprep.subr.mxu0 0.0
    %1581 = vmatpush1.msra.mxu0 0.0
    %1582 = vmatprep.subr.mxu0 0.0
    %1583 = vmatpush1.msra.mxu0 0.0
    %1584 = vmatprep.subr.mxu0 0.0
    %1585 = vmatpush1.msra.mxu0 0.0
    %1586 = vmatprep.subr.mxu0 0.0
    %1587 = vmatpush1.msra.mxu0 0.0
    %1588 = vmatprep.subr.mxu0 0.0
    %1589 = vmatpush1.msra.mxu0 0.0
    %1590 = vmatprep.subr.mxu0 0.0
    %1591 = vmatpush1.msra.mxu0 0.0
    %1592 = vmatprep.subr.mxu0 0.0
    %1593 = vmatpush1.msra.mxu0 0.0
    %1594 = vmatprep.subr.mxu0 0.0
    %1595 = vmatpush1.msra.mxu0 0.0
    %1596 = vmatprep.subr.mxu0 0.0
    %1597 = vmatpush1.msra.mxu0 0.0
    %1598 = vmatprep.subr.mxu0 0.0
    %1599 = vmatpush1.msra.mxu0 0.0
    %1600 = vmatprep.subr.mxu0 0.0
    %1601 = vmatpush1.msra.mxu0 0.0
    %1602 = vmatprep.subr.mxu0 0.0
    %1603 = vmatpush1.msra.mxu0 0.0
    %1604 = vmatprep.subr.mxu0 0.0
    %1605 = vmatpush1.msra.mxu0 0.0
    %1606 = vmatprep.subr.mxu0 0.0
    %1607 = vmatpush1.msra.mxu0 0.0
    %1608 = vmatprep.subr.mxu0 0.0
    %1609 = vmatpush1.msra.mxu0 0.0
    %1610 = vmatprep.subr.mxu0 0.0
    %1611 = vmatpush1.msra.mxu0 0.0
    %1612 = vmatprep.mubr.f32.mxu0 0.0
    %1613 = vmatmul.mubr.f32.gmra.mrb[0].mxu0 %v1546
    %v1614 = vpop.f32.mrb[0].mxu0
    %v1615 = vadd.f32 0.0, %v1614
    %v1616 = vpop.f32.mrb[0].mxu0
    %v1617 = vadd.f32 0.0, %v1616
    %1618 = vdwg.mxu0
    %v1621 = vrot.slane %v1615, 7
    %v1622 = vrot.slane %v1617, 7
    %v1625 = vadd.f32 %v1541, %v1621
    %v1626 = vadd.f32 %v1542, %v1622
    %v1627 = vxor.u32 %v1625, 2147483648
    %v1628 = vmul.f32 %v1627, 1.442695
    %v1629 = vpow.pop %v1628
    %v1630 = vadd.f32 %v1629, 1.0
    %v1631 = vrcp.pop %v1630
    %v1632 = vmul.f32 1.0, %v1631
    %v1633 = vtanh.pop %v1626
    %v1634 = vxor.u32 %v1626, 2147483648
    %v1635 = vmul.f32 %v1634, 1.442695
    %v1636 = vpow.pop %v1635
    %v1637 = vadd.f32 %v1636, 1.0
    %v1638 = vrcp.pop %v1637
    %v1639 = vmul.f32 1.0, %v1638
    %v1641 = vrot.slane %v1534, 7
    %v1643 = vmul.f32 %v1632, %v1641
    %v1644 = vmul.f32 %v1632, %v1633
    %1646 = vrot.lane.b32.xlu0 %v1644, 64
    %v1647 = vpop.permute.xlu0 %1646
    %v1649 = vadd.f32 %v1643, %v1647
    %v1650 = vtanh.pop %v1649
    %v1651 = vmul.f32 %v1639, %v1650
    %v1652 = vrot.slane %v1430, 3
    %v1653 = vrot.slane %v1432, 3
    %v1656 = vadd.f32 %v1359, %v1652
    %v1657 = vadd.f32 %v1361, %v1653
    %v1659 = vrot.slane %v1651, 1
    %1660 = vrot.lane.b32.xlu0 %v1659, 64
    %v1661 = vpop.permute.xlu0 %1660
    %v1662 = vsel %vm295, %v1661, 0
    %1664 = vmatprep.subr.mxu0 %v1262
    %1665 = vmatpush1.msra.mxu0 %v1261
    %1666 = vmatprep.subr.mxu0 %v1264
    %1667 = vmatpush1.msra.mxu0 %v1263
    %1668 = vmatprep.subr.mxu0 %v1266
    %1669 = vmatpush1.msra.mxu0 %v1265
    %1670 = vmatprep.subr.mxu0 %v1268
    %1671 = vmatpush1.msra.mxu0 %v1267
    %1672 = vmatprep.subr.mxu0 %v1270
    %1673 = vmatpush1.msra.mxu0 %v1269
    %1674 = vmatprep.subr.mxu0 %v1272
    %1675 = vmatpush1.msra.mxu0 %v1271
    %1676 = vmatprep.subr.mxu0 %v1274
    %1677 = vmatpush1.msra.mxu0 %v1273
    %1678 = vmatprep.subr.mxu0 %v1276
    %1679 = vmatpush1.msra.mxu0 %v1275
    %1680 = vmatprep.subr.mxu0 0.0
    %1681 = vmatpush1.msra.mxu0 0.0
    %1682 = vmatprep.subr.mxu0 0.0
    %1683 = vmatpush1.msra.mxu0 0.0
    %1684 = vmatprep.subr.mxu0 0.0
    %1685 = vmatpush1.msra.mxu0 0.0
    %1686 = vmatprep.subr.mxu0 0.0
    %1687 = vmatpush1.msra.mxu0 0.0
    %1688 = vmatprep.subr.mxu0 0.0
    %1689 = vmatpush1.msra.mxu0 0.0
    %1690 = vmatprep.subr.mxu0 0.0
    %1691 = vmatpush1.msra.mxu0 0.0
    %1692 = vmatprep.subr.mxu0 0.0
    %1693 = vmatpush1.msra.mxu0 0.0
    %1694 = vmatprep.subr.mxu0 0.0
    %1695 = vmatpush1.msra.mxu0 0.0
    %1696 = vmatprep.subr.mxu0 0.0
    %1697 = vmatpush1.msra.mxu0 0.0
    %1698 = vmatprep.subr.mxu0 0.0
    %1699 = vmatpush1.msra.mxu0 0.0
    %1700 = vmatprep.subr.mxu0 0.0
    %1701 = vmatpush1.msra.mxu0 0.0
    %1702 = vmatprep.subr.mxu0 0.0
    %1703 = vmatpush1.msra.mxu0 0.0
    %1704 = vmatprep.subr.mxu0 0.0
    %1705 = vmatpush1.msra.mxu0 0.0
    %1706 = vmatprep.subr.mxu0 0.0
    %1707 = vmatpush1.msra.mxu0 0.0
    %1708 = vmatprep.subr.mxu0 0.0
    %1709 = vmatpush1.msra.mxu0 0.0
    %1710 = vmatprep.subr.mxu0 0.0
    %1711 = vmatpush1.msra.mxu0 0.0
    %1712 = vmatprep.subr.mxu0 0.0
    %1713 = vmatpush1.msra.mxu0 0.0
    %1714 = vmatprep.subr.mxu0 0.0
    %1715 = vmatpush1.msra.mxu0 0.0
    %1716 = vmatprep.subr.mxu0 0.0
    %1717 = vmatpush1.msra.mxu0 0.0
    %1718 = vmatprep.subr.mxu0 0.0
    %1719 = vmatpush1.msra.mxu0 0.0
    %1720 = vmatprep.subr.mxu0 0.0
    %1721 = vmatpush1.msra.mxu0 0.0
    %1722 = vmatprep.subr.mxu0 0.0
    %1723 = vmatpush1.msra.mxu0 0.0
    %1724 = vmatprep.subr.mxu0 0.0
    %1725 = vmatpush1.msra.mxu0 0.0
    %1726 = vmatprep.subr.mxu0 0.0
    %1727 = vmatpush1.msra.mxu0 0.0
    %1728 = vmatprep.mubr.f32.mxu0 0.0
    %1729 = vmatmul.mubr.f32.gmra.mrb[0].mxu0 %v1662
    %v1730 = vpop.f32.mrb[0].mxu0
    %v1731 = vadd.f32 0.0, %v1730
    %v1732 = vpop.f32.mrb[0].mxu0
    %v1733 = vadd.f32 0.0, %v1732
    %1734 = vdwg.mxu0
    %v1737 = vrot.slane %v1731, 6
    %v1738 = vrot.slane %v1733, 6
    %v1741 = vadd.f32 %v1656, %v1737
    %v1742 = vadd.f32 %v1657, %v1738
    %v1743 = vxor.u32 %v1741, 2147483648
    %v1744 = vmul.f32 %v1743, 1.442695
    %v1745 = vpow.pop %v1744
    %v1746 = vadd.f32 %v1745, 1.0
    %v1747 = vrcp.pop %v1746
    %v1748 = vmul.f32 1.0, %v1747
    %v1749 = vtanh.pop %v1742
    %v1750 = vxor.u32 %v1742, 2147483648
    %v1751 = vmul.f32 %v1750, 1.442695
    %v1752 = vpow.pop %v1751
    %v1753 = vadd.f32 %v1752, 1.0
    %v1754 = vrcp.pop %v1753
    %v1755 = vmul.f32 1.0, %v1754
    %v1757 = vrot.slane %v1649, 7
    %v1759 = vmul.f32 %v1748, %v1757
    %v1760 = vmul.f32 %v1748, %v1749
    %1762 = vrot.lane.b32.xlu0 %v1760, 64
    %v1763 = vpop.permute.xlu0 %1762
    %v1765 = vadd.f32 %v1759, %v1763
    %v1766 = vtanh.pop %v1765
    %v1767 = vmul.f32 %v1755, %v1766
    %v1768 = vrot.slane %v1430, 1
    %v1769 = vrot.slane %v1432, 1
    %v1772 = vadd.f32 %v1359, %v1768
    %v1773 = vadd.f32 %v1361, %v1769
    %v1775 = vrot.slane %v1767, 2
    %1776 = vrot.lane.b32.xlu0 %v1775, 64
    %v1777 = vpop.permute.xlu0 %1776
    %v1778 = vsel %vm295, %v1777, 0
    %1780 = vmatprep.subr.mxu0 %v1262
    %1781 = vmatpush1.msra.mxu0 %v1261
    %1782 = vmatprep.subr.mxu0 %v1264
    %1783 = vmatpush1.msra.mxu0 %v1263
    %1784 = vmatprep.subr.mxu0 %v1266
    %1785 = vmatpush1.msra.mxu0 %v1265
    %1786 = vmatprep.subr.mxu0 %v1268
    %1787 = vmatpush1.msra.mxu0 %v1267
    %1788 = vmatprep.subr.mxu0 %v1270
    %1789 = vmatpush1.msra.mxu0 %v1269
    %1790 = vmatprep.subr.mxu0 %v1272
    %1791 = vmatpush1.msra.mxu0 %v1271
    %1792 = vmatprep.subr.mxu0 %v1274
    %1793 = vmatpush1.msra.mxu0 %v1273
    %1794 = vmatprep.subr.mxu0 %v1276
    %1795 = vmatpush1.msra.mxu0 %v1275
    %1796 = vmatprep.subr.mxu0 0.0
    %1797 = vmatpush1.msra.mxu0 0.0
    %1798 = vmatprep.subr.mxu0 0.0
    %1799 = vmatpush1.msra.mxu0 0.0
    %1800 = vmatprep.subr.mxu0 0.0
    %1801 = vmatpush1.msra.mxu0 0.0
    %1802 = vmatprep.subr.mxu0 0.0
    %1803 = vmatpush1.msra.mxu0 0.0
    %1804 = vmatprep.subr.mxu0 0.0
    %1805 = vmatpush1.msra.mxu0 0.0
    %1806 = vmatprep.subr.mxu0 0.0
    %1807 = vmatpush1.msra.mxu0 0.0
    %1808 = vmatprep.subr.mxu0 0.0
    %1809 = vmatpush1.msra.mxu0 0.0
    %1810 = vmatprep.subr.mxu0 0.0
    %1811 = vmatpush1.msra.mxu0 0.0
    %1812 = vmatprep.subr.mxu0 0.0
    %1813 = vmatpush1.msra.mxu0 0.0
    %1814 = vmatprep.subr.mxu0 0.0
    %1815 = vmatpush1.msra.mxu0 0.0
    %1816 = vmatprep.subr.mxu0 0.0
    %1817 = vmatpush1.msra.mxu0 0.0
    %1818 = vmatprep.subr.mxu0 0.0
    %1819 = vmatpush1.msra.mxu0 0.0
    %1820 = vmatprep.subr.mxu0 0.0
    %1821 = vmatpush1.msra.mxu0 0.0
    %1822 = vmatprep.subr.mxu0 0.0
    %1823 = vmatpush1.msra.mxu0 0.0
    %1824 = vmatprep.subr.mxu0 0.0
    %1825 = vmatpush1.msra.mxu0 0.0
    %1826 = vmatprep.subr.mxu0 0.0
    %1827 = vmatpush1.msra.mxu0 0.0
    %1828 = vmatprep.subr.mxu0 0.0
    %1829 = vmatpush1.msra.mxu0 0.0
    %1830 = vmatprep.subr.mxu0 0.0
    %1831 = vmatpush1.msra.mxu0 0.0
    %1832 = vmatprep.subr.mxu0 0.0
    %1833 = vmatpush1.msra.mxu0 0.0
    %1834 = vmatprep.subr.mxu0 0.0
    %1835 = vmatpush1.msra.mxu0 0.0
    %1836 = vmatprep.subr.mxu0 0.0
    %1837 = vmatpush1.msra.mxu0 0.0
    %1838 = vmatprep.subr.mxu0 0.0
    %1839 = vmatpush1.msra.mxu0 0.0
    %1840 = vmatprep.subr.mxu0 0.0
    %1841 = vmatpush1.msra.mxu0 0.0
    %1842 = vmatprep.subr.mxu0 0.0
    %1843 = vmatpush1.msra.mxu0 0.0
    %1844 = vmatprep.mubr.f32.mxu0 0.0
    %1845 = vmatmul.mubr.f32.gmra.mrb[0].mxu0 %v1778
    %v1846 = vpop.f32.mrb[0].mxu0
    %v1847 = vadd.f32 0.0, %v1846
    %v1848 = vpop.f32.mrb[0].mxu0
    %v1849 = vadd.f32 0.0, %v1848
    %1850 = vdwg.mxu0
    %v1853 = vrot.slane %v1847, 5
    %v1854 = vrot.slane %v1849, 5
    %v1857 = vadd.f32 %v1772, %v1853
    %v1858 = vadd.f32 %v1773, %v1854
    %v1859 = vxor.u32 %v1857, 2147483648
    %v1860 = vmul.f32 %v1859, 1.442695
    %v1861 = vpow.pop %v1860
    %v1862 = vadd.f32 %v1861, 1.0
    %v1863 = vrcp.pop %v1862
    %v1864 = vmul.f32 1.0, %v1863
    %v1865 = vtanh.pop %v1858
    %v1866 = vxor.u32 %v1858, 2147483648
    %v1867 = vmul.f32 %v1866, 1.442695
    %v1868 = vpow.pop %v1867
    %v1869 = vadd.f32 %v1868, 1.0
    %v1870 = vrcp.pop %v1869
    %v1871 = vmul.f32 1.0, %v1870
    %v1873 = vrot.slane %v1765, 7
    %v1875 = vmul.f32 %v1864, %v1873
    %v1876 = vmul.f32 %v1864, %v1865
    %1878 = vrot.lane.b32.xlu0 %v1876, 64
    %v1879 = vpop.permute.xlu0 %1878
    %v1881 = vadd.f32 %v1875, %v1879
    %v1882 = vtanh.pop %v1881
    %v1883 = vmul.f32 %v1871, %v1882
    %v1885 = vrot.slane %v1883, 3
    %1886 = vrot.lane.b32.xlu0 %v1885, 64
    %v1887 = vpop.permute.xlu0 %1886
    %v1888 = vsel %vm295, %v1887, 0
    %1890 = vmatprep.subr.mxu0 %v1262
    %1891 = vmatpush1.msra.mxu0 %v1261
    %1892 = vmatprep.subr.mxu0 %v1264
    %1893 = vmatpush1.msra.mxu0 %v1263
    %1894 = vmatprep.subr.mxu0 %v1266
    %1895 = vmatpush1.msra.mxu0 %v1265
    %1896 = vmatprep.subr.mxu0 %v1268
    %1897 = vmatpush1.msra.mxu0 %v1267
    %1898 = vmatprep.subr.mxu0 %v1270
    %1899 = vmatpush1.msra.mxu0 %v1269
    %1900 = vmatprep.subr.mxu0 %v1272
    %1901 = vmatpush1.msra.mxu0 %v1271
    %1902 = vmatprep.subr.mxu0 %v1274
    %1903 = vmatpush1.msra.mxu0 %v1273
    %1904 = vmatprep.subr.mxu0 %v1276
    %1905 = vmatpush1.msra.mxu0 %v1275
    %1906 = vmatprep.subr.mxu0 0.0
    %1907 = vmatpush1.msra.mxu0 0.0
    %1908 = vmatprep.subr.mxu0 0.0
    %1909 = vmatpush1.msra.mxu0 0.0
    %1910 = vmatprep.subr.mxu0 0.0
    %1911 = vmatpush1.msra.mxu0 0.0
    %1912 = vmatprep.subr.mxu0 0.0
    %1913 = vmatpush1.msra.mxu0 0.0
    %1914 = vmatprep.subr.mxu0 0.0
    %1915 = vmatpush1.msra.mxu0 0.0
    %1916 = vmatprep.subr.mxu0 0.0
    %1917 = vmatpush1.msra.mxu0 0.0
    %1918 = vmatprep.subr.mxu0 0.0
    %1919 = vmatpush1.msra.mxu0 0.0
    %1920 = vmatprep.subr.mxu0 0.0
    %1921 = vmatpush1.msra.mxu0 0.0
    %1922 = vmatprep.subr.mxu0 0.0
    %1923 = vmatpush1.msra.mxu0 0.0
    %1924 = vmatprep.subr.mxu0 0.0
    %1925 = vmatpush1.msra.mxu0 0.0
    %1926 = vmatprep.subr.mxu0 0.0
    %1927 = vmatpush1.msra.mxu0 0.0
    %1928 = vmatprep.subr.mxu0 0.0
    %1929 = vmatpush1.msra.mxu0 0.0
    %1930 = vmatprep.subr.mxu0 0.0
    %1931 = vmatpush1.msra.mxu0 0.0
    %1932 = vmatprep.subr.mxu0 0.0
    %1933 = vmatpush1.msra.mxu0 0.0
    %1934 = vmatprep.subr.mxu0 0.0
    %1935 = vmatpush1.msra.mxu0 0.0
    %1936 = vmatprep.subr.mxu0 0.0
    %1937 = vmatpush1.msra.mxu0 0.0
    %1938 = vmatprep.subr.mxu0 0.0
    %1939 = vmatpush1.msra.mxu0 0.0
    %1940 = vmatprep.subr.mxu0 0.0
    %1941 = vmatpush1.msra.mxu0 0.0
    %1942 = vmatprep.subr.mxu0 0.0
    %1943 = vmatpush1.msra.mxu0 0.0
    %1944 = vmatprep.subr.mxu0 0.0
    %1945 = vmatpush1.msra.mxu0 0.0
    %1946 = vmatprep.subr.mxu0 0.0
    %1947 = vmatpush1.msra.mxu0 0.0
    %1948 = vmatprep.subr.mxu0 0.0
    %1949 = vmatpush1.msra.mxu0 0.0
    %1950 = vmatprep.subr.mxu0 0.0
    %1951 = vmatpush1.msra.mxu0 0.0
    %1952 = vmatprep.subr.mxu0 0.0
    %1953 = vmatpush1.msra.mxu0 0.0
    %1954 = vmatprep.mubr.f32.mxu0 0.0
    %1955 = vmatmul.mubr.f32.gmra.mrb[0].mxu0 %v1888
    %v1956 = vpop.f32.mrb[0].mxu0
    %v1957 = vadd.f32 0.0, %v1956
    %v1958 = vpop.f32.mrb[0].mxu0
    %v1959 = vadd.f32 0.0, %v1958
    %1960 = vdwg.mxu0
    %v1963 = vrot.slane %v1957, 4
    %v1964 = vrot.slane %v1959, 4
    %v1967 = vadd.f32 %v1440, %v1963
    %v1968 = vadd.f32 %v1441, %v1964
    %v1969 = vxor.u32 %v1967, 2147483648
    %v1970 = vmul.f32 %v1969, 1.442695
    %v1971 = vpow.pop %v1970
    %v1972 = vadd.f32 %v1971, 1.0
    %v1973 = vrcp.pop %v1972
    %v1974 = vmul.f32 1.0, %v1973
    %v1975 = vtanh.pop %v1968
    %v1976 = vxor.u32 %v1968, 2147483648
    %v1977 = vmul.f32 %v1976, 1.442695
    %v1978 = vpow.pop %v1977
    %v1979 = vadd.f32 %v1978, 1.0
    %v1980 = vrcp.pop %v1979
    %v1981 = vmul.f32 1.0, %v1980
    %v1983 = vrot.slane %v1881, 7
    %v1985 = vmul.f32 %v1974, %v1983
    %v1986 = vmul.f32 %v1974, %v1975
    %1988 = vrot.lane.b32.xlu0 %v1986, 64
    %v1989 = vpop.permute.xlu0 %1988
    %v1991 = vadd.f32 %v1985, %v1989
    %v1992 = vtanh.pop %v1991
    %v1993 = vmul.f32 %v1981, %v1992
    %v1995 = vrot.slane %v1993, 4
    %1996 = vrot.lane.b32.xlu0 %v1995, 64
    %v1997 = vpop.permute.xlu0 %1996
    %v1998 = vsel %vm295, %v1997, 0
    %2000 = vmatprep.subr.mxu0 %v1262
    %2001 = vmatpush1.msra.mxu0 %v1261
    %2002 = vmatprep.subr.mxu0 %v1264
    %2003 = vmatpush1.msra.mxu0 %v1263
    %2004 = vmatprep.subr.mxu0 %v1266
    %2005 = vmatpush1.msra.mxu0 %v1265
    %2006 = vmatprep.subr.mxu0 %v1268
    %2007 = vmatpush1.msra.mxu0 %v1267
    %2008 = vmatprep.subr.mxu0 %v1270
    %2009 = vmatpush1.msra.mxu0 %v1269
    %2010 = vmatprep.subr.mxu0 %v1272
    %2011 = vmatpush1.msra.mxu0 %v1271
    %2012 = vmatprep.subr.mxu0 %v1274
    %2013 = vmatpush1.msra.mxu0 %v1273
    %2014 = vmatprep.subr.mxu0 %v1276
    %2015 = vmatpush1.msra.mxu0 %v1275
    %2016 = vmatprep.subr.mxu0 0.0
    %2017 = vmatpush1.msra.mxu0 0.0
    %2018 = vmatprep.subr.mxu0 0.0
    %2019 = vmatpush1.msra.mxu0 0.0
    %2020 = vmatprep.subr.mxu0 0.0
    %2021 = vmatpush1.msra.mxu0 0.0
    %2022 = vmatprep.subr.mxu0 0.0
    %2023 = vmatpush1.msra.mxu0 0.0
    %2024 = vmatprep.subr.mxu0 0.0
    %2025 = vmatpush1.msra.mxu0 0.0
    %2026 = vmatprep.subr.mxu0 0.0
    %2027 = vmatpush1.msra.mxu0 0.0
    %2028 = vmatprep.subr.mxu0 0.0
    %2029 = vmatpush1.msra.mxu0 0.0
    %2030 = vmatprep.subr.mxu0 0.0
    %2031 = vmatpush1.msra.mxu0 0.0
    %2032 = vmatprep.subr.mxu0 0.0
    %2033 = vmatpush1.msra.mxu0 0.0
    %2034 = vmatprep.subr.mxu0 0.0
    %2035 = vmatpush1.msra.mxu0 0.0
    %2036 = vmatprep.subr.mxu0 0.0
    %2037 = vmatpush1.msra.mxu0 0.0
    %2038 = vmatprep.subr.mxu0 0.0
    %2039 = vmatpush1.msra.mxu0 0.0
    %2040 = vmatprep.subr.mxu0 0.0
    %2041 = vmatpush1.msra.mxu0 0.0
    %2042 = vmatprep.subr.mxu0 0.0
    %2043 = vmatpush1.msra.mxu0 0.0
    %2044 = vmatprep.subr.mxu0 0.0
    %2045 = vmatpush1.msra.mxu0 0.0
    %2046 = vmatprep.subr.mxu0 0.0
    %2047 = vmatpush1.msra.mxu0 0.0
    %2048 = vmatprep.subr.mxu0 0.0
    %2049 = vmatpush1.msra.mxu0 0.0
    %2050 = vmatprep.subr.mxu0 0.0
    %2051 = vmatpush1.msra.mxu0 0.0
    %2052 = vmatprep.subr.mxu0 0.0
    %2053 = vmatpush1.msra.mxu0 0.0
    %2054 = vmatprep.subr.mxu0 0.0
    %2055 = vmatpush1.msra.mxu0 0.0
    %2056 = vmatprep.subr.mxu0 0.0
    %2057 = vmatpush1.msra.mxu0 0.0
    %2058 = vmatprep.subr.mxu0 0.0
    %2059 = vmatpush1.msra.mxu0 0.0
    %2060 = vmatprep.subr.mxu0 0.0
    %2061 = vmatpush1.msra.mxu0 0.0
    %2062 = vmatprep.subr.mxu0 0.0
    %2063 = vmatpush1.msra.mxu0 0.0
    %2064 = vmatprep.mubr.f32.mxu0 0.0
    %2065 = vmatmul.mubr.f32.gmra.mrb[0].mxu0 %v1998
    %v2066 = vpop.f32.mrb[0].mxu0
    %v2067 = vadd.f32 0.0, %v2066
    %v2068 = vpop.f32.mrb[0].mxu0
    %v2069 = vadd.f32 0.0, %v2068
    %2070 = vdwg.mxu0
    %v2073 = vrot.slane %v2067, 3
    %v2074 = vrot.slane %v2069, 3
    %v2077 = vadd.f32 %v1541, %v2073
    %v2078 = vadd.f32 %v1542, %v2074
    %v2079 = vxor.u32 %v2077, 2147483648
    %v2080 = vmul.f32 %v2079, 1.442695
    %v2081 = vpow.pop %v2080
    %v2082 = vadd.f32 %v2081, 1.0
    %v2083 = vrcp.pop %v2082
    %v2084 = vmul.f32 1.0, %v2083
    %v2085 = vtanh.pop %v2078
    %v2086 = vxor.u32 %v2078, 2147483648
    %v2087 = vmul.f32 %v2086, 1.442695
    %v2088 = vpow.pop %v2087
    %v2089 = vadd.f32 %v2088, 1.0
    %v2090 = vrcp.pop %v2089
    %v2091 = vmul.f32 1.0, %v2090
    %v2093 = vrot.slane %v1991, 7
    %v2095 = vmul.f32 %v2084, %v2093
    %v2096 = vmul.f32 %v2084, %v2085
    %2098 = vrot.lane.b32.xlu0 %v2096, 64
    %v2099 = vpop.permute.xlu0 %2098
    %v2101 = vadd.f32 %v2095, %v2099
    %v2102 = vtanh.pop %v2101
    %v2103 = vmul.f32 %v2091, %v2102
    %v2105 = vrot.slane %v2103, 5
    %2106 = vrot.lane.b32.xlu0 %v2105, 64
    %v2107 = vpop.permute.xlu0 %2106
    %v2108 = vsel %vm295, %v2107, 0
    %2110 = vmatprep.subr.mxu0 %v1262
    %2111 = vmatpush1.msra.mxu0 %v1261
    %2112 = vmatprep.subr.mxu0 %v1264
    %2113 = vmatpush1.msra.mxu0 %v1263
    %2114 = vmatprep.subr.mxu0 %v1266
    %2115 = vmatpush1.msra.mxu0 %v1265
    %2116 = vmatprep.subr.mxu0 %v1268
    %2117 = vmatpush1.msra.mxu0 %v1267
    %2118 = vmatprep.subr.mxu0 %v1270
    %2119 = vmatpush1.msra.mxu0 %v1269
    %2120 = vmatprep.subr.mxu0 %v1272
    %2121 = vmatpush1.msra.mxu0 %v1271
    %2122 = vmatprep.subr.mxu0 %v1274
    %2123 = vmatpush1.msra.mxu0 %v1273
    %2124 = vmatprep.subr.mxu0 %v1276
    %2125 = vmatpush1.msra.mxu0 %v1275
    %2126 = vmatprep.subr.mxu0 0.0
    %2127 = vmatpush1.msra.mxu0 0.0
    %2128 = vmatprep.subr.mxu0 0.0
    %2129 = vmatpush1.msra.mxu0 0.0
    %2130 = vmatprep.subr.mxu0 0.0
    %2131 = vmatpush1.msra.mxu0 0.0
    %2132 = vmatprep.subr.mxu0 0.0
    %2133 = vmatpush1.msra.mxu0 0.0
    %2134 = vmatprep.subr.mxu0 0.0
    %2135 = vmatpush1.msra.mxu0 0.0
    %2136 = vmatprep.subr.mxu0 0.0
    %2137 = vmatpush1.msra.mxu0 0.0
    %2138 = vmatprep.subr.mxu0 0.0
    %2139 = vmatpush1.msra.mxu0 0.0
    %2140 = vmatprep.subr.mxu0 0.0
    %2141 = vmatpush1.msra.mxu0 0.0
    %2142 = vmatprep.subr.mxu0 0.0
    %2143 = vmatpush1.msra.mxu0 0.0
    %2144 = vmatprep.subr.mxu0 0.0
    %2145 = vmatpush1.msra.mxu0 0.0
    %2146 = vmatprep.subr.mxu0 0.0
    %2147 = vmatpush1.msra.mxu0 0.0
    %2148 = vmatprep.subr.mxu0 0.0
    %2149 = vmatpush1.msra.mxu0 0.0
    %2150 = vmatprep.subr.mxu0 0.0
    %2151 = vmatpush1.msra.mxu0 0.0
    %2152 = vmatprep.subr.mxu0 0.0
    %2153 = vmatpush1.msra.mxu0 0.0
    %2154 = vmatprep.subr.mxu0 0.0
    %2155 = vmatpush1.msra.mxu0 0.0
    %2156 = vmatprep.subr.mxu0 0.0
    %2157 = vmatpush1.msra.mxu0 0.0
    %2158 = vmatprep.subr.mxu0 0.0
    %2159 = vmatpush1.msra.mxu0 0.0
    %2160 = vmatprep.subr.mxu0 0.0
    %2161 = vmatpush1.msra.mxu0 0.0
    %2162 = vmatprep.subr.mxu0 0.0
    %2163 = vmatpush1.msra.mxu0 0.0
    %2164 = vmatprep.subr.mxu0 0.0
    %2165 = vmatpush1.msra.mxu0 0.0
    %2166 = vmatprep.subr.mxu0 0.0
    %2167 = vmatpush1.msra.mxu0 0.0
    %2168 = vmatprep.subr.mxu0 0.0
    %2169 = vmatpush1.msra.mxu0 0.0
    %2170 = vmatprep.subr.mxu0 0.0
    %2171 = vmatpush1.msra.mxu0 0.0
    %2172 = vmatprep.subr.mxu0 0.0
    %2173 = vmatpush1.msra.mxu0 0.0
    %2174 = vmatprep.mubr.f32.mxu0 0.0
    %2175 = vmatmul.mubr.f32.gmra.mrb[0].mxu0 %v2108
    %v2176 = vpop.f32.mrb[0].mxu0
    %v2177 = vadd.f32 0.0, %v2176
    %v2178 = vpop.f32.mrb[0].mxu0
    %v2179 = vadd.f32 0.0, %v2178
    %2180 = vdwg.mxu0
    %v2183 = vrot.slane %v2177, 2
    %v2184 = vrot.slane %v2179, 2
    %v2187 = vadd.f32 %v1656, %v2183
    %v2188 = vadd.f32 %v1657, %v2184
    %v2189 = vxor.u32 %v2187, 2147483648
    %v2190 = vmul.f32 %v2189, 1.442695
    %v2191 = vpow.pop %v2190
    %v2192 = vadd.f32 %v2191, 1.0
    %v2193 = vrcp.pop %v2192
    %v2194 = vmul.f32 1.0, %v2193
    %v2195 = vtanh.pop %v2188
    %v2196 = vxor.u32 %v2188, 2147483648
    %v2197 = vmul.f32 %v2196, 1.442695
    %v2198 = vpow.pop %v2197
    %v2199 = vadd.f32 %v2198, 1.0
    %v2200 = vrcp.pop %v2199
    %v2201 = vmul.f32 1.0, %v2200
    %v2203 = vrot.slane %v2101, 7
    %v2205 = vmul.f32 %v2194, %v2203
    %v2206 = vmul.f32 %v2194, %v2195
    %2208 = vrot.lane.b32.xlu0 %v2206, 64
    %v2209 = vpop.permute.xlu0 %2208
    %v2211 = vadd.f32 %v2205, %v2209
    %v2212 = vtanh.pop %v2211
    %v2213 = vmul.f32 %v2201, %v2212
    %v2215 = vrot.slane %v2213, 6
    %2216 = vrot.lane.b32.xlu0 %v2215, 64
    %v2217 = vpop.permute.xlu0 %2216
    %v2218 = vsel %vm295, %v2217, 0
    %2220 = vmatprep.subr.mxu0 %v1262
    %2221 = vmatpush1.msra.mxu0 %v1261
    %2222 = vmatprep.subr.mxu0 %v1264
    %2223 = vmatpush1.msra.mxu0 %v1263
    %2224 = vmatprep.subr.mxu0 %v1266
    %2225 = vmatpush1.msra.mxu0 %v1265
    %2226 = vmatprep.subr.mxu0 %v1268
    %2227 = vmatpush1.msra.mxu0 %v1267
    %2228 = vmatprep.subr.mxu0 %v1270
    %2229 = vmatpush1.msra.mxu0 %v1269
    %2230 = vmatprep.subr.mxu0 %v1272
    %2231 = vmatpush1.msra.mxu0 %v1271
    %2232 = vmatprep.subr.mxu0 %v1274
    %2233 = vmatpush1.msra.mxu0 %v1273
    %2234 = vmatprep.subr.mxu0 %v1276
    %2235 = vmatpush1.msra.mxu0 %v1275
    %2236 = vmatprep.subr.mxu0 0.0
    %2237 = vmatpush1.msra.mxu0 0.0
    %2238 = vmatprep.subr.mxu0 0.0
    %2239 = vmatpush1.msra.mxu0 0.0
    %2240 = vmatprep.subr.mxu0 0.0
    %2241 = vmatpush1.msra.mxu0 0.0
    %2242 = vmatprep.subr.mxu0 0.0
    %2243 = vmatpush1.msra.mxu0 0.0
    %2244 = vmatprep.subr.mxu0 0.0
    %2245 = vmatpush1.msra.mxu0 0.0
    %2246 = vmatprep.subr.mxu0 0.0
    %2247 = vmatpush1.msra.mxu0 0.0
    %2248 = vmatprep.subr.mxu0 0.0
    %2249 = vmatpush1.msra.mxu0 0.0
    %2250 = vmatprep.subr.mxu0 0.0
    %2251 = vmatpush1.msra.mxu0 0.0
    %2252 = vmatprep.subr.mxu0 0.0
    %2253 = vmatpush1.msra.mxu0 0.0
    %2254 = vmatprep.subr.mxu0 0.0
    %2255 = vmatpush1.msra.mxu0 0.0
    %2256 = vmatprep.subr.mxu0 0.0
    %2257 = vmatpush1.msra.mxu0 0.0
    %2258 = vmatprep.subr.mxu0 0.0
    %2259 = vmatpush1.msra.mxu0 0.0
    %2260 = vmatprep.subr.mxu0 0.0
    %2261 = vmatpush1.msra.mxu0 0.0
    %2262 = vmatprep.subr.mxu0 0.0
    %2263 = vmatpush1.msra.mxu0 0.0
    %2264 = vmatprep.subr.mxu0 0.0
    %2265 = vmatpush1.msra.mxu0 0.0
    %2266 = vmatprep.subr.mxu0 0.0
    %2267 = vmatpush1.msra.mxu0 0.0
    %2268 = vmatprep.subr.mxu0 0.0
    %2269 = vmatpush1.msra.mxu0 0.0
    %2270 = vmatprep.subr.mxu0 0.0
    %2271 = vmatpush1.msra.mxu0 0.0
    %2272 = vmatprep.subr.mxu0 0.0
    %2273 = vmatpush1.msra.mxu0 0.0
    %2274 = vmatprep.subr.mxu0 0.0
    %2275 = vmatpush1.msra.mxu0 0.0
    %2276 = vmatprep.subr.mxu0 0.0
    %2277 = vmatpush1.msra.mxu0 0.0
    %2278 = vmatprep.subr.mxu0 0.0
    %2279 = vmatpush1.msra.mxu0 0.0
    %2280 = vmatprep.subr.mxu0 0.0
    %2281 = vmatpush1.msra.mxu0 0.0
    %2282 = vmatprep.subr.mxu0 0.0
    %2283 = vmatpush1.msra.mxu0 0.0
    %2284 = vmatprep.mubr.f32.mxu0 0.0
    %2285 = vmatmul.mubr.f32.gmra.mrb[0].mxu0 %v2218
    %v2286 = vpop.f32.mrb[0].mxu0
    %v2287 = vadd.f32 0.0, %v2286
    %v2288 = vpop.f32.mrb[0].mxu0
    %v2289 = vadd.f32 0.0, %v2288
    %2290 = vdwg.mxu0
    %v2293 = vrot.slane %v2287, 1
    %v2294 = vrot.slane %v2289, 1
    %v2297 = vadd.f32 %v1772, %v2293
    %v2298 = vadd.f32 %v1773, %v2294
    %v2299 = vxor.u32 %v2297, 2147483648
    %v2300 = vmul.f32 %v2299, 1.442695
    %v2301 = vpow.pop %v2300
    %v2302 = vadd.f32 %v2301, 1.0
    %v2303 = vrcp.pop %v2302
    %v2304 = vmul.f32 1.0, %v2303
    %v2305 = vtanh.pop %v2298
    %v2306 = vxor.u32 %v2298, 2147483648
    %v2307 = vmul.f32 %v2306, 1.442695
    %v2308 = vpow.pop %v2307
    %v2309 = vadd.f32 %v2308, 1.0
    %v2310 = vrcp.pop %v2309
    %v2311 = vmul.f32 1.0, %v2310
    %v2313 = vrot.slane %v2211, 7
    %v2315 = vmul.f32 %v2304, %v2313
    %v2316 = vmul.f32 %v2304, %v2305
    %2318 = vrot.lane.b32.xlu0 %v2316, 64
    %v2319 = vpop.permute.xlu0 %2318
    %v2321 = vadd.f32 %v2315, %v2319
    %v2322 = vtanh.pop %v2321
    %v2323 = vmul.f32 %v2311, %v2322
    %v2324 = vsel %vm1181, %v1536, %v1651
    %v2325 = vsel %vm1183, %v2324, %v1767
    %v2326 = vsel %vm1185, %v2325, %v1883
    %v2327 = vsel %vm1187, %v2326, %v1993
    %v2328 = vsel %vm1189, %v2327, %v2103
    %v2329 = vsel %vm1191, %v2328, %v2213
    %v2330 = vsel %vm1193, %v2329, %v2323
    %v2332 = vrot.slane %v2323, 7
    %v2334 = vrot.slane %v2213, 5
    %v2336 = vrot.slane %v2103, 3
    %v2338 = vrot.slane %v1993, 1
    %v2340 = vrot.slane %v1883, 7
    %v2342 = vrot.slane %v1767, 5
    %v2344 = vrot.slane %v1651, 3
    %v2346 = vrot.slane %v1536, 1
    %v2348 = vsel %vm1181, %v2332, %v2334
    %v2349 = vsel %vm1183, %v2348, %v2336
    %v2350 = vsel %vm1185, %v2349, %v2338
    %v2351 = vsel %vm1187, %v2350, %v2340
    %v2352 = vsel %vm1189, %v2351, %v2342
    %v2353 = vsel %vm1191, %v2352, %v2344
    %v2354 = vsel %vm1193, %v2353, %v2346
    %2356 = vrot.lane.b32.xlu0 %v2330, 64
    %v2357 = vpop.permute.xlu0 %2356
    %2360 = vrot.lane.b32.xlu0 %v2354, 64
    %v2361 = vpop.permute.xlu0 %2360
    %v2363 = vsel %vm1227, %v2357, %v2361
    %v2364 = vld [vmem:[%s9] sm:$0xff]
    %v2365 = vld [vmem:[%s9 + $0x8] sm:$0xff]
    %v2366 = vld [vmem:[%s9 + $0x10] sm:$0xff]
    %v2367 = vld [vmem:[%s9 + $0x18] sm:$0xff]
    %v2368 = vld [vmem:[%s9 + $0x20] sm:$0xff]
    %v2369 = vld [vmem:[%s9 + $0x28] sm:$0xff]
    %v2370 = vld [vmem:[%s9 + $0x30] sm:$0xff]
    %v2371 = vld [vmem:[%s9 + $0x38] sm:$0xff]
    %v2372 = vld [vmem:[%s10] sm:$0x1]
    %v2374 = vlaneseq
    %v2375 = vshrl.u32 %v2374, 7
    %v2376 = vsub.s32 0, %v2375
    %v2377 = vrot.slane %v2372, %v2376
    %v2380 = vsel %vm295, %v2363, 0
    %2382 = vmatprep.subr.mxu0 0.0
    %2383 = vmatpush1.msra.mxu0 %v2364
    %2384 = vmatprep.subr.mxu0 0.0
    %2385 = vmatpush1.msra.mxu0 %v2365
    %2386 = vmatprep.subr.mxu0 0.0
    %2387 = vmatpush1.msra.mxu0 %v2366
    %2388 = vmatprep.subr.mxu0 0.0
    %2389 = vmatpush1.msra.mxu0 %v2367
    %2390 = vmatprep.subr.mxu0 0.0
    %2391 = vmatpush1.msra.mxu0 %v2368
    %2392 = vmatprep.subr.mxu0 0.0
    %2393 = vmatpush1.msra.mxu0 %v2369
    %2394 = vmatprep.subr.mxu0 0.0
    %2395 = vmatpush1.msra.mxu0 %v2370
    %2396 = vmatprep.subr.mxu0 0.0
    %2397 = vmatpush1.msra.mxu0 %v2371
    %2398 = vmatprep.subr.mxu0 0.0
    %2399 = vmatpush1.msra.mxu0 0.0
    %2400 = vmatprep.subr.mxu0 0.0
    %2401 = vmatpush1.msra.mxu0 0.0
    %2402 = vmatprep.subr.mxu0 0.0
    %2403 = vmatpush1.msra.mxu0 0.0
    %2404 = vmatprep.subr.mxu0 0.0
    %2405 = vmatpush1.msra.mxu0 0.0
    %2406 = vmatprep.subr.mxu0 0.0
    %2407 = vmatpush1.msra.mxu0 0.0
    %2408 = vmatprep.subr.mxu0 0.0
    %2409 = vmatpush1.msra.mxu0 0.0
    %2410 = vmatprep.subr.mxu0 0.0
    %2411 = vmatpush1.msra.mxu0 0.0
    %2412 = vmatprep.subr.mxu0 0.0
    %2413 = vmatpush1.msra.mxu0 0.0
    %2414 = vmatprep.subr.mxu0 0.0
    %2415 = vmatpush1.msra.mxu0 0.0
    %2416 = vmatprep.subr.mxu0 0.0
    %2417 = vmatpush1.msra.mxu0 0.0
    %2418 = vmatprep.subr.mxu0 0.0
    %2419 = vmatpush1.msra.mxu0 0.0
    %2420 = vmatprep.subr.mxu0 0.0
    %2421 = vmatpush1.msra.mxu0 0.0
    %2422 = vmatprep.subr.mxu0 0.0
    %2423 = vmatpush1.msra.mxu0 0.0
    %2424 = vmatprep.subr.mxu0 0.0
    %2425 = vmatpush1.msra.mxu0 0.0
    %2426 = vmatprep.subr.mxu0 0.0
    %2427 = vmatpush1.msra.mxu0 0.0
    %2428 = vmatprep.subr.mxu0 0.0
    %2429 = vmatpush1.msra.mxu0 0.0
    %2430 = vmatprep.subr.mxu0 0.0
    %2431 = vmatpush1.msra.mxu0 0.0
    %2432 = vmatprep.subr.mxu0 0.0
    %2433 = vmatpush1.msra.mxu0 0.0
    %2434 = vmatprep.subr.mxu0 0.0
    %2435 = vmatpush1.msra.mxu0 0.0
    %2436 = vmatprep.subr.mxu0 0.0
    %2437 = vmatpush1.msra.mxu0 0.0
    %2438 = vmatprep.subr.mxu0 0.0
    %2439 = vmatpush1.msra.mxu0 0.0
    %2440 = vmatprep.subr.mxu0 0.0
    %2441 = vmatpush1.msra.mxu0 0.0
    %2442 = vmatprep.subr.mxu0 0.0
    %2443 = vmatpush1.msra.mxu0 0.0
    %2444 = vmatprep.subr.mxu0 0.0
    %2445 = vmatpush1.msra.mxu0 0.0
    %2446 = vmatprep.mubr.f32.mxu0 0.0
    %2447 = vmatmul.mubr.f32.gmra.mrb[0].mxu0 %v2380
    %v2448 = vpop.f32.mrb[0].mxu0
    %v2449 = vadd.f32 %v2377, %v2448
    %v2450 = vpop.f32.mrb[0].mxu0
    %2451 = vdwg.mxu0
    %vm2452 = vcmask 39936
    %2453 = vst.msk [vmem:[#allocation10] sm:$0xff] %vm2452, %v2449
    %v2454 = vld [vmem:[%s11] sm:$0x1f]
    %v2455 = vlaneseq
    %v2456 = vshrl.u32 %v2455, 7
    %v2457 = vlaneseq
    %v2458 = vand.u32 %v2457, 127
    %v2459 = vcvt.s32.f32 %v2456
    %vm2460 = vcmp.eq.s32.totalorder %v2456, %v2458
    %v2461 = vsel %vm2460, 1, 0
    %v2462 = vcvt.s32.f32 %v2461
    %vm2463 = vcmp.eq.s32.totalorder %v2458, 3
    %v2464 = vsel %vm2463, 0.0, -10000.0
    %v2465 = vmul.f32 %v2464, %v2462
    %vm2466 = vcmask 36864
    %v2467 = vsel %vm2466, %v2465, 0.0
    %2468 = vadd.xlane.f32.xlu0 %v2467
    %v2469 = vpop.xlane.xlu0 %2468
    %v2470 = vadd.f32 %v2469, %v2454
    %v2471 = vsel %vm2466, %v2470, -inf
    %v2472 = vrot.slane %v2471, 4
    %v2473 = vmax.f32 %v2471, %v2472
    %v2474 = vrot.slane %v2473, 2
    %v2475 = vmax.f32 %v2473, %v2474
    %v2476 = vrot.slane %v2475, 1
    %v2477 = vmax.f32 %v2475, %v2476
    %vm2478 = vcmp.eq.f32.partialorder %v2470, %v2477
    %v2479 = vsel %vm2478, %v2459, 5.0
    %v2480 = vsel %vm2466, %v2479, inf
    %v2481 = vrot.slane %v2480, 4
    %v2482 = vmin.f32 %v2480, %v2481
    %v2483 = vrot.slane %v2482, 2
    %v2484 = vmin.f32 %v2482, %v2483
    %v2485 = vrot.slane %v2484, 1
    %v2486 = vmin.f32 %v2484, %v2485
    %v2487 = vcvt.f32.s32.to.zero.pseudo %v2486
    %v2488 = vadd.f32 %v2477, %v2449
    %v2489 = vlaneseq
    %v2490 = vshrl.u32 %v2489, 7
    %v2491 = vsub.s32 0, %v2490
    %v2492 = vrot.slane %v2488, %v2491
    %v2493 = vmul.f32 %v2492, %v2462
    %v2494 = vsel %vm2466, %v2493, 0.0
    %2495 = vadd.xlane.f32.xlu0 %v2494
    %v2496 = vpop.xlane.xlu0 %2495
    %v2497 = vadd.f32 %v2496, %v2454
    %v2498 = vsel %vm2466, %v2497, -inf
    %v2499 = vrot.slane %v2498, 4
    %v2500 = vmax.f32 %v2498, %v2499
    %v2501 = vrot.slane %v2500, 2
    %v2502 = vmax.f32 %v2500, %v2501
    %v2503 = vrot.slane %v2502, 1
    %v2504 = vmax.f32 %v2502, %v2503
    %vm2505 = vcmp.eq.f32.partialorder %v2497, %v2504
    %v2506 = vsel %vm2505, %v2459, 5.0
    %v2507 = vsel %vm2466, %v2506, inf
    %v2508 = vrot.slane %v2507, 4
    %v2509 = vmin.f32 %v2507, %v2508
    %v2510 = vrot.slane %v2509, 2
    %v2511 = vmin.f32 %v2509, %v2510
    %v2512 = vrot.slane %v2511, 1
    %v2513 = vmin.f32 %v2511, %v2512
    %v2514 = vcvt.f32.s32.to.zero.pseudo %v2513
    %v2515 = vadd.f32 %v2504, %v2449
    %v2516 = vlaneseq
    %v2517 = vshrl.u32 %v2516, 7
    %v2518 = vsub.s32 1, %v2517
    %v2519 = vrot.slane %v2515, %v2518
    %v2520 = vmul.f32 %v2519, %v2462
    %v2521 = vsel %vm2466, %v2520, 0.0
    %2522 = vadd.xlane.f32.xlu0 %v2521
    %v2523 = vpop.xlane.xlu0 %2522
    %v2524 = vadd.f32 %v2523, %v2454
    %v2525 = vsel %vm2466, %v2524, -inf
    %v2526 = vrot.slane %v2525, 4
    %v2527 = vmax.f32 %v2525, %v2526
    %v2528 = vrot.slane %v2527, 2
    %v2529 = vmax.f32 %v2527, %v2528
    %v2530 = vrot.slane %v2529, 1
    %v2531 = vmax.f32 %v2529, %v2530
    %vm2532 = vcmp.eq.f32.partialorder %v2524, %v2531
    %v2533 = vsel %vm2532, %v2459, 5.0
    %v2534 = vsel %vm2466, %v2533, inf
    %v2535 = vrot.slane %v2534, 4
    %v2536 = vmin.f32 %v2534, %v2535
    %v2537 = vrot.slane %v2536, 2
    %v2538 = vmin.f32 %v2536, %v2537
    %v2539 = vrot.slane %v2538, 1
    %v2540 = vmin.f32 %v2538, %v2539
    %v2541 = vcvt.f32.s32.to.zero.pseudo %v2540
    %v2542 = vadd.f32 %v2531, %v2449
    %v2543 = vlaneseq
    %v2544 = vshrl.u32 %v2543, 7
    %v2545 = vsub.s32 2, %v2544
    %v2546 = vrot.slane %v2542, %v2545
    %v2547 = vmul.f32 %v2546, %v2462
    %v2548 = vsel %vm2466, %v2547, 0.0
    %2549 = vadd.xlane.f32.xlu0 %v2548
    %v2550 = vpop.xlane.xlu0 %2549
    %v2551 = vadd.f32 %v2550, %v2454
    %v2552 = vsel %vm2466, %v2551, -inf
    %v2553 = vrot.slane %v2552, 4
    %v2554 = vmax.f32 %v2552, %v2553
    %v2555 = vrot.slane %v2554, 2
    %v2556 = vmax.f32 %v2554, %v2555
    %v2557 = vrot.slane %v2556, 1
    %v2558 = vmax.f32 %v2556, %v2557
    %vm2559 = vcmp.eq.f32.partialorder %v2551, %v2558
    %v2560 = vsel %vm2559, %v2459, 5.0
    %v2561 = vsel %vm2466, %v2560, inf
    %v2562 = vrot.slane %v2561, 4
    %v2563 = vmin.f32 %v2561, %v2562
    %v2564 = vrot.slane %v2563, 2
    %v2565 = vmin.f32 %v2563, %v2564
    %v2566 = vrot.slane %v2565, 1
    %v2567 = vmin.f32 %v2565, %v2566
    %v2568 = vcvt.f32.s32.to.zero.pseudo %v2567
    %v2569 = vadd.f32 %v2558, %v2449
    %v2570 = vlaneseq
    %v2571 = vshrl.u32 %v2570, 7
    %v2572 = vsub.s32 3, %v2571
    %v2573 = vrot.slane %v2569, %v2572
    %v2574 = vmul.f32 %v2573, %v2462
    %v2575 = vsel %vm2466, %v2574, 0.0
    %2576 = vadd.xlane.f32.xlu0 %v2575
    %v2577 = vpop.xlane.xlu0 %2576
    %v2578 = vadd.f32 %v2577, %v2454
    %v2579 = vsel %vm2466, %v2578, -inf
    %v2580 = vrot.slane %v2579, 4
    %v2581 = vmax.f32 %v2579, %v2580
    %v2582 = vrot.slane %v2581, 2
    %v2583 = vmax.f32 %v2581, %v2582
    %v2584 = vrot.slane %v2583, 1
    %v2585 = vmax.f32 %v2583, %v2584
    %vm2586 = vcmp.eq.f32.partialorder %v2578, %v2585
    %v2587 = vsel %vm2586, %v2459, 5.0
    %v2588 = vsel %vm2466, %v2587, inf
    %v2589 = vrot.slane %v2588, 4
    %v2590 = vmin.f32 %v2588, %v2589
    %v2591 = vrot.slane %v2590, 2
    %v2592 = vmin.f32 %v2590, %v2591
    %v2593 = vrot.slane %v2592, 1
    %v2594 = vmin.f32 %v2592, %v2593
    %v2595 = vcvt.f32.s32.to.zero.pseudo %v2594
    %v2596 = vadd.f32 %v2585, %v2449
    %v2597 = vlaneseq
    %v2598 = vshrl.u32 %v2597, 7
    %v2599 = vsub.s32 4, %v2598
    %v2600 = vrot.slane %v2596, %v2599
    %v2601 = vmul.f32 %v2600, %v2462
    %v2602 = vsel %vm2466, %v2601, 0.0
    %2603 = vadd.xlane.f32.xlu0 %v2602
    %v2604 = vpop.xlane.xlu0 %2603
    %v2605 = vadd.f32 %v2604, %v2454
    %v2606 = vsel %vm2466, %v2605, -inf
    %v2607 = vrot.slane %v2606, 4
    %v2608 = vmax.f32 %v2606, %v2607
    %v2609 = vrot.slane %v2608, 2
    %v2610 = vmax.f32 %v2608, %v2609
    %v2611 = vrot.slane %v2610, 1
    %v2612 = vmax.f32 %v2610, %v2611
    %vm2613 = vcmp.eq.f32.partialorder %v2605, %v2612
    %v2614 = vsel %vm2613, %v2459, 5.0
    %v2615 = vsel %vm2466, %v2614, inf
    %v2616 = vrot.slane %v2615, 4
    %v2617 = vmin.f32 %v2615, %v2616
    %v2618 = vrot.slane %v2617, 2
    %v2619 = vmin.f32 %v2617, %v2618
    %v2620 = vrot.slane %v2619, 1
    %v2621 = vmin.f32 %v2619, %v2620
    %v2622 = vcvt.f32.s32.to.zero.pseudo %v2621
    %v2623 = vadd.f32 %v2612, %v2449
    %v2624 = vlaneseq
    %v2625 = vshrl.u32 %v2624, 7
    %v2626 = vsub.s32 5, %v2625
    %v2627 = vrot.slane %v2623, %v2626
    %v2628 = vmul.f32 %v2627, %v2462
    %v2629 = vsel %vm2466, %v2628, 0.0
    %2630 = vadd.xlane.f32.xlu0 %v2629
    %v2631 = vpop.xlane.xlu0 %2630
    %v2632 = vadd.f32 %v2631, %v2454
    %v2633 = vsel %vm2466, %v2632, -inf
    %v2634 = vrot.slane %v2633, 4
    %v2635 = vmax.f32 %v2633, %v2634
    %v2636 = vrot.slane %v2635, 2
    %v2637 = vmax.f32 %v2635, %v2636
    %v2638 = vrot.slane %v2637, 1
    %v2639 = vmax.f32 %v2637, %v2638
    %vm2640 = vcmp.eq.f32.partialorder %v2632, %v2639
    %v2641 = vsel %vm2640, %v2459, 5.0
    %v2642 = vsel %vm2466, %v2641, inf
    %v2643 = vrot.slane %v2642, 4
    %v2644 = vmin.f32 %v2642, %v2643
    %v2645 = vrot.slane %v2644, 2
    %v2646 = vmin.f32 %v2644, %v2645
    %v2647 = vrot.slane %v2646, 1
    %v2648 = vmin.f32 %v2646, %v2647
    %v2649 = vcvt.f32.s32.to.zero.pseudo %v2648
    %v2650 = vadd.f32 %v2639, %v2449
    %v2651 = vlaneseq
    %v2652 = vshrl.u32 %v2651, 7
    %v2653 = vsub.s32 6, %v2652
    %v2654 = vrot.slane %v2650, %v2653
    %v2655 = vmul.f32 %v2654, %v2462
    %v2656 = vsel %vm2466, %v2655, 0.0
    %2657 = vadd.xlane.f32.xlu0 %v2656
    %v2658 = vpop.xlane.xlu0 %2657
    %v2659 = vadd.f32 %v2658, %v2454
    %v2660 = vsel %vm2466, %v2659, -inf
    %v2661 = vrot.slane %v2660, 4
    %v2662 = vmax.f32 %v2660, %v2661
    %v2663 = vrot.slane %v2662, 2
    %v2664 = vmax.f32 %v2662, %v2663
    %v2665 = vrot.slane %v2664, 1
    %v2666 = vmax.f32 %v2664, %v2665
    %vm2667 = vcmp.eq.f32.partialorder %v2659, %v2666
    %v2668 = vsel %vm2667, %v2459, 5.0
    %v2669 = vsel %vm2466, %v2668, inf
    %v2670 = vrot.slane %v2669, 4
    %v2671 = vmin.f32 %v2669, %v2670
    %v2672 = vrot.slane %v2671, 2
    %v2673 = vmin.f32 %v2671, %v2672
    %v2674 = vrot.slane %v2673, 1
    %v2675 = vmin.f32 %v2673, %v2674
    %v2676 = vcvt.f32.s32.to.zero.pseudo %v2675
    %v2677 = vadd.f32 %v2666, %v2449
    %v2678 = vsel %vm1181, %v2487, %v2514
    %v2679 = vsel %vm1183, %v2678, %v2541
    %v2680 = vsel %vm1185, %v2679, %v2568
    %v2681 = vsel %vm1187, %v2680, %v2595
    %v2682 = vsel %vm1189, %v2681, %v2622
    %v2683 = vsel %vm1191, %v2682, %v2649
    %v2684 = vsel %vm1193, %v2683, %v2676
    %2685 = vst.msk [vmem:[#allocation11] sm:$0xff] %vm2452, %v2684
    %v2686 = vld [vmem:[%s12] sm:$0x1]
    %v2688 = vlaneseq
    %v2689 = vshrl.u32 %v2688, 7
    %v2690 = vsub.s32 0, %v2689
    %v2691 = vrot.slane %v2686, %v2690
    %v2693 = vadd.f32 %v2677, %v2691
    %vm2694 = vcmask 39943
    %2695 = vst.msk [vmem:[#allocation13 - $0x7] sm:$0x80] %vm2694, %v2693
    // Predicated region
    $region70: #{bilstm_crf_forward.1} parent=1 // pred_check
      _
    $region71: #{bilstm_crf_forward.1} parent=1 // pred_check_branch
      %2697 = sbr.rel (0) target = $region73
    $region72: #{bilstm_crf_forward.1} parent=1 // pred_region
      %s2699 = ssub.s32 128, 128
      %2700 = vsyncadd [#allocation4], %s2699
      %s2702 = sshll.u32 [#allocation10], 4
      %s2703 = int_to_ptr.vmem [resolvable:$true] %s2702
      %2705 = dma.vmem_to_hbm [thread:$0]  %s2703, 128, %s13, [#allocation4]
    $region73: #{bilstm_crf_forward.1} parent=1 // pred_fallthru
      _
    // Predicated region
    $region74: #{bilstm_crf_forward.1} parent=1 // pred_check
      _
    $region75: #{bilstm_crf_forward.1} parent=1 // pred_check_branch
      %2707 = sbr.rel (0) target = $region77
    $region76: #{bilstm_crf_forward.1} parent=1 // pred_region
      %s2709 = ssub.s32 128, 128
      %2710 = vsyncadd [#allocation12], %s2709
      %s2712 = sshll.u32 [#allocation11], 4
      %s2713 = int_to_ptr.vmem [resolvable:$true] %s2712
      %2715 = dma.vmem_to_hbm [thread:$0]  %s2713, 128, %s14, [#allocation12]
    $region77: #{bilstm_crf_forward.1} parent=1 // pred_fallthru
      _
    // Predicated region
    $region78: #{bilstm_crf_forward.1} parent=1 // pred_check
      _
    $region79: #{bilstm_crf_forward.1} parent=1 // pred_check_branch
      %2717 = sbr.rel (0) target = $region81
    $region80: #{bilstm_crf_forward.1} parent=1 // pred_region
      %s2719 = ssub.s32 16, 16
      %2720 = vsyncadd [#allocation12], %s2719
      %s2722 = sshll.u32 [#allocation13], 4
      %s2723 = int_to_ptr.vmem [resolvable:$true] %s2722
      %2725 = dma.vmem_to_hbm [thread:$0]  %s2723, 16, %s15, [#allocation12]
    $region81: #{bilstm_crf_forward.1} parent=1 // pred_fallthru
      _
    // Predicated region
    $region82: #{bilstm_crf_forward.1} parent=1 // pred_check
      _
    $region83: #{bilstm_crf_forward.1} parent=1 // pred_check_branch
      %2727 = sbr.rel (0) target = $region85
    $region84: #{bilstm_crf_forward.1} parent=1 // pred_region
      %2728 = dma.done [#allocation4], 128
    $region85: #{bilstm_crf_forward.1} parent=1 // pred_fallthru
      _
    // Predicated region
    $region86: #{bilstm_crf_forward.1} parent=1 // pred_check
      _
    $region87: #{bilstm_crf_forward.1} parent=1 // pred_check_branch
      %2730 = sbr.rel (0) target = $region89
    $region88: #{bilstm_crf_forward.1} parent=1 // pred_region
      %2731 = dma.done [#allocation12], 128
    $region89: #{bilstm_crf_forward.1} parent=1 // pred_fallthru
      _
    // Predicated region
    $region90: #{bilstm_crf_forward.1} parent=1 // pred_check
      _
    $region91: #{bilstm_crf_forward.1} parent=1 // pred_check_branch
      %2733 = sbr.rel (0) target = $region93
    $region92: #{bilstm_crf_forward.1} parent=1 // pred_region
      %2734 = dma.done [#allocation12], 16
    $region93: #{bilstm_crf_forward.1} parent=1 // pred_fallthru
      _
    %2735 = vsyncpa [#allocation3], 1
    %2736 = vsyncpa [#allocation6], 1
    %2737 = vsyncpa [#allocation9], 1
    %2738 = vsyncpa [#allocation4], 1
    %2739 = vsyncpa [#allocation12], 1

</llo_original>
